<compile_context>
chip_gen: v7x
topology: tpu7x:2x2x1
jax: 0.10.0
libtpu: 0.0.40
codegen_flags: <defaults>
</compile_context>

<pallas_src>
import functools

import jax
import jax.numpy as jnp
from jax import lax
from jax.experimental import pallas as pl
from jax.experimental.pallas import tpu as pltpu

_EPS = 1e-5


def _round_up(x, m):
    return (x + m - 1) // m * m


def _row_tile(m):
    return 256 if m >= 256 else max(8, _round_up(m, 8))


# ----------------------------------------------------------------------------- kernels

def _matmul_kernel(a_ref, b_ref, bias_ref, o_ref, acc_ref):
    # Tiled (tm, tk) @ (tk, tn), f32 accumulation on the MXU, bias fused in the epilogue.
    @pl.when(pl.program_id(2) == 0)
    def _():
        acc_ref[...] = jnp.zeros_like(acc_ref)

    acc_ref[...] += jnp.dot(a_ref[...], b_ref[...],
                            preferred_element_type=jnp.float32)

    @pl.when(pl.program_id(2) == pl.num_programs(2) - 1)
    def _():
        o_ref[...] = (acc_ref[...] + bias_ref[...]).astype(o_ref.dtype)


def _bn_stats_kernel(x_ref, mean_ref, var_ref, *, inv_m):
    # Pass 1 of BatchNorm: accumulate per-channel sum / sum-of-squares across M tiles,
    # finalize to (mean, biased var) on the last tile.  Grid axis is a reduction.
    i = pl.program_id(0)

    @pl.when(i == 0)
    def _():
        mean_ref[...] = jnp.zeros_like(mean_ref)
        var_ref[...] = jnp.zeros_like(var_ref)

    x = x_ref[...]
    mean_ref[...] += jnp.sum(x, axis=0, keepdims=True)
    var_ref[...] += jnp.sum(x * x, axis=0, keepdims=True)

    @pl.when(i == pl.num_programs(0) - 1)
    def _():
        m = mean_ref[...] * inv_m
        v = var_ref[...] * inv_m - m * m
        mean_ref[...] = m
        var_ref[...] = v


def _bn_apply_kernel(x_ref, mean_ref, var_ref, gamma_ref, beta_ref, alpha_ref, o_ref,
                     *, apply_prelu):
    # Pass 2 of BatchNorm: normalize + affine + optional per-channel PReLU (f32 VPU math).
    x = x_ref[...]
    y = (x - mean_ref[...]) * lax.rsqrt(var_ref[...] + _EPS) * gamma_ref[...] + beta_ref[...]
    if apply_prelu:
        y = jnp.where(y >= 0, y, alpha_ref[...] * y)
    o_ref[...] = y


def _relu_instnorm_kernel(x_ref, o_ref):
    # x block: (1, H*W, C); ReLU then per-(n, c) instance norm (affine=False).
    x = jnp.maximum(x_ref[...], 0.0)
    mean = jnp.mean(x, axis=1, keepdims=True)
    var = jnp.mean(jnp.square(x - mean), axis=1, keepdims=True)
    o_ref[...] = (x - mean) * lax.rsqrt(var + _EPS)


def _att_merge_kernel(ident_ref, x_ref, a_ref, w_ref, b_ref, o_ref):
    # Fused: 1-channel 3x3 attention conv (per-row dot with its im2col row) + bias,
    # sigmoid gate, gating of conv2 output, residual add.  The attention map is never
    # materialized or broadcast in HBM and there is no lane-sparse (C_out=1) store.
    a = a_ref[...].astype(jnp.float32)                      # (tm, 9*C)
    logit = jnp.sum(a * w_ref[...], axis=-1, keepdims=True) + b_ref[...]
    gate = jax.nn.sigmoid(logit)                            # (tm, 1)
    o_ref[...] = ident_ref[...] + x_ref[...] * gate


# ------------------------------------------------------------------------ matmul driver

def pallas_matmul(a, b, bias):
    """(M, K) @ (K, N) + bias, tiled over a 3-axis grid, bf16 inputs / f32 accumulate."""
    M, K = a.shape
    K2, N = b.shape
    assert K == K2

    tm = _row_tile(M)
    Mp = _round_up(M, tm)
    if K <= 512:
        tk, Kp = K, K
    else:
        tk = 512
        Kp = _round_up(K, tk)
    if N <= 256:
        tn, Np = N, N
    else:
        tn = 256
        Np = _round_up(N, tn)

    a = a.astype(jnp.bfloat16)
    b = b.astype(jnp.bfloat16)
    if (Mp, Kp) != (M, K):
        a = jnp.pad(a, ((0, Mp - M), (0, Kp - K)))
    if (Kp, Np) != (K, N):
        b = jnp.pad(b, ((0, Kp - K), (0, Np - N)))
    bias2 = bias.reshape(1, N).astype(jnp.float32)
    if Np != N:
        bias2 = jnp.pad(bias2, ((0, 0), (0, Np - N)))

    grid = (Mp // tm, Np // tn, Kp // tk)
    out = pl.pallas_call(
        _matmul_kernel,
        out_shape=jax.ShapeDtypeStruct((Mp, Np), jnp.float32),
        grid=grid,
        in_specs=[
            pl.BlockSpec((tm, tk), lambda i, j, k: (i, k)),
            pl.BlockSpec((tk, tn), lambda i, j, k: (k, j)),
            pl.BlockSpec((1, tn), lambda i, j, k: (0, j)),
        ],
        out_specs=pl.BlockSpec((tm, tn), lambda i, j, k: (i, j)),
        scratch_shapes=[pltpu.VMEM((tm, tn), jnp.float32)],
        compiler_params=pltpu.CompilerParams(
            dimension_semantics=("parallel", "parallel", "arbitrary"),
            vmem_limit_bytes=32 * 1024 * 1024,
        ),
        cost_estimate=pl.CostEstimate(
            flops=2 * Mp * Kp * Np,
            transcendentals=0,
            bytes_accessed=a.size * 2 + b.size * 2 + Mp * Np * 4,
        ),
    )(a, b, bias2)

    if (Mp, Np) != (M, N):
        out = out[:M, :N]
    return out


# ----------------------------------------------------------------------------- wrappers

def _im2col(x_nhwc, k):
    """Reflect-pad (k//2) + im2col in NHWC.  Column order: (tap i*k+j major, channel minor)."""
    N, H, W, C = x_nhwc.shape
    p = k // 2
    xp = jnp.pad(x_nhwc, ((0, 0), (p, p), (p, p), (0, 0)), mode="reflect") if p > 0 else x_nhwc
    taps = [xp[:, i:i + H, j:j + W, :] for i in range(k) for j in range(k)]
    cols = taps[0] if len(taps) == 1 else jnp.concatenate(taps, axis=-1)   # (N, H, W, k*k*C)
    return cols.reshape(N * H * W, k * k * C)


def _w_to_mat(w):
    """(C_out, C_in, k, k) -> (k*k*C_in, C_out) in (tap-major, channel-minor) row order."""
    c_out, c_in, k, _ = w.shape
    return jnp.transpose(w, (2, 3, 1, 0)).reshape(k * k * c_in, c_out)


def conv2d_reflect_nhwc(x_nhwc, w, b):
    """Conv2d(stride=1) preceded by ReflectionPad2d(k//2); returns (N*H*W, C_out) f32."""
    c_out = w.shape[0]
    a = _im2col(x_nhwc, w.shape[2])
    bias = b if b is not None else jnp.zeros((c_out,), jnp.float32)
    return pallas_matmul(a, _w_to_mat(w), bias)


def batchnorm_prelu_2d(x2d, gamma, beta, alpha, apply_prelu):
    """Training-mode BatchNorm (+ optional PReLU) on (N*H*W, C), tiled over rows."""
    M, C = x2d.shape
    tm = _row_tile(M)
    Mp = _round_up(M, tm)
    xr = jnp.pad(x2d, ((0, Mp - M), (0, 0))) if Mp != M else x2d
    row_spec = pl.BlockSpec((tm, C), lambda i: (i, 0))
    vec_spec = pl.BlockSpec((1, C), lambda i: (0, 0))

    mean, var = pl.pallas_call(
        functools.partial(_bn_stats_kernel, inv_m=1.0 / M),
        out_shape=(jax.ShapeDtypeStruct((1, C), jnp.float32),
                   jax.ShapeDtypeStruct((1, C), jnp.float32)),
        grid=(Mp // tm,),
        in_specs=[row_spec],
        out_specs=(vec_spec, vec_spec),
        compiler_params=pltpu.CompilerParams(dimension_semantics=("arbitrary",)),
    )(xr)

    y = pl.pallas_call(
        functools.partial(_bn_apply_kernel, apply_prelu=apply_prelu),
        out_shape=jax.ShapeDtypeStruct((Mp, C), jnp.float32),
        grid=(Mp // tm,),
        in_specs=[row_spec, vec_spec, vec_spec, vec_spec, vec_spec, vec_spec],
        out_specs=row_spec,
        compiler_params=pltpu.CompilerParams(dimension_semantics=("parallel",)),
    )(xr, mean, var, gamma.reshape(1, C), beta.reshape(1, C), alpha.reshape(1, C))

    return y[:M] if Mp != M else y


def inception_fused(x_nhwc, params):
    """All four inception branches (1x1/3x3/5x5/7x7) as ONE lane-dense matmul over a
    shared k=7 im2col (smaller kernels zero-embedded at the 7x7 center)."""
    def embed(w, kb):
        off = (7 - kb) // 2
        w7 = jnp.zeros((w.shape[0], w.shape[1], 7, 7), w.dtype)
        return w7.at[:, :, off:off + kb, off:off + kb].set(w)

    w_all = jnp.concatenate([embed(params["inc1_w"], 1), embed(params["inc3_w"], 3),
                             embed(params["inc5_w"], 5), embed(params["inc7_w"], 7)], axis=0)
    b_all = jnp.concatenate([params["inc1_b"], params["inc3_b"],
                             params["inc5_b"], params["inc7_b"]], axis=0)
    a = _im2col(x_nhwc, 7)
    return pallas_matmul(a, _w_to_mat(w_all), b_all)


def relu_instance_norm_2d(x2d, n, hw, c):
    """ReLU + InstanceNorm2d(affine=False) on (N*H*W, C), one grid step per batch item."""
    x3 = x2d.reshape(n, hw, c)
    spec = pl.BlockSpec((1, hw, c), lambda b: (b, 0, 0))
    y = pl.pallas_call(
        _relu_instnorm_kernel,
        out_shape=jax.ShapeDtypeStruct((n, hw, c), jnp.float32),
        grid=(n,),
        in_specs=[spec],
        out_specs=spec,
        compiler_params=pltpu.CompilerParams(dimension_semantics=("parallel",)),
    )(x3)
    return y.reshape(n * hw, c)


def att_merge(identity2d, conv2_2d, feat2d, att_w, att_b, n, h, w):
    """Fused attention conv (C_out=1) + sigmoid + gating + residual add, row-tiled."""
    M, C = conv2_2d.shape
    a = _im2col(feat2d.reshape(n, h, w, C), 3).astype(jnp.bfloat16)        # (M, 9*C)
    katt = a.shape[1]
    w_flat = jnp.transpose(att_w[0], (1, 2, 0)).reshape(1, katt).astype(jnp.float32)
    b_flat = att_b.reshape(1, 1).astype(jnp.float32)

    tm = _row_tile(M)
    Mp = _round_up(M, tm)
    pad = lambda t: jnp.pad(t, ((0, Mp - M), (0, 0))) if Mp != M else t

    out = pl.pallas_call(
        _att_merge_kernel,
        out_shape=jax.ShapeDtypeStruct((Mp, C), jnp.float32),
        grid=(Mp // tm,),
        in_specs=[pl.BlockSpec((tm, C), lambda i: (i, 0)),
                  pl.BlockSpec((tm, C), lambda i: (i, 0)),
                  pl.BlockSpec((tm, katt), lambda i: (i, 0)),
                  pl.BlockSpec((1, katt), lambda i: (0, 0)),
                  pl.BlockSpec((1, 1), lambda i: (0, 0))],
        out_specs=pl.BlockSpec((tm, C), lambda i: (i, 0)),
        compiler_params=pltpu.CompilerParams(dimension_semantics=("parallel",)),
    )(pad(identity2d), pad(conv2_2d), pad(a), w_flat, b_flat)

    return out[:M] if Mp != M else out


# ------------------------------------------------------------------- ResidualBlock fwd

def init_params(key, c_in, c_out):
    assert c_out % 4 == 0, "Inception_Module requires c_out divisible by 4"
    ks = jax.random.split(key, 12)
    w = lambda k, shape: 0.1 * jax.random.normal(k, shape, jnp.float32)
    return {
        # preact: BN(c_in) + PReLU(c_in)
        "preact_gamma": jnp.ones((c_in,), jnp.float32),
        "preact_beta": jnp.zeros((c_in,), jnp.float32),
        "preact_alpha": 0.25 * jnp.ones((c_in,), jnp.float32),
        # conv1: reflect-pad conv3x3 (bias=False) + BN + PReLU
        "conv1_w": w(ks[0], (c_out, c_in, 3, 3)),
        "conv1_gamma": jnp.ones((c_out,), jnp.float32),
        "conv1_beta": jnp.zeros((c_out,), jnp.float32),
        "conv1_alpha": 0.25 * jnp.ones((c_out,), jnp.float32),
        # conv2: reflect-pad conv3x3 (bias=False) + BN (no relu)
        "conv2_w": w(ks[1], (c_out, c_out, 3, 3)),
        "conv2_gamma": jnp.ones((c_out,), jnp.float32),
        "conv2_beta": jnp.zeros((c_out,), jnp.float32),
        # HourGlass attention: Inception_Module(c_out -> c_out), branches of c_out//4
        "inc1_w": w(ks[2], (c_out // 4, c_out, 1, 1)), "inc1_b": w(ks[3], (c_out // 4,)),
        "inc3_w": w(ks[4], (c_out // 4, c_out, 3, 3)), "inc3_b": w(ks[5], (c_out // 4,)),
        "inc5_w": w(ks[6], (c_out // 4, c_out, 5, 5)), "inc5_b": w(ks[7], (c_out // 4,)),
        "inc7_w": w(ks[8], (c_out // 4, c_out, 7, 7)), "inc7_b": w(ks[9], (c_out // 4,)),
        # out_block: reflect-pad conv3x3 (bias=True) + sigmoid -> 1-channel attention map
        "att_w": w(ks[10], (1, c_out, 3, 3)),
        "att_b": w(ks[11], (1,)),
    }


@jax.jit
def residual_block_forward(x_nchw, params):
    # scale='none', c_in == c_out  ->  shortcut is identity
    N, C_in, H, W = x_nchw.shape
    C_out = params["conv1_w"].shape[0]
    M = N * H * W

    # single NCHW -> NHWC transpose at entry; everything below is channels-last
    x = jnp.transpose(x_nchw, (0, 2, 3, 1))
    x2d = x.reshape(M, C_in)
    identity2d = x2d

    # preact: BN + PReLU
    out2d = batchnorm_prelu_2d(x2d, params["preact_gamma"], params["preact_beta"],
                               params["preact_alpha"], apply_prelu=True)

    # conv1: reflect-pad conv3x3 + BN + PReLU
    out2d = conv2d_reflect_nhwc(out2d.reshape(N, H, W, C_in), params["conv1_w"], None)
    out2d = batchnorm_prelu_2d(out2d, params["conv1_gamma"], params["conv1_beta"],
                               params["conv1_alpha"], apply_prelu=True)

    # conv2: reflect-pad conv3x3 + BN (relu='none'; alpha unused -> zeros)
    out2d = conv2d_reflect_nhwc(out2d.reshape(N, H, W, C_out), params["conv2_w"], None)
    out2d = batchnorm_prelu_2d(out2d, params["conv2_gamma"], params["conv2_beta"],
                               jnp.zeros_like(params["conv2_gamma"]), apply_prelu=False)
    conv2_2d = out2d

    # HourGlassBlock(depth=2): fused inception -> ReLU+InstanceNorm -> attention gate
    feat2d = inception_fused(conv2_2d.reshape(N, H, W, C_out), params)     # (M, C_out)
    feat2d = relu_instance_norm_2d(feat2d, N, H * W, C_out)
    out2d = att_merge(identity2d, conv2_2d, feat2d,
                      params["att_w"], params["att_b"], N, H, W)

    # single NHWC -> NCHW transpose at exit
    return jnp.transpose(out2d.reshape(N, H, W, C_out), (0, 3, 1, 2))


if __name__ == "__main__":
    key = jax.random.PRNGKey(0)
    k_x, k_p = jax.random.split(key)

    N, C, H, W = 2, 4, 16, 16            # c_in == c_out == 4, scale='none'
    x = jax.random.normal(k_x, (N, C, H, W), jnp.float32)
    params = init_params(k_p, C, C)

    out = residual_block_forward(x, params)
    jax.block_until_ready(out)
    assert out.shape == (N, C, H, W)
    print("KERNEL_OK")
</pallas_src>

<mosaic_0001>
module attributes {stable_mosaic.version = 11 : i64} {
  func.func @_bn_stats_kernel(%arg0: i32, %arg1: memref<256x4xf32, #tpu.memory_space<vmem>>, %arg2: memref<1x4xf32, #tpu.memory_space<vmem>>, %arg3: memref<1x4xf32, #tpu.memory_space<vmem>>) attributes {dimension_semantics = [#tpu.dimension_semantics<arbitrary>], iteration_bounds = array<i64: 2>, scalar_prefetch = 0 : i64, scratch_operands = 0 : i64, tpu.core_type = #tpu.core_type<tc>, window_params = [{transform_indices = @transform_0, window_bounds = array<i64: 256, 4>}, {pipeline_mode = #tpu.pipeline_mode<synchronous>, transform_indices = @transform_1, window_bounds = array<i64: 1, 4>}, {pipeline_mode = #tpu.pipeline_mode<synchronous>, transform_indices = @transform_2, window_bounds = array<i64: 1, 4>}]} {
    %c0_i32 = arith.constant 0 : i32
    %0 = arith.cmpi eq, %arg0, %c0_i32 : i32
    %1 = arith.extui %0 : i1 to i32
    %c0_i32_0 = arith.constant 0 : i32
    %2 = arith.cmpi ne, %1, %c0_i32_0 : i32
    scf.if %2 {
      %cst_12 = arith.constant 0.000000e+00 : f32
      %18 = vector.broadcast %cst_12 : f32 to vector<1x4xf32>
      %c0_13 = arith.constant 0 : index
      %c0_14 = arith.constant 0 : index
      %19 = vector.load %arg2[%c0_13, %c0_14] : memref<1x4xf32, #tpu.memory_space<vmem>>, vector<1x4xf32>
      tpu.vector_store %arg2[%c0_13, %c0_14], %18 {strides = array<i32>} : memref<1x4xf32, #tpu.memory_space<vmem>>, vector<1x4xf32>,
      %cst_15 = arith.constant 0.000000e+00 : f32
      %20 = vector.broadcast %cst_15 : f32 to vector<1x4xf32>
      %c0_16 = arith.constant 0 : index
      %c0_17 = arith.constant 0 : index
      %21 = vector.load %arg3[%c0_16, %c0_17] : memref<1x4xf32, #tpu.memory_space<vmem>>, vector<1x4xf32>
      tpu.vector_store %arg3[%c0_16, %c0_17], %20 {strides = array<i32>} : memref<1x4xf32, #tpu.memory_space<vmem>>, vector<1x4xf32>,
    } else {
    }
    %c0 = arith.constant 0 : index
    %c0_1 = arith.constant 0 : index
    %3 = vector.load %arg1[%c0, %c0_1] : memref<256x4xf32, #tpu.memory_space<vmem>>, vector<256x4xf32>
    %c0_2 = arith.constant 0 : index
    %c0_3 = arith.constant 0 : index
    %4 = vector.load %arg2[%c0_2, %c0_3] : memref<1x4xf32, #tpu.memory_space<vmem>>, vector<1x4xf32>
    %cst = arith.constant dense<0.000000e+00> : vector<4xf32>
    %5 = vector.multi_reduction <add>, %3, %cst [0] : vector<256x4xf32> to vector<4xf32>
    %6 = vector.shape_cast %5 : vector<4xf32> to vector<1x4xf32>
    %7 = arith.addf %4, %6 : vector<1x4xf32>
    %c0_4 = arith.constant 0 : index
    %c0_5 = arith.constant 0 : index
    %8 = vector.load %arg2[%c0_4, %c0_5] : memref<1x4xf32, #tpu.memory_space<vmem>>, vector<1x4xf32>
    tpu.vector_store %arg2[%c0_4, %c0_5], %7 {strides = array<i32>} : memref<1x4xf32, #tpu.memory_space<vmem>>, vector<1x4xf32>,
    %c0_6 = arith.constant 0 : index
    %c0_7 = arith.constant 0 : index
    %9 = vector.load %arg3[%c0_6, %c0_7] : memref<1x4xf32, #tpu.memory_space<vmem>>, vector<1x4xf32>
    %10 = arith.mulf %3, %3 : vector<256x4xf32>
    %cst_8 = arith.constant dense<0.000000e+00> : vector<4xf32>
    %11 = vector.multi_reduction <add>, %10, %cst_8 [0] : vector<256x4xf32> to vector<4xf32>
    %12 = vector.shape_cast %11 : vector<4xf32> to vector<1x4xf32>
    %13 = arith.addf %9, %12 : vector<1x4xf32>
    %c0_9 = arith.constant 0 : index
    %c0_10 = arith.constant 0 : index
    %14 = vector.load %arg3[%c0_9, %c0_10] : memref<1x4xf32, #tpu.memory_space<vmem>>, vector<1x4xf32>
    tpu.vector_store %arg3[%c0_9, %c0_10], %13 {strides = array<i32>} : memref<1x4xf32, #tpu.memory_space<vmem>>, vector<1x4xf32>,
    %c1_i32 = arith.constant 1 : i32
    %15 = arith.cmpi eq, %arg0, %c1_i32 : i32
    %16 = arith.extui %15 : i1 to i32
    %c0_i32_11 = arith.constant 0 : i32
    %17 = arith.cmpi ne, %16, %c0_i32_11 : i32
    scf.if %17 {
      %c0_12 = arith.constant 0 : index
      %c0_13 = arith.constant 0 : index
      %18 = vector.load %arg2[%c0_12, %c0_13] : memref<1x4xf32, #tpu.memory_space<vmem>>, vector<1x4xf32>
      %cst_14 = arith.constant 0.001953125 : f32
      %19 = vector.broadcast %cst_14 : f32 to vector<1x4xf32>
      %20 = arith.mulf %18, %19 : vector<1x4xf32>
      %c0_15 = arith.constant 0 : index
      %c0_16 = arith.constant 0 : index
      %21 = vector.load %arg3[%c0_15, %c0_16] : memref<1x4xf32, #tpu.memory_space<vmem>>, vector<1x4xf32>
      %cst_17 = arith.constant 0.001953125 : f32
      %22 = vector.broadcast %cst_17 : f32 to vector<1x4xf32>
      %23 = arith.mulf %21, %22 : vector<1x4xf32>
      %24 = arith.mulf %20, %20 : vector<1x4xf32>
      %25 = arith.subf %23, %24 : vector<1x4xf32>
      %c0_18 = arith.constant 0 : index
      %c0_19 = arith.constant 0 : index
      %26 = vector.load %arg2[%c0_18, %c0_19] : memref<1x4xf32, #tpu.memory_space<vmem>>, vector<1x4xf32>
      tpu.vector_store %arg2[%c0_18, %c0_19], %20 {strides = array<i32>} : memref<1x4xf32, #tpu.memory_space<vmem>>, vector<1x4xf32>,
      %c0_20 = arith.constant 0 : index
      %c0_21 = arith.constant 0 : index
      %27 = vector.load %arg3[%c0_20, %c0_21] : memref<1x4xf32, #tpu.memory_space<vmem>>, vector<1x4xf32>
      tpu.vector_store %arg3[%c0_20, %c0_21], %25 {strides = array<i32>} : memref<1x4xf32, #tpu.memory_space<vmem>>, vector<1x4xf32>,
    } else {
    }
    return
  }
  func.func @transform_0(%arg0: i32) -> (i32, i32) {
    %c0_i32 = arith.constant 0 : i32
    %c0_i32_0 = arith.constant 0 : i32
    return %arg0, %c0_i32 : i32, i32
  }
  func.func @transform_1(%arg0: i32) -> (i32, i32) {
    %c0_i32 = arith.constant 0 : i32
    %c0_i32_0 = arith.constant 0 : i32
    %c0_i32_1 = arith.constant 0 : i32
    return %c0_i32, %c0_i32_0 : i32, i32
  }
  func.func @transform_2(%arg0: i32) -> (i32, i32) {
    %c0_i32 = arith.constant 0 : i32
    %c0_i32_0 = arith.constant 0 : i32
    %c0_i32_1 = arith.constant 0 : i32
    return %c0_i32, %c0_i32_0 : i32, i32
  }
}

module attributes {stable_mosaic.version = 11 : i64} {
  func.func @_bn_apply_kernel(%arg0: i32, %arg1: memref<256x4xf32, #tpu.memory_space<vmem>>, %arg2: memref<1x4xf32, #tpu.memory_space<vmem>>, %arg3: memref<1x4xf32, #tpu.memory_space<vmem>>, %arg4: memref<1x4xf32, #tpu.memory_space<vmem>>, %arg5: memref<1x4xf32, #tpu.memory_space<vmem>>, %arg6: memref<1x4xf32, #tpu.memory_space<vmem>>, %arg7: memref<256x4xf32, #tpu.memory_space<vmem>>) attributes {dimension_semantics = [#tpu.dimension_semantics<parallel>], iteration_bounds = array<i64: 2>, scalar_prefetch = 0 : i64, scratch_operands = 0 : i64, tpu.core_type = #tpu.core_type<tc>, window_params = [{transform_indices = @transform_0, window_bounds = array<i64: 256, 4>}, {pipeline_mode = #tpu.pipeline_mode<synchronous>, transform_indices = @transform_1, window_bounds = array<i64: 1, 4>}, {pipeline_mode = #tpu.pipeline_mode<synchronous>, transform_indices = @transform_2, window_bounds = array<i64: 1, 4>}, {pipeline_mode = #tpu.pipeline_mode<synchronous>, transform_indices = @transform_3, window_bounds = array<i64: 1, 4>}, {pipeline_mode = #tpu.pipeline_mode<synchronous>, transform_indices = @transform_4, window_bounds = array<i64: 1, 4>}, {pipeline_mode = #tpu.pipeline_mode<synchronous>, transform_indices = @transform_5, window_bounds = array<i64: 1, 4>}, {transform_indices = @transform_6, window_bounds = array<i64: 256, 4>}]} {
    %c0 = arith.constant 0 : index
    %c0_0 = arith.constant 0 : index
    %0 = vector.load %arg1[%c0, %c0_0] : memref<256x4xf32, #tpu.memory_space<vmem>>, vector<256x4xf32>
    %c0_1 = arith.constant 0 : index
    %c0_2 = arith.constant 0 : index
    %1 = vector.load %arg2[%c0_1, %c0_2] : memref<1x4xf32, #tpu.memory_space<vmem>>, vector<1x4xf32>
    %2 = vector.broadcast %1 : vector<1x4xf32> to vector<256x4xf32>
    %3 = arith.subf %0, %2 : vector<256x4xf32>
    %c0_3 = arith.constant 0 : index
    %c0_4 = arith.constant 0 : index
    %4 = vector.load %arg3[%c0_3, %c0_4] : memref<1x4xf32, #tpu.memory_space<vmem>>, vector<1x4xf32>
    %cst = arith.constant 9.99999974E-6 : f32
    %5 = vector.broadcast %cst : f32 to vector<1x4xf32>
    %6 = arith.addf %4, %5 : vector<1x4xf32>
    %7 = math.rsqrt %6 : vector<1x4xf32>
    %8 = vector.broadcast %7 : vector<1x4xf32> to vector<256x4xf32>
    %9 = arith.mulf %3, %8 : vector<256x4xf32>
    %c0_5 = arith.constant 0 : index
    %c0_6 = arith.constant 0 : index
    %10 = vector.load %arg4[%c0_5, %c0_6] : memref<1x4xf32, #tpu.memory_space<vmem>>, vector<1x4xf32>
    %11 = vector.broadcast %10 : vector<1x4xf32> to vector<256x4xf32>
    %12 = arith.mulf %9, %11 : vector<256x4xf32>
    %c0_7 = arith.constant 0 : index
    %c0_8 = arith.constant 0 : index
    %13 = vector.load %arg5[%c0_7, %c0_8] : memref<1x4xf32, #tpu.memory_space<vmem>>, vector<1x4xf32>
    %14 = vector.broadcast %13 : vector<1x4xf32> to vector<256x4xf32>
    %15 = arith.addf %12, %14 : vector<256x4xf32>
    %cst_9 = arith.constant 0.000000e+00 : f32
    %16 = vector.broadcast %cst_9 : f32 to vector<256x4xf32>
    %17 = arith.cmpf oge, %15, %16 : vector<256x4xf32>
    %c0_10 = arith.constant 0 : index
    %c0_11 = arith.constant 0 : index
    %18 = vector.load %arg6[%c0_10, %c0_11] : memref<1x4xf32, #tpu.memory_space<vmem>>, vector<1x4xf32>
    %19 = vector.broadcast %18 : vector<1x4xf32> to vector<256x4xf32>
    %20 = arith.mulf %19, %15 : vector<256x4xf32>
    %21 = arith.select %17, %15, %20 : vector<256x4xi1>, vector<256x4xf32>
    %c0_12 = arith.constant 0 : index
    %c0_13 = arith.constant 0 : index
    %22 = vector.load %arg7[%c0_12, %c0_13] : memref<256x4xf32, #tpu.memory_space<vmem>>, vector<256x4xf32>
    tpu.vector_store %arg7[%c0_12, %c0_13], %21 {strides = array<i32>} : memref<256x4xf32, #tpu.memory_space<vmem>>, vector<256x4xf32>,
    return
  }
  func.func @transform_0(%arg0: i32) -> (i32, i32) {
    %c0_i32 = arith.constant 0 : i32
    %c0_i32_0 = arith.constant 0 : i32
    return %arg0, %c0_i32 : i32, i32
  }
  func.func @transform_1(%arg0: i32) -> (i32, i32) {
    %c0_i32 = arith.constant 0 : i32
    %c0_i32_0 = arith.constant 0 : i32
    %c0_i32_1 = arith.constant 0 : i32
    return %c0_i32, %c0_i32_0 : i32, i32
  }
  func.func @transform_2(%arg0: i32) -> (i32, i32) {
    %c0_i32 = arith.constant 0 : i32
    %c0_i32_0 = arith.constant 0 : i32
    %c0_i32_1 = arith.constant 0 : i32
    return %c0_i32, %c0_i32_0 : i32, i32
  }
  func.func @transform_3(%arg0: i32) -> (i32, i32) {
    %c0_i32 = arith.constant 0 : i32
    %c0_i32_0 = arith.constant 0 : i32
    %c0_i32_1 = arith.constant 0 : i32
    return %c0_i32, %c0_i32_0 : i32, i32
  }
  func.func @transform_4(%arg0: i32) -> (i32, i32) {
    %c0_i32 = arith.constant 0 : i32
    %c0_i32_0 = arith.constant 0 : i32
    %c0_i32_1 = arith.constant 0 : i32
    return %c0_i32, %c0_i32_0 : i32, i32
  }
  func.func @transform_5(%arg0: i32) -> (i32, i32) {
    %c0_i32 = arith.constant 0 : i32
    %c0_i32_0 = arith.constant 0 : i32
    %c0_i32_1 = arith.constant 0 : i32
    return %c0_i32, %c0_i32_0 : i32, i32
  }
  func.func @transform_6(%arg0: i32) -> (i32, i32) {
    %c0_i32 = arith.constant 0 : i32
    %c0_i32_0 = arith.constant 0 : i32
    return %arg0, %c0_i32 : i32, i32
  }
}

module attributes {stable_mosaic.version = 11 : i64} {
  func.func @_matmul_kernel(%arg0: i32, %arg1: i32, %arg2: i32, %arg3: memref<256x36xbf16, #tpu.memory_space<vmem>>, %arg4: memref<36x4xbf16, #tpu.memory_space<vmem>>, %arg5: memref<1x4xf32, #tpu.memory_space<vmem>>, %arg6: memref<256x4xf32, #tpu.memory_space<vmem>>, %arg7: memref<256x4xf32, #tpu.memory_space<vmem>>) attributes {dimension_semantics = [#tpu.dimension_semantics<parallel>, #tpu.dimension_semantics<parallel>, #tpu.dimension_semantics<arbitrary>], iteration_bounds = array<i64: 2, 1, 1>, scalar_prefetch = 0 : i64, scratch_operands = 1 : i64, tpu.core_type = #tpu.core_type<tc>, window_params = [{transform_indices = @transform_0, window_bounds = array<i64: 256, 36>}, {transform_indices = @transform_1, window_bounds = array<i64: 36, 4>}, {transform_indices = @transform_2, window_bounds = array<i64: 1, 4>}, {transform_indices = @transform_3, window_bounds = array<i64: 256, 4>}]} {
    %c0_i32 = arith.constant 0 : i32
    %0 = arith.cmpi eq, %arg2, %c0_i32 : i32
    %1 = arith.extui %0 : i1 to i32
    %c0_i32_0 = arith.constant 0 : i32
    %2 = arith.cmpi ne, %1, %c0_i32_0 : i32
    scf.if %2 {
      %cst_10 = arith.constant 0.000000e+00 : f32
      %12 = vector.broadcast %cst_10 : f32 to vector<256x4xf32>
      %c0_11 = arith.constant 0 : index
      %c0_12 = arith.constant 0 : index
      %13 = vector.load %arg7[%c0_11, %c0_12] : memref<256x4xf32, #tpu.memory_space<vmem>>, vector<256x4xf32>
      tpu.vector_store %arg7[%c0_11, %c0_12], %12 {strides = array<i32>} : memref<256x4xf32, #tpu.memory_space<vmem>>, vector<256x4xf32>,
    } else {
    }
    %c0 = arith.constant 0 : index
    %c0_1 = arith.constant 0 : index
    %3 = vector.load %arg7[%c0, %c0_1] : memref<256x4xf32, #tpu.memory_space<vmem>>, vector<256x4xf32>
    %c0_2 = arith.constant 0 : index
    %c0_3 = arith.constant 0 : index
    %4 = vector.load %arg3[%c0_2, %c0_3] : memref<256x36xbf16, #tpu.memory_space<vmem>>, vector<256x36xbf16>
    %c0_4 = arith.constant 0 : index
    %c0_5 = arith.constant 0 : index
    %5 = vector.load %arg4[%c0_4, %c0_5] : memref<36x4xbf16, #tpu.memory_space<vmem>>, vector<36x4xbf16>
    %cst = arith.constant dense<0.000000e+00> : vector<256x4xf32>
    %6 = tpu.matmul %4, %5, %cst {dimension_numbers = #tpu.dot_dimension_numbers<[1], [0], [0], [1], [0, 0, 1, 1], [], []>} : vector<256x36xbf16>, vector<36x4xbf16>, vector<256x4xf32> -> vector<256x4xf32>
    %7 = arith.addf %3, %6 : vector<256x4xf32>
    %c0_6 = arith.constant 0 : index
    %c0_7 = arith.constant 0 : index
    %8 = vector.load %arg7[%c0_6, %c0_7] : memref<256x4xf32, #tpu.memory_space<vmem>>, vector<256x4xf32>
    tpu.vector_store %arg7[%c0_6, %c0_7], %7 {strides = array<i32>} : memref<256x4xf32, #tpu.memory_space<vmem>>, vector<256x4xf32>,
    %c0_i32_8 = arith.constant 0 : i32
    %9 = arith.cmpi eq, %arg2, %c0_i32_8 : i32
    %10 = arith.extui %9 : i1 to i32
    %c0_i32_9 = arith.constant 0 : i32
    %11 = arith.cmpi ne, %10, %c0_i32_9 : i32
    scf.if %11 {
      %c0_10 = arith.constant 0 : index
      %c0_11 = arith.constant 0 : index
      %12 = vector.load %arg7[%c0_10, %c0_11] : memref<256x4xf32, #tpu.memory_space<vmem>>, vector<256x4xf32>
      %c0_12 = arith.constant 0 : index
      %c0_13 = arith.constant 0 : index
      %13 = vector.load %arg5[%c0_12, %c0_13] : memref<1x4xf32, #tpu.memory_space<vmem>>, vector<1x4xf32>
      %14 = vector.broadcast %13 : vector<1x4xf32> to vector<256x4xf32>
      %15 = arith.addf %12, %14 : vector<256x4xf32>
      %c0_14 = arith.constant 0 : index
      %c0_15 = arith.constant 0 : index
      %16 = vector.load %arg6[%c0_14, %c0_15] : memref<256x4xf32, #tpu.memory_space<vmem>>, vector<256x4xf32>
      tpu.vector_store %arg6[%c0_14, %c0_15], %15 {strides = array<i32>} : memref<256x4xf32, #tpu.memory_space<vmem>>, vector<256x4xf32>,
    } else {
    }
    return
  }
  func.func @transform_0(%arg0: i32, %arg1: i32, %arg2: i32) -> (i32, i32) {
    %c0_i32 = arith.constant 0 : i32
    return %arg0, %arg2 : i32, i32
  }
  func.func @transform_1(%arg0: i32, %arg1: i32, %arg2: i32) -> (i32, i32) {
    %c0_i32 = arith.constant 0 : i32
    return %arg2, %arg1 : i32, i32
  }
  func.func @transform_2(%arg0: i32, %arg1: i32, %arg2: i32) -> (i32, i32) {
    %c0_i32 = arith.constant 0 : i32
    %c0_i32_0 = arith.constant 0 : i32
    return %c0_i32, %arg1 : i32, i32
  }
  func.func @transform_3(%arg0: i32, %arg1: i32, %arg2: i32) -> (i32, i32) {
    %c0_i32 = arith.constant 0 : i32
    return %arg0, %arg1 : i32, i32
  }
}

module attributes {stable_mosaic.version = 11 : i64} {
  func.func @_bn_apply_kernel(%arg0: i32, %arg1: memref<256x4xf32, #tpu.memory_space<vmem>>, %arg2: memref<1x4xf32, #tpu.memory_space<vmem>>, %arg3: memref<1x4xf32, #tpu.memory_space<vmem>>, %arg4: memref<1x4xf32, #tpu.memory_space<vmem>>, %arg5: memref<1x4xf32, #tpu.memory_space<vmem>>, %arg6: memref<1x4xf32, #tpu.memory_space<vmem>>, %arg7: memref<256x4xf32, #tpu.memory_space<vmem>>) attributes {dimension_semantics = [#tpu.dimension_semantics<parallel>], iteration_bounds = array<i64: 2>, scalar_prefetch = 0 : i64, scratch_operands = 0 : i64, tpu.core_type = #tpu.core_type<tc>, window_params = [{transform_indices = @transform_0, window_bounds = array<i64: 256, 4>}, {pipeline_mode = #tpu.pipeline_mode<synchronous>, transform_indices = @transform_1, window_bounds = array<i64: 1, 4>}, {pipeline_mode = #tpu.pipeline_mode<synchronous>, transform_indices = @transform_2, window_bounds = array<i64: 1, 4>}, {pipeline_mode = #tpu.pipeline_mode<synchronous>, transform_indices = @transform_3, window_bounds = array<i64: 1, 4>}, {pipeline_mode = #tpu.pipeline_mode<synchronous>, transform_indices = @transform_4, window_bounds = array<i64: 1, 4>}, {pipeline_mode = #tpu.pipeline_mode<synchronous>, transform_indices = @transform_5, window_bounds = array<i64: 1, 4>}, {transform_indices = @transform_6, window_bounds = array<i64: 256, 4>}]} {
    %c0 = arith.constant 0 : index
    %c0_0 = arith.constant 0 : index
    %0 = vector.load %arg1[%c0, %c0_0] : memref<256x4xf32, #tpu.memory_space<vmem>>, vector<256x4xf32>
    %c0_1 = arith.constant 0 : index
    %c0_2 = arith.constant 0 : index
    %1 = vector.load %arg2[%c0_1, %c0_2] : memref<1x4xf32, #tpu.memory_space<vmem>>, vector<1x4xf32>
    %2 = vector.broadcast %1 : vector<1x4xf32> to vector<256x4xf32>
    %3 = arith.subf %0, %2 : vector<256x4xf32>
    %c0_3 = arith.constant 0 : index
    %c0_4 = arith.constant 0 : index
    %4 = vector.load %arg3[%c0_3, %c0_4] : memref<1x4xf32, #tpu.memory_space<vmem>>, vector<1x4xf32>
    %cst = arith.constant 9.99999974E-6 : f32
    %5 = vector.broadcast %cst : f32 to vector<1x4xf32>
    %6 = arith.addf %4, %5 : vector<1x4xf32>
    %7 = math.rsqrt %6 : vector<1x4xf32>
    %8 = vector.broadcast %7 : vector<1x4xf32> to vector<256x4xf32>
    %9 = arith.mulf %3, %8 : vector<256x4xf32>
    %c0_5 = arith.constant 0 : index
    %c0_6 = arith.constant 0 : index
    %10 = vector.load %arg4[%c0_5, %c0_6] : memref<1x4xf32, #tpu.memory_space<vmem>>, vector<1x4xf32>
    %11 = vector.broadcast %10 : vector<1x4xf32> to vector<256x4xf32>
    %12 = arith.mulf %9, %11 : vector<256x4xf32>
    %c0_7 = arith.constant 0 : index
    %c0_8 = arith.constant 0 : index
    %13 = vector.load %arg5[%c0_7, %c0_8] : memref<1x4xf32, #tpu.memory_space<vmem>>, vector<1x4xf32>
    %14 = vector.broadcast %13 : vector<1x4xf32> to vector<256x4xf32>
    %15 = arith.addf %12, %14 : vector<256x4xf32>
    %c0_9 = arith.constant 0 : index
    %c0_10 = arith.constant 0 : index
    %16 = vector.load %arg7[%c0_9, %c0_10] : memref<256x4xf32, #tpu.memory_space<vmem>>, vector<256x4xf32>
    tpu.vector_store %arg7[%c0_9, %c0_10], %15 {strides = array<i32>} : memref<256x4xf32, #tpu.memory_space<vmem>>, vector<256x4xf32>,
    return
  }
  func.func @transform_0(%arg0: i32) -> (i32, i32) {
    %c0_i32 = arith.constant 0 : i32
    %c0_i32_0 = arith.constant 0 : i32
    return %arg0, %c0_i32 : i32, i32
  }
  func.func @transform_1(%arg0: i32) -> (i32, i32) {
    %c0_i32 = arith.constant 0 : i32
    %c0_i32_0 = arith.constant 0 : i32
    %c0_i32_1 = arith.constant 0 : i32
    return %c0_i32, %c0_i32_0 : i32, i32
  }
  func.func @transform_2(%arg0: i32) -> (i32, i32) {
    %c0_i32 = arith.constant 0 : i32
    %c0_i32_0 = arith.constant 0 : i32
    %c0_i32_1 = arith.constant 0 : i32
    return %c0_i32, %c0_i32_0 : i32, i32
  }
  func.func @transform_3(%arg0: i32) -> (i32, i32) {
    %c0_i32 = arith.constant 0 : i32
    %c0_i32_0 = arith.constant 0 : i32
    %c0_i32_1 = arith.constant 0 : i32
    return %c0_i32, %c0_i32_0 : i32, i32
  }
  func.func @transform_4(%arg0: i32) -> (i32, i32) {
    %c0_i32 = arith.constant 0 : i32
    %c0_i32_0 = arith.constant 0 : i32
    %c0_i32_1 = arith.constant 0 : i32
    return %c0_i32, %c0_i32_0 : i32, i32
  }
  func.func @transform_5(%arg0: i32) -> (i32, i32) {
    %c0_i32 = arith.constant 0 : i32
    %c0_i32_0 = arith.constant 0 : i32
    %c0_i32_1 = arith.constant 0 : i32
    return %c0_i32, %c0_i32_0 : i32, i32
  }
  func.func @transform_6(%arg0: i32) -> (i32, i32) {
    %c0_i32 = arith.constant 0 : i32
    %c0_i32_0 = arith.constant 0 : i32
    return %arg0, %c0_i32 : i32, i32
  }
}

module attributes {stable_mosaic.version = 11 : i64} {
  func.func @_matmul_kernel(%arg0: i32, %arg1: i32, %arg2: i32, %arg3: memref<256x196xbf16, #tpu.memory_space<vmem>>, %arg4: memref<196x4xbf16, #tpu.memory_space<vmem>>, %arg5: memref<1x4xf32, #tpu.memory_space<vmem>>, %arg6: memref<256x4xf32, #tpu.memory_space<vmem>>, %arg7: memref<256x4xf32, #tpu.memory_space<vmem>>) attributes {dimension_semantics = [#tpu.dimension_semantics<parallel>, #tpu.dimension_semantics<parallel>, #tpu.dimension_semantics<arbitrary>], iteration_bounds = array<i64: 2, 1, 1>, scalar_prefetch = 0 : i64, scratch_operands = 1 : i64, tpu.core_type = #tpu.core_type<tc>, window_params = [{transform_indices = @transform_0, window_bounds = array<i64: 256, 196>}, {transform_indices = @transform_1, window_bounds = array<i64: 196, 4>}, {transform_indices = @transform_2, window_bounds = array<i64: 1, 4>}, {transform_indices = @transform_3, window_bounds = array<i64: 256, 4>}]} {
    %c0_i32 = arith.constant 0 : i32
    %0 = arith.cmpi eq, %arg2, %c0_i32 : i32
    %1 = arith.extui %0 : i1 to i32
    %c0_i32_0 = arith.constant 0 : i32
    %2 = arith.cmpi ne, %1, %c0_i32_0 : i32
    scf.if %2 {
      %cst_10 = arith.constant 0.000000e+00 : f32
      %12 = vector.broadcast %cst_10 : f32 to vector<256x4xf32>
      %c0_11 = arith.constant 0 : index
      %c0_12 = arith.constant 0 : index
      %13 = vector.load %arg7[%c0_11, %c0_12] : memref<256x4xf32, #tpu.memory_space<vmem>>, vector<256x4xf32>
      tpu.vector_store %arg7[%c0_11, %c0_12], %12 {strides = array<i32>} : memref<256x4xf32, #tpu.memory_space<vmem>>, vector<256x4xf32>,
    } else {
    }
    %c0 = arith.constant 0 : index
    %c0_1 = arith.constant 0 : index
    %3 = vector.load %arg7[%c0, %c0_1] : memref<256x4xf32, #tpu.memory_space<vmem>>, vector<256x4xf32>
    %c0_2 = arith.constant 0 : index
    %c0_3 = arith.constant 0 : index
    %4 = vector.load %arg3[%c0_2, %c0_3] : memref<256x196xbf16, #tpu.memory_space<vmem>>, vector<256x196xbf16>
    %c0_4 = arith.constant 0 : index
    %c0_5 = arith.constant 0 : index
    %5 = vector.load %arg4[%c0_4, %c0_5] : memref<196x4xbf16, #tpu.memory_space<vmem>>, vector<196x4xbf16>
    %cst = arith.constant dense<0.000000e+00> : vector<256x4xf32>
    %6 = tpu.matmul %4, %5, %cst {dimension_numbers = #tpu.dot_dimension_numbers<[1], [0], [0], [1], [0, 0, 1, 1], [], []>} : vector<256x196xbf16>, vector<196x4xbf16>, vector<256x4xf32> -> vector<256x4xf32>
    %7 = arith.addf %3, %6 : vector<256x4xf32>
    %c0_6 = arith.constant 0 : index
    %c0_7 = arith.constant 0 : index
    %8 = vector.load %arg7[%c0_6, %c0_7] : memref<256x4xf32, #tpu.memory_space<vmem>>, vector<256x4xf32>
    tpu.vector_store %arg7[%c0_6, %c0_7], %7 {strides = array<i32>} : memref<256x4xf32, #tpu.memory_space<vmem>>, vector<256x4xf32>,
    %c0_i32_8 = arith.constant 0 : i32
    %9 = arith.cmpi eq, %arg2, %c0_i32_8 : i32
    %10 = arith.extui %9 : i1 to i32
    %c0_i32_9 = arith.constant 0 : i32
    %11 = arith.cmpi ne, %10, %c0_i32_9 : i32
    scf.if %11 {
      %c0_10 = arith.constant 0 : index
      %c0_11 = arith.constant 0 : index
      %12 = vector.load %arg7[%c0_10, %c0_11] : memref<256x4xf32, #tpu.memory_space<vmem>>, vector<256x4xf32>
      %c0_12 = arith.constant 0 : index
      %c0_13 = arith.constant 0 : index
      %13 = vector.load %arg5[%c0_12, %c0_13] : memref<1x4xf32, #tpu.memory_space<vmem>>, vector<1x4xf32>
      %14 = vector.broadcast %13 : vector<1x4xf32> to vector<256x4xf32>
      %15 = arith.addf %12, %14 : vector<256x4xf32>
      %c0_14 = arith.constant 0 : index
      %c0_15 = arith.constant 0 : index
      %16 = vector.load %arg6[%c0_14, %c0_15] : memref<256x4xf32, #tpu.memory_space<vmem>>, vector<256x4xf32>
      tpu.vector_store %arg6[%c0_14, %c0_15], %15 {strides = array<i32>} : memref<256x4xf32, #tpu.memory_space<vmem>>, vector<256x4xf32>,
    } else {
    }
    return
  }
  func.func @transform_0(%arg0: i32, %arg1: i32, %arg2: i32) -> (i32, i32) {
    %c0_i32 = arith.constant 0 : i32
    return %arg0, %arg2 : i32, i32
  }
  func.func @transform_1(%arg0: i32, %arg1: i32, %arg2: i32) -> (i32, i32) {
    %c0_i32 = arith.constant 0 : i32
    return %arg2, %arg1 : i32, i32
  }
  func.func @transform_2(%arg0: i32, %arg1: i32, %arg2: i32) -> (i32, i32) {
    %c0_i32 = arith.constant 0 : i32
    %c0_i32_0 = arith.constant 0 : i32
    return %c0_i32, %arg1 : i32, i32
  }
  func.func @transform_3(%arg0: i32, %arg1: i32, %arg2: i32) -> (i32, i32) {
    %c0_i32 = arith.constant 0 : i32
    return %arg0, %arg1 : i32, i32
  }
}

module attributes {stable_mosaic.version = 11 : i64} {
  func.func @_relu_instnorm_kernel(%arg0: i32, %arg1: memref<1x256x4xf32, #tpu.memory_space<vmem>>, %arg2: memref<1x256x4xf32, #tpu.memory_space<vmem>>) attributes {dimension_semantics = [#tpu.dimension_semantics<parallel>], iteration_bounds = array<i64: 2>, scalar_prefetch = 0 : i64, scratch_operands = 0 : i64, tpu.core_type = #tpu.core_type<tc>, window_params = [{transform_indices = @transform_0, window_bounds = array<i64: 1, 256, 4>}, {transform_indices = @transform_1, window_bounds = array<i64: 1, 256, 4>}]} {
    %c0 = arith.constant 0 : index
    %c0_0 = arith.constant 0 : index
    %c0_1 = arith.constant 0 : index
    %0 = vector.load %arg1[%c0, %c0_0, %c0_1] : memref<1x256x4xf32, #tpu.memory_space<vmem>>, vector<1x256x4xf32>
    %cst = arith.constant 0.000000e+00 : f32
    %1 = vector.broadcast %cst : f32 to vector<1x256x4xf32>
    %2 = arith.maximumf %0, %1 : vector<1x256x4xf32>
    %cst_2 = arith.constant dense<0.000000e+00> : vector<1x4xf32>
    %3 = vector.multi_reduction <add>, %2, %cst_2 [1] : vector<1x256x4xf32> to vector<1x4xf32>
    %4 = vector.shape_cast %3 : vector<1x4xf32> to vector<1x1x4xf32>
    %cst_3 = arith.constant 2.560000e+02 : f32
    %5 = vector.broadcast %cst_3 : f32 to vector<1x1x4xf32>
    %6 = arith.divf %4, %5 : vector<1x1x4xf32>
    %7 = vector.broadcast %6 : vector<1x1x4xf32> to vector<1x256x4xf32>
    %8 = arith.subf %2, %7 : vector<1x256x4xf32>
    %9 = arith.mulf %8, %8 : vector<1x256x4xf32>
    %cst_4 = arith.constant dense<0.000000e+00> : vector<1x4xf32>
    %10 = vector.multi_reduction <add>, %9, %cst_4 [1] : vector<1x256x4xf32> to vector<1x4xf32>
    %11 = vector.shape_cast %10 : vector<1x4xf32> to vector<1x1x4xf32>
    %cst_5 = arith.constant 2.560000e+02 : f32
    %12 = vector.broadcast %cst_5 : f32 to vector<1x1x4xf32>
    %13 = arith.divf %11, %12 : vector<1x1x4xf32>
    %14 = vector.broadcast %6 : vector<1x1x4xf32> to vector<1x256x4xf32>
    %15 = arith.subf %2, %14 : vector<1x256x4xf32>
    %cst_6 = arith.constant 9.99999974E-6 : f32
    %16 = vector.broadcast %cst_6 : f32 to vector<1x1x4xf32>
    %17 = arith.addf %13, %16 : vector<1x1x4xf32>
    %18 = math.rsqrt %17 : vector<1x1x4xf32>
    %19 = vector.broadcast %18 : vector<1x1x4xf32> to vector<1x256x4xf32>
    %20 = arith.mulf %15, %19 : vector<1x256x4xf32>
    %c0_7 = arith.constant 0 : index
    %c0_8 = arith.constant 0 : index
    %c0_9 = arith.constant 0 : index
    %21 = vector.load %arg2[%c0_7, %c0_8, %c0_9] : memref<1x256x4xf32, #tpu.memory_space<vmem>>, vector<1x256x4xf32>
    tpu.vector_store %arg2[%c0_7, %c0_8, %c0_9], %20 {strides = array<i32>} : memref<1x256x4xf32, #tpu.memory_space<vmem>>, vector<1x256x4xf32>,
    return
  }
  func.func @transform_0(%arg0: i32) -> (i32, i32, i32) {
    %c0_i32 = arith.constant 0 : i32
    %c0_i32_0 = arith.constant 0 : i32
    %c0_i32_1 = arith.constant 0 : i32
    return %arg0, %c0_i32, %c0_i32_0 : i32, i32, i32
  }
  func.func @transform_1(%arg0: i32) -> (i32, i32, i32) {
    %c0_i32 = arith.constant 0 : i32
    %c0_i32_0 = arith.constant 0 : i32
    %c0_i32_1 = arith.constant 0 : i32
    return %arg0, %c0_i32, %c0_i32_0 : i32, i32, i32
  }
}

module attributes {stable_mosaic.version = 11 : i64} {
  func.func @_att_merge_kernel(%arg0: i32, %arg1: memref<256x4xf32, #tpu.memory_space<vmem>>, %arg2: memref<256x4xf32, #tpu.memory_space<vmem>>, %arg3: memref<256x36xbf16, #tpu.memory_space<vmem>>, %arg4: memref<1x36xf32, #tpu.memory_space<vmem>>, %arg5: memref<1x1xf32, #tpu.memory_space<vmem>>, %arg6: memref<256x4xf32, #tpu.memory_space<vmem>>) attributes {dimension_semantics = [#tpu.dimension_semantics<parallel>], iteration_bounds = array<i64: 2>, scalar_prefetch = 0 : i64, scratch_operands = 0 : i64, tpu.core_type = #tpu.core_type<tc>, window_params = [{transform_indices = @transform_0, window_bounds = array<i64: 256, 4>}, {transform_indices = @transform_1, window_bounds = array<i64: 256, 4>}, {transform_indices = @transform_2, window_bounds = array<i64: 256, 36>}, {pipeline_mode = #tpu.pipeline_mode<synchronous>, transform_indices = @transform_3, window_bounds = array<i64: 1, 36>}, {pipeline_mode = #tpu.pipeline_mode<synchronous>, transform_indices = @transform_4, window_bounds = array<i64: 1, 1>}, {transform_indices = @transform_5, window_bounds = array<i64: 256, 4>}]} {
    %c0 = arith.constant 0 : index
    %c0_0 = arith.constant 0 : index
    %0 = vector.load %arg3[%c0, %c0_0] : memref<256x36xbf16, #tpu.memory_space<vmem>>, vector<256x36xbf16>
    %1 = arith.extf %0 : vector<256x36xbf16> to vector<256x36xf32>
    %c0_1 = arith.constant 0 : index
    %c0_2 = arith.constant 0 : index
    %2 = vector.load %arg4[%c0_1, %c0_2] : memref<1x36xf32, #tpu.memory_space<vmem>>, vector<1x36xf32>
    %3 = vector.broadcast %2 : vector<1x36xf32> to vector<256x36xf32>
    %4 = arith.mulf %1, %3 : vector<256x36xf32>
    %cst = arith.constant dense<0.000000e+00> : vector<256xf32>
    %5 = vector.multi_reduction <add>, %4, %cst [1] : vector<256x36xf32> to vector<256xf32>
    %6 = vector.shape_cast %5 : vector<256xf32> to vector<256x1xf32>
    %c0_3 = arith.constant 0 : index
    %c0_4 = arith.constant 0 : index
    %7 = vector.load %arg5[%c0_3, %c0_4] : memref<1x1xf32, #tpu.memory_space<vmem>>, vector<1x1xf32>
    %8 = vector.broadcast %7 : vector<1x1xf32> to vector<256x1xf32>
    %9 = arith.addf %6, %8 : vector<256x1xf32>
    %10 = arith.negf %9 : vector<256x1xf32>
    %11 = math.exp %10 : vector<256x1xf32>
    %cst_5 = arith.constant 1.000000e+00 : f32
    %12 = vector.broadcast %cst_5 : f32 to vector<256x1xf32>
    %13 = arith.addf %12, %11 : vector<256x1xf32>
    %14 = arith.divf %12, %13 : vector<256x1xf32>
    %c0_6 = arith.constant 0 : index
    %c0_7 = arith.constant 0 : index
    %15 = vector.load %arg1[%c0_6, %c0_7] : memref<256x4xf32, #tpu.memory_space<vmem>>, vector<256x4xf32>
    %c0_8 = arith.constant 0 : index
    %c0_9 = arith.constant 0 : index
    %16 = vector.load %arg2[%c0_8, %c0_9] : memref<256x4xf32, #tpu.memory_space<vmem>>, vector<256x4xf32>
    %17 = vector.broadcast %14 : vector<256x1xf32> to vector<256x4xf32>
    %18 = arith.mulf %16, %17 : vector<256x4xf32>
    %19 = arith.addf %15, %18 : vector<256x4xf32>
    %c0_10 = arith.constant 0 : index
    %c0_11 = arith.constant 0 : index
    %20 = vector.load %arg6[%c0_10, %c0_11] : memref<256x4xf32, #tpu.memory_space<vmem>>, vector<256x4xf32>
    tpu.vector_store %arg6[%c0_10, %c0_11], %19 {strides = array<i32>} : memref<256x4xf32, #tpu.memory_space<vmem>>, vector<256x4xf32>,
    return
  }
  func.func @transform_0(%arg0: i32) -> (i32, i32) {
    %c0_i32 = arith.constant 0 : i32
    %c0_i32_0 = arith.constant 0 : i32
    return %arg0, %c0_i32 : i32, i32
  }
  func.func @transform_1(%arg0: i32) -> (i32, i32) {
    %c0_i32 = arith.constant 0 : i32
    %c0_i32_0 = arith.constant 0 : i32
    return %arg0, %c0_i32 : i32, i32
  }
  func.func @transform_2(%arg0: i32) -> (i32, i32) {
    %c0_i32 = arith.constant 0 : i32
    %c0_i32_0 = arith.constant 0 : i32
    return %arg0, %c0_i32 : i32, i32
  }
  func.func @transform_3(%arg0: i32) -> (i32, i32) {
    %c0_i32 = arith.constant 0 : i32
    %c0_i32_0 = arith.constant 0 : i32
    %c0_i32_1 = arith.constant 0 : i32
    return %c0_i32, %c0_i32_0 : i32, i32
  }
  func.func @transform_4(%arg0: i32) -> (i32, i32) {
    %c0_i32 = arith.constant 0 : i32
    %c0_i32_0 = arith.constant 0 : i32
    %c0_i32_1 = arith.constant 0 : i32
    return %c0_i32, %c0_i32_0 : i32, i32
  }
  func.func @transform_5(%arg0: i32) -> (i32, i32) {
    %c0_i32 = arith.constant 0 : i32
    %c0_i32_0 = arith.constant 0 : i32
    return %arg0, %c0_i32 : i32, i32
  }
}

</mosaic_0001>

<llo_original>
// kernel: residual_block_forward.11
$region0: #{residual_block_forward.11}
  #allocation0 [shape = 'u32[]', space=smem, size = 0x4, offset = 0x4, fixed_abs, tag = 'smem constant byte address 0x4 - core index']
  #allocation1 [shape = 'u32[144,128]{1,0:T(1,128)}', space=vmem, size = 0x12000, scoped, tag = 'internal scratch']
  %s0 = inlined_call_operand.vmem [shape: f32[512,4], index: 0, kind: input, shape index: {}]
  %s1 = inlined_call_operand.vmem [shape: f32[1,4], index: 1, kind: output, shape index: {0}]
  %s2 = inlined_call_operand.vmem [shape: f32[1,4], index: 2, kind: output, shape index: {1}]
  %3 = xla_tuple %s1, %s2
  %s4 = sld [smem:[#allocation0]]
  $region53: #{residual_block_forward.11} parent=0
    _
  %s6 = ssub.s32 1, %s4
  %s7 = scalar_select 0, %s6, %s4
  loop: start=0, step=1, limit=4
  $region2: #{residual_block_forward.11} parent=0 // loop_pre_header
    _
  $region3: #{residual_block_forward.11} parent=0 // loop_header
    %s9 = sphi 0, %s13
    %p10 = scmp.ge.s32.totalorder %s9, 4
    %s19 = sphi 0, %s21
    %s22 = sphi 0, %s19
    %s23 = sphi 0, %s22
    %s39 = sphi 0, %s23
    %s43 = sphi 0, %s43
    %s45 = sphi 0, %s43
    %s46 = sphi 0, %s45
    %s60 = sphi 0, %s46
    %s64 = sphi 0, %s64
    %s66 = sphi 0, %s64
    %s67 = sphi 0, %s66
    %s81 = sphi 0, %s67
  $region4: #{residual_block_forward.11} parent=0 // loop_header_branch
    %12 = sbr.rel (%p10) target = $region8
  $region5: #{residual_block_forward.11} parent=0 // loop_body
    %s14 = ssub.s32 %s9, 1
    %s15 = ssub.s32 %s9, 2
    %s16 = sadd.s32 %s9, 1
    %s17 = ssub.s32 %s9, %s16
    %p18 = scmp.eq.s32.totalorder %s17, 0
    %s20 = sadd.s32 %s19, 1
    %s21 = scalar_select %p18, %s19, %s20
    %p24 = pneg %p18
    %p25 = scmp.eq.s32.totalorder %s9, 1
    %p26 = por %p24, %p25
    %p27 = scmp.ne.s32.totalorder %s19, %s22
    %p28 = scmp.eq.s32.totalorder %s9, 0
    %p29 = por %p27, %p28
    %p30 = scmp.ne.s32.totalorder %s19, %s22
    %p31 = scmp.eq.s32.totalorder %s14, 1
    %p32 = por %p30, %p31
    %p33 = scmp.ne.s32.totalorder %s22, %s23
    %p34 = scmp.eq.s32.totalorder %s14, 0
    %p35 = por %p33, %p34
    %p36 = scmp.ne.s32.totalorder %s22, %s23
    %p37 = scmp.eq.s32.totalorder %s15, 1
    %p38 = por %p36, %p37
    %p40 = scmp.ne.s32.totalorder %s23, %s39
    %p41 = scmp.eq.s32.totalorder %s15, 0
    %p42 = por %p40, %p41
    %s44 = sadd.s32 %s43, 1
    %p47 = scmp.eq.s32.totalorder %s9, 1
    %p48 = scmp.ne.s32.totalorder %s43, %s45
    %p49 = scmp.eq.s32.totalorder %s9, 0
    %p50 = por %p48, %p49
    %p51 = scmp.ne.s32.totalorder %s43, %s45
    %p52 = scmp.eq.s32.totalorder %s14, 1
    %p53 = por %p51, %p52
    %p54 = scmp.ne.s32.totalorder %s45, %s46
    %p55 = scmp.eq.s32.totalorder %s14, 0
    %p56 = por %p54, %p55
    %p57 = scmp.ne.s32.totalorder %s45, %s46
    %p58 = scmp.eq.s32.totalorder %s15, 1
    %p59 = por %p57, %p58
    %p61 = scmp.ne.s32.totalorder %s46, %s60
    %p62 = scmp.eq.s32.totalorder %s15, 0
    %p63 = por %p61, %p62
    %s65 = sadd.s32 %s64, 1
    %p68 = scmp.eq.s32.totalorder %s9, 1
    %p69 = scmp.ne.s32.totalorder %s64, %s66
    %p70 = scmp.eq.s32.totalorder %s9, 0
    %p71 = por %p69, %p70
    %p72 = scmp.ne.s32.totalorder %s64, %s66
    %p73 = scmp.eq.s32.totalorder %s14, 1
    %p74 = por %p72, %p73
    %p75 = scmp.ne.s32.totalorder %s66, %s67
    %p76 = scmp.eq.s32.totalorder %s14, 0
    %p77 = por %p75, %p76
    %p78 = scmp.ne.s32.totalorder %s66, %s67
    %p79 = scmp.eq.s32.totalorder %s15, 1
    %p80 = por %p78, %p79
    %p82 = scmp.ne.s32.totalorder %s67, %s81
    %p83 = scmp.eq.s32.totalorder %s15, 0
    %p84 = por %p82, %p83
    %p85 = scmp.le.s32.totalorder 1, %s9
    %p86 = scmp.lt.s32.totalorder %s9, 3
    %p87 = pnand %p85, %p86
    %p88 = pneg %p87
    // Predicated region
    $region9: #{residual_block_forward.11} parent=5 // pred_check
      _
    $region10: #{residual_block_forward.11} parent=5 // pred_check_branch
      %90 = sbr.rel (%p87) target = $region12
    $region11: #{residual_block_forward.11} parent=5 // pred_region
      %s91 = ssub.s32 %s9, 1
    $region12: #{residual_block_forward.11} parent=5 // pred_fallthru
      _
    %p92 = scmp.lt.s32.totalorder %s9, 2
    // Predicated region
    $region13: #{residual_block_forward.11} parent=5 // pred_check
      %p93 = pneg %p92
    $region14: #{residual_block_forward.11} parent=5 // pred_check_branch
      %95 = sbr.rel (%p93) target = $region16
    $region15: #{residual_block_forward.11} parent=5 // pred_region
      // Predicated region
      $region17: #{residual_block_forward.11} parent=15 // pred_check
        %p96 = pneg %p29
      $region18: #{residual_block_forward.11} parent=15 // pred_check_branch
        %98 = sbr.rel (%p96) target = $region20
      $region19: #{residual_block_forward.11} parent=15 // pred_region
        %s99 = smul.u32 32, %s9
        %p100 = scmp.lt.s32.totalorder %s99, 63
        %s101 = scalar_select %p100, %s99, 63
        %s102 = smul.addr %s101, 8
        %s103 = scalar_lea.vmem %s0, %s102
        %s104 = smul.u32 32, %s9
      $region20: #{residual_block_forward.11} parent=15 // pred_fallthru
        _
    $region16: #{residual_block_forward.11} parent=5 // pred_fallthru
      _
    %p105 = scmp.le.s32.totalorder 1, %s9
    %p106 = scmp.lt.s32.totalorder %s9, 3
    %p107 = pnand %p105, %p106
    %p108 = pneg %p107
    // Predicated region
    $region21: #{residual_block_forward.11} parent=5 // pred_check
      _
    $region22: #{residual_block_forward.11} parent=5 // pred_check_branch
      %110 = sbr.rel (%p107) target = $region24
    $region23: #{residual_block_forward.11} parent=5 // pred_region
      %s111 = ssub.s32 %s9, 1
      %s112 = smul.u32 32, %s14
      %p113 = scmp.lt.s32.totalorder %s112, 63
      %s114 = scalar_select %p113, %s112, 63
      %s115 = smul.addr %s114, 8
      %s116 = scalar_lea.vmem %s0, %s115
      %p117 = pneg %p35
      %p118 = pneg %p32
      %p119 = pneg %p56
      %p120 = pneg %p53
      %p121 = pneg %p77
      %p122 = pneg %p74
      %s123 = smul.u32 32, %s14
      %p124 = scmp.lt.s32.totalorder %s123, 63
      %s125 = scalar_select %p124, %s123, 63
      %s126 = smul.addr %s125, 8
      %s127 = scalar_lea.vmem %s0, %s126
      %s128 = smul.u32 32, %s14
      %p129 = scmp.eq.s32.totalorder %s14, 0
      // Predicated region
      $region25: #{residual_block_forward.11} parent=23 // pred_check
        %p130 = pneg %p129
      $region26: #{residual_block_forward.11} parent=23 // pred_check_branch
        %132 = sbr.rel (%p130) target = $region28
      $region27: #{residual_block_forward.11} parent=23 // pred_region
        %vm133 = vcmask 24576
        %134 = vst.msk [vmem:[%s1] sm:$0x1] %vm133, 0.0
        %135 = vst.msk [vmem:[%s2] sm:$0x1] %vm133, 0.0
      $region28: #{residual_block_forward.11} parent=23 // pred_fallthru
        _
      %v136 = vld [vmem:[%s127] sm:$0xff]
      %v137 = vld [vmem:[%s127 + $0x8] sm:$0xff]
      %v138 = vld [vmem:[%s127 + $0x10] sm:$0xff]
      %v139 = vld [vmem:[%s127 + $0x18] sm:$0xff]
      %v140 = vld [vmem:[%s127 + $0x20] sm:$0xff]
      %v141 = vld [vmem:[%s127 + $0x28] sm:$0xff]
      %v142 = vld [vmem:[%s127 + $0x30] sm:$0xff]
      %v143 = vld [vmem:[%s127 + $0x38] sm:$0xff]
      %v144 = vld [vmem:[%s127 + $0x40] sm:$0xff]
      %v145 = vld [vmem:[%s127 + $0x48] sm:$0xff]
      %v146 = vld [vmem:[%s127 + $0x50] sm:$0xff]
      %v147 = vld [vmem:[%s127 + $0x58] sm:$0xff]
      %v148 = vld [vmem:[%s127 + $0x60] sm:$0xff]
      %v149 = vld [vmem:[%s127 + $0x68] sm:$0xff]
      %v150 = vld [vmem:[%s127 + $0x70] sm:$0xff]
      %v151 = vld [vmem:[%s127 + $0x78] sm:$0xff]
      %v152 = vld [vmem:[%s127 + $0x80] sm:$0xff]
      %v153 = vld [vmem:[%s127 + $0x88] sm:$0xff]
      %v154 = vld [vmem:[%s127 + $0x90] sm:$0xff]
      %v155 = vld [vmem:[%s127 + $0x98] sm:$0xff]
      %v156 = vld [vmem:[%s127 + $0xa0] sm:$0xff]
      %v157 = vld [vmem:[%s127 + $0xa8] sm:$0xff]
      %v158 = vld [vmem:[%s127 + $0xb0] sm:$0xff]
      %v159 = vld [vmem:[%s127 + $0xb8] sm:$0xff]
      %v160 = vld [vmem:[%s127 + $0xc0] sm:$0xff]
      %v161 = vld [vmem:[%s127 + $0xc8] sm:$0xff]
      %v162 = vld [vmem:[%s127 + $0xd0] sm:$0xff]
      %v163 = vld [vmem:[%s127 + $0xd8] sm:$0xff]
      %v164 = vld [vmem:[%s127 + $0xe0] sm:$0xff]
      %v165 = vld [vmem:[%s127 + $0xe8] sm:$0xff]
      %v166 = vld [vmem:[%s127 + $0xf0] sm:$0xff]
      %v167 = vld [vmem:[%s127 + $0xf8] sm:$0xff]
      %v168 = vld [vmem:[%s1] sm:$0x1]
      %vm169 = vcmask 31744
      %v170 = vsel %vm169, %v136, 0.0
      %v171 = vsel %vm169, %v137, 0.0
      %v172 = vadd.f32 %v170, %v171
      %v173 = vsel %vm169, %v138, 0.0
      %v174 = vadd.f32 %v172, %v173
      %v175 = vsel %vm169, %v139, 0.0
      %v176 = vadd.f32 %v174, %v175
      %v177 = vsel %vm169, %v140, 0.0
      %v178 = vadd.f32 %v176, %v177
      %v179 = vsel %vm169, %v141, 0.0
      %v180 = vadd.f32 %v178, %v179
      %v181 = vsel %vm169, %v142, 0.0
      %v182 = vadd.f32 %v180, %v181
      %v183 = vsel %vm169, %v143, 0.0
      %v184 = vadd.f32 %v182, %v183
      %v185 = vsel %vm169, %v144, 0.0
      %v186 = vadd.f32 %v184, %v185
      %v187 = vsel %vm169, %v145, 0.0
      %v188 = vadd.f32 %v186, %v187
      %v189 = vsel %vm169, %v146, 0.0
      %v190 = vadd.f32 %v188, %v189
      %v191 = vsel %vm169, %v147, 0.0
      %v192 = vadd.f32 %v190, %v191
      %v193 = vsel %vm169, %v148, 0.0
      %v194 = vadd.f32 %v192, %v193
      %v195 = vsel %vm169, %v149, 0.0
      %v196 = vadd.f32 %v194, %v195
      %v197 = vsel %vm169, %v150, 0.0
      %v198 = vadd.f32 %v196, %v197
      %v199 = vsel %vm169, %v151, 0.0
      %v200 = vadd.f32 %v198, %v199
      %v201 = vsel %vm169, %v152, 0.0
      %v202 = vadd.f32 %v200, %v201
      %v203 = vsel %vm169, %v153, 0.0
      %v204 = vadd.f32 %v202, %v203
      %v205 = vsel %vm169, %v154, 0.0
      %v206 = vadd.f32 %v204, %v205
      %v207 = vsel %vm169, %v155, 0.0
      %v208 = vadd.f32 %v206, %v207
      %v209 = vsel %vm169, %v156, 0.0
      %v210 = vadd.f32 %v208, %v209
      %v211 = vsel %vm169, %v157, 0.0
      %v212 = vadd.f32 %v210, %v211
      %v213 = vsel %vm169, %v158, 0.0
      %v214 = vadd.f32 %v212, %v213
      %v215 = vsel %vm169, %v159, 0.0
      %v216 = vadd.f32 %v214, %v215
      %v217 = vsel %vm169, %v160, 0.0
      %v218 = vadd.f32 %v216, %v217
      %v219 = vsel %vm169, %v161, 0.0
      %v220 = vadd.f32 %v218, %v219
      %v221 = vsel %vm169, %v162, 0.0
      %v222 = vadd.f32 %v220, %v221
      %v223 = vsel %vm169, %v163, 0.0
      %v224 = vadd.f32 %v222, %v223
      %v225 = vsel %vm169, %v164, 0.0
      %v226 = vadd.f32 %v224, %v225
      %v227 = vsel %vm169, %v165, 0.0
      %v228 = vadd.f32 %v226, %v227
      %v229 = vsel %vm169, %v166, 0.0
      %v230 = vadd.f32 %v228, %v229
      %v231 = vsel %vm169, %v167, 0.0
      %v232 = vadd.f32 %v230, %v231
      %v233 = vrot.slane %v232, 4
      %v234 = vadd.f32 %v232, %v233
      %v235 = vrot.slane %v234, 2
      %v236 = vadd.f32 %v234, %v235
      %v237 = vrot.slane %v236, 1
      %v238 = vadd.f32 %v236, %v237
      %v239 = vadd.f32 %v168, %v238
      %vm240 = vcmask 24576
      %241 = vst.msk [vmem:[%s1] sm:$0x1] %vm240, %v239
      %v242 = vld [vmem:[%s2] sm:$0x1]
      %v243 = vmul.f32 %v136, %v136
      %v244 = vmul.f32 %v137, %v137
      %v245 = vmul.f32 %v138, %v138
      %v246 = vmul.f32 %v139, %v139
      %v247 = vmul.f32 %v140, %v140
      %v248 = vmul.f32 %v141, %v141
      %v249 = vmul.f32 %v142, %v142
      %v250 = vmul.f32 %v143, %v143
      %v251 = vmul.f32 %v144, %v144
      %v252 = vmul.f32 %v145, %v145
      %v253 = vmul.f32 %v146, %v146
      %v254 = vmul.f32 %v147, %v147
      %v255 = vmul.f32 %v148, %v148
      %v256 = vmul.f32 %v149, %v149
      %v257 = vmul.f32 %v150, %v150
      %v258 = vmul.f32 %v151, %v151
      %v259 = vmul.f32 %v152, %v152
      %v260 = vmul.f32 %v153, %v153
      %v261 = vmul.f32 %v154, %v154
      %v262 = vmul.f32 %v155, %v155
      %v263 = vmul.f32 %v156, %v156
      %v264 = vmul.f32 %v157, %v157
      %v265 = vmul.f32 %v158, %v158
      %v266 = vmul.f32 %v159, %v159
      %v267 = vmul.f32 %v160, %v160
      %v268 = vmul.f32 %v161, %v161
      %v269 = vmul.f32 %v162, %v162
      %v270 = vmul.f32 %v163, %v163
      %v271 = vmul.f32 %v164, %v164
      %v272 = vmul.f32 %v165, %v165
      %v273 = vmul.f32 %v166, %v166
      %v274 = vmul.f32 %v167, %v167
      %v275 = vsel %vm169, %v243, 0.0
      %v276 = vsel %vm169, %v244, 0.0
      %v277 = vadd.f32 %v275, %v276
      %v278 = vsel %vm169, %v245, 0.0
      %v279 = vadd.f32 %v277, %v278
      %v280 = vsel %vm169, %v246, 0.0
      %v281 = vadd.f32 %v279, %v280
      %v282 = vsel %vm169, %v247, 0.0
      %v283 = vadd.f32 %v281, %v282
      %v284 = vsel %vm169, %v248, 0.0
      %v285 = vadd.f32 %v283, %v284
      %v286 = vsel %vm169, %v249, 0.0
      %v287 = vadd.f32 %v285, %v286
      %v288 = vsel %vm169, %v250, 0.0
      %v289 = vadd.f32 %v287, %v288
      %v290 = vsel %vm169, %v251, 0.0
      %v291 = vadd.f32 %v289, %v290
      %v292 = vsel %vm169, %v252, 0.0
      %v293 = vadd.f32 %v291, %v292
      %v294 = vsel %vm169, %v253, 0.0
      %v295 = vadd.f32 %v293, %v294
      %v296 = vsel %vm169, %v254, 0.0
      %v297 = vadd.f32 %v295, %v296
      %v298 = vsel %vm169, %v255, 0.0
      %v299 = vadd.f32 %v297, %v298
      %v300 = vsel %vm169, %v256, 0.0
      %v301 = vadd.f32 %v299, %v300
      %v302 = vsel %vm169, %v257, 0.0
      %v303 = vadd.f32 %v301, %v302
      %v304 = vsel %vm169, %v258, 0.0
      %v305 = vadd.f32 %v303, %v304
      %v306 = vsel %vm169, %v259, 0.0
      %v307 = vadd.f32 %v305, %v306
      %v308 = vsel %vm169, %v260, 0.0
      %v309 = vadd.f32 %v307, %v308
      %v310 = vsel %vm169, %v261, 0.0
      %v311 = vadd.f32 %v309, %v310
      %v312 = vsel %vm169, %v262, 0.0
      %v313 = vadd.f32 %v311, %v312
      %v314 = vsel %vm169, %v263, 0.0
      %v315 = vadd.f32 %v313, %v314
      %v316 = vsel %vm169, %v264, 0.0
      %v317 = vadd.f32 %v315, %v316
      %v318 = vsel %vm169, %v265, 0.0
      %v319 = vadd.f32 %v317, %v318
      %v320 = vsel %vm169, %v266, 0.0
      %v321 = vadd.f32 %v319, %v320
      %v322 = vsel %vm169, %v267, 0.0
      %v323 = vadd.f32 %v321, %v322
      %v324 = vsel %vm169, %v268, 0.0
      %v325 = vadd.f32 %v323, %v324
      %v326 = vsel %vm169, %v269, 0.0
      %v327 = vadd.f32 %v325, %v326
      %v328 = vsel %vm169, %v270, 0.0
      %v329 = vadd.f32 %v327, %v328
      %v330 = vsel %vm169, %v271, 0.0
      %v331 = vadd.f32 %v329, %v330
      %v332 = vsel %vm169, %v272, 0.0
      %v333 = vadd.f32 %v331, %v332
      %v334 = vsel %vm169, %v273, 0.0
      %v335 = vadd.f32 %v333, %v334
      %v336 = vsel %vm169, %v274, 0.0
      %v337 = vadd.f32 %v335, %v336
      %v338 = vrot.slane %v337, 4
      %v339 = vadd.f32 %v337, %v338
      %v340 = vrot.slane %v339, 2
      %v341 = vadd.f32 %v339, %v340
      %v342 = vrot.slane %v341, 1
      %v343 = vadd.f32 %v341, %v342
      %v344 = vadd.f32 %v242, %v343
      %345 = vst.msk [vmem:[%s2] sm:$0x1] %vm240, %v344
      %p346 = scmp.eq.s32.totalorder %s14, 1
      // Predicated region
      $region29: #{residual_block_forward.11} parent=23 // pred_check
        %p347 = pneg %p346
      $region30: #{residual_block_forward.11} parent=23 // pred_check_branch
        %349 = sbr.rel (%p347) target = $region32
      $region31: #{residual_block_forward.11} parent=23 // pred_region
        %v350 = vld [vmem:[%s1] sm:$0x1]
        %v351 = vmul.f32 %v350, 0.001953125
        %v352 = vld [vmem:[%s2] sm:$0x1]
        %v353 = vmul.f32 %v352, 0.001953125
        %v354 = vmul.f32 %v351, %v351
        %v355 = vsub.f32 %v353, %v354
        %356 = vst.msk [vmem:[%s1] sm:$0x1] %vm240, %v351
        %357 = vst.msk [vmem:[%s2] sm:$0x1] %vm240, %v355
      $region32: #{residual_block_forward.11} parent=23 // pred_fallthru
        _
      // Predicated region
      $region33: #{residual_block_forward.11} parent=23 // pred_check
        %p358 = pneg %p53
      $region34: #{residual_block_forward.11} parent=23 // pred_check_branch
        %360 = sbr.rel (%p358) target = $region36
      $region35: #{residual_block_forward.11} parent=23 // pred_region
        _
      $region36: #{residual_block_forward.11} parent=23 // pred_fallthru
        _
      // Predicated region
      $region37: #{residual_block_forward.11} parent=23 // pred_check
        %p361 = pneg %p74
      $region38: #{residual_block_forward.11} parent=23 // pred_check_branch
        %363 = sbr.rel (%p361) target = $region40
      $region39: #{residual_block_forward.11} parent=23 // pred_region
        _
      $region40: #{residual_block_forward.11} parent=23 // pred_fallthru
        _
      // Predicated region
      $region41: #{residual_block_forward.11} parent=23 // pred_check
        %p364 = pneg %p53
      $region42: #{residual_block_forward.11} parent=23 // pred_check_branch
        %366 = sbr.rel (%p364) target = $region44
      $region43: #{residual_block_forward.11} parent=23 // pred_region
        _
      $region44: #{residual_block_forward.11} parent=23 // pred_fallthru
        _
      // Predicated region
      $region45: #{residual_block_forward.11} parent=23 // pred_check
        %p367 = pneg %p74
      $region46: #{residual_block_forward.11} parent=23 // pred_check_branch
        %369 = sbr.rel (%p367) target = $region48
      $region47: #{residual_block_forward.11} parent=23 // pred_region
        _
      $region48: #{residual_block_forward.11} parent=23 // pred_fallthru
        _
    $region24: #{residual_block_forward.11} parent=5 // pred_fallthru
      _
    %p370 = scmp.le.s32.totalorder 2, %s9
    // Predicated region
    $region49: #{residual_block_forward.11} parent=5 // pred_check
      %p371 = pneg %p370
    $region50: #{residual_block_forward.11} parent=5 // pred_check_branch
      %373 = sbr.rel (%p371) target = $region52
    $region51: #{residual_block_forward.11} parent=5 // pred_region
      %s374 = ssub.s32 %s9, 2
    $region52: #{residual_block_forward.11} parent=5 // pred_fallthru
      _
  $region6: #{residual_block_forward.11} parent=0 // loop_footer
    %s13 = sadd.s32 1, %s9
  $region7: #{residual_block_forward.11} parent=0 // loop_footer_branch
    %8 = sbr.rel target = $region3
  $region8: #{residual_block_forward.11} parent=0 // loop_exit
    _

// kernel: residual_block_forward.12
$region0: #{residual_block_forward.12}
  #allocation0 [shape = 'u32[]', space=smem, size = 0x4, offset = 0x4, fixed_abs, tag = 'smem constant byte address 0x4 - core index']
  #allocation1 [shape = 'u32[144,128]{1,0:T(1,128)}', space=vmem, size = 0x12000, scoped, tag = 'internal scratch']
  %s0 = inlined_call_operand.vmem [shape: f32[512,4], index: 0, kind: input, shape index: {}]
  %s1 = inlined_call_operand.vmem [shape: f32[1,4], index: 1, kind: input, shape index: {}]
  %s2 = inlined_call_operand.vmem [shape: f32[1,4], index: 2, kind: input, shape index: {}]
  %s3 = inlined_call_operand.vmem [shape: f32[1,4], index: 3, kind: input, shape index: {}]
  %s4 = inlined_call_operand.vmem [shape: f32[1,4], index: 4, kind: input, shape index: {}]
  %s5 = inlined_call_operand.vmem [shape: f32[1,4], index: 5, kind: input, shape index: {}]
  %s6 = inlined_call_operand.vmem [shape: f32[512,4], index: 6, kind: output, shape index: {}]
  %s7 = sld [smem:[#allocation0]]
  $region57: #{residual_block_forward.12} parent=0
    _
  %s9 = ssub.s32 1, %s7
  %s10 = scalar_select 0, %s9, %s7
  loop: start=0, step=1, limit=4
  $region2: #{residual_block_forward.12} parent=0 // loop_pre_header
    _
  $region3: #{residual_block_forward.12} parent=0 // loop_header
    %s12 = sphi 0, %s16
    %p13 = scmp.ge.s32.totalorder %s12, 4
    %s22 = sphi 0, %s24
    %s25 = sphi 0, %s22
    %s26 = sphi 0, %s25
    %s42 = sphi 0, %s26
    %s46 = sphi 0, %s46
    %s48 = sphi 0, %s46
    %s49 = sphi 0, %s48
    %s63 = sphi 0, %s49
    %s67 = sphi 0, %s67
    %s69 = sphi 0, %s67
    %s70 = sphi 0, %s69
    %s84 = sphi 0, %s70
    %s88 = sphi 0, %s88
    %s90 = sphi 0, %s88
    %s91 = sphi 0, %s90
    %s105 = sphi 0, %s91
    %s109 = sphi 0, %s109
    %s111 = sphi 0, %s109
    %s112 = sphi 0, %s111
    %s126 = sphi 0, %s112
    %s130 = sphi 0, %s130
    %s132 = sphi 0, %s130
    %s133 = sphi 0, %s132
    %s147 = sphi 0, %s133
    %s153 = sphi 0, %s155
    %s156 = sphi 0, %s153
    %s157 = sphi 0, %s156
    %s173 = sphi 0, %s157
  $region4: #{residual_block_forward.12} parent=0 // loop_header_branch
    %15 = sbr.rel (%p13) target = $region8
  $region5: #{residual_block_forward.12} parent=0 // loop_body
    %s17 = ssub.s32 %s12, 1
    %s18 = ssub.s32 %s12, 2
    %s19 = sadd.s32 %s12, 1
    %s20 = ssub.s32 %s12, %s19
    %p21 = scmp.eq.s32.totalorder %s20, 0
    %s23 = sadd.s32 %s22, 1
    %s24 = scalar_select %p21, %s22, %s23
    %p27 = pneg %p21
    %p28 = scmp.eq.s32.totalorder %s12, 1
    %p29 = por %p27, %p28
    %p30 = scmp.ne.s32.totalorder %s22, %s25
    %p31 = scmp.eq.s32.totalorder %s12, 0
    %p32 = por %p30, %p31
    %p33 = scmp.ne.s32.totalorder %s22, %s25
    %p34 = scmp.eq.s32.totalorder %s17, 1
    %p35 = por %p33, %p34
    %p36 = scmp.ne.s32.totalorder %s25, %s26
    %p37 = scmp.eq.s32.totalorder %s17, 0
    %p38 = por %p36, %p37
    %p39 = scmp.ne.s32.totalorder %s25, %s26
    %p40 = scmp.eq.s32.totalorder %s18, 1
    %p41 = por %p39, %p40
    %p43 = scmp.ne.s32.totalorder %s26, %s42
    %p44 = scmp.eq.s32.totalorder %s18, 0
    %p45 = por %p43, %p44
    %s47 = sadd.s32 %s46, 1
    %p50 = scmp.eq.s32.totalorder %s12, 1
    %p51 = scmp.ne.s32.totalorder %s46, %s48
    %p52 = scmp.eq.s32.totalorder %s12, 0
    %p53 = por %p51, %p52
    %p54 = scmp.ne.s32.totalorder %s46, %s48
    %p55 = scmp.eq.s32.totalorder %s17, 1
    %p56 = por %p54, %p55
    %p57 = scmp.ne.s32.totalorder %s48, %s49
    %p58 = scmp.eq.s32.totalorder %s17, 0
    %p59 = por %p57, %p58
    %p60 = scmp.ne.s32.totalorder %s48, %s49
    %p61 = scmp.eq.s32.totalorder %s18, 1
    %p62 = por %p60, %p61
    %p64 = scmp.ne.s32.totalorder %s49, %s63
    %p65 = scmp.eq.s32.totalorder %s18, 0
    %p66 = por %p64, %p65
    %s68 = sadd.s32 %s67, 1
    %p71 = scmp.eq.s32.totalorder %s12, 1
    %p72 = scmp.ne.s32.totalorder %s67, %s69
    %p73 = scmp.eq.s32.totalorder %s12, 0
    %p74 = por %p72, %p73
    %p75 = scmp.ne.s32.totalorder %s67, %s69
    %p76 = scmp.eq.s32.totalorder %s17, 1
    %p77 = por %p75, %p76
    %p78 = scmp.ne.s32.totalorder %s69, %s70
    %p79 = scmp.eq.s32.totalorder %s17, 0
    %p80 = por %p78, %p79
    %p81 = scmp.ne.s32.totalorder %s69, %s70
    %p82 = scmp.eq.s32.totalorder %s18, 1
    %p83 = por %p81, %p82
    %p85 = scmp.ne.s32.totalorder %s70, %s84
    %p86 = scmp.eq.s32.totalorder %s18, 0
    %p87 = por %p85, %p86
    %s89 = sadd.s32 %s88, 1
    %p92 = scmp.eq.s32.totalorder %s12, 1
    %p93 = scmp.ne.s32.totalorder %s88, %s90
    %p94 = scmp.eq.s32.totalorder %s12, 0
    %p95 = por %p93, %p94
    %p96 = scmp.ne.s32.totalorder %s88, %s90
    %p97 = scmp.eq.s32.totalorder %s17, 1
    %p98 = por %p96, %p97
    %p99 = scmp.ne.s32.totalorder %s90, %s91
    %p100 = scmp.eq.s32.totalorder %s17, 0
    %p101 = por %p99, %p100
    %p102 = scmp.ne.s32.totalorder %s90, %s91
    %p103 = scmp.eq.s32.totalorder %s18, 1
    %p104 = por %p102, %p103
    %p106 = scmp.ne.s32.totalorder %s91, %s105
    %p107 = scmp.eq.s32.totalorder %s18, 0
    %p108 = por %p106, %p107
    %s110 = sadd.s32 %s109, 1
    %p113 = scmp.eq.s32.totalorder %s12, 1
    %p114 = scmp.ne.s32.totalorder %s109, %s111
    %p115 = scmp.eq.s32.totalorder %s12, 0
    %p116 = por %p114, %p115
    %p117 = scmp.ne.s32.totalorder %s109, %s111
    %p118 = scmp.eq.s32.totalorder %s17, 1
    %p119 = por %p117, %p118
    %p120 = scmp.ne.s32.totalorder %s111, %s112
    %p121 = scmp.eq.s32.totalorder %s17, 0
    %p122 = por %p120, %p121
    %p123 = scmp.ne.s32.totalorder %s111, %s112
    %p124 = scmp.eq.s32.totalorder %s18, 1
    %p125 = por %p123, %p124
    %p127 = scmp.ne.s32.totalorder %s112, %s126
    %p128 = scmp.eq.s32.totalorder %s18, 0
    %p129 = por %p127, %p128
    %s131 = sadd.s32 %s130, 1
    %p134 = scmp.eq.s32.totalorder %s12, 1
    %p135 = scmp.ne.s32.totalorder %s130, %s132
    %p136 = scmp.eq.s32.totalorder %s12, 0
    %p137 = por %p135, %p136
    %p138 = scmp.ne.s32.totalorder %s130, %s132
    %p139 = scmp.eq.s32.totalorder %s17, 1
    %p140 = por %p138, %p139
    %p141 = scmp.ne.s32.totalorder %s132, %s133
    %p142 = scmp.eq.s32.totalorder %s17, 0
    %p143 = por %p141, %p142
    %p144 = scmp.ne.s32.totalorder %s132, %s133
    %p145 = scmp.eq.s32.totalorder %s18, 1
    %p146 = por %p144, %p145
    %p148 = scmp.ne.s32.totalorder %s133, %s147
    %p149 = scmp.eq.s32.totalorder %s18, 0
    %p150 = por %p148, %p149
    %s151 = ssub.s32 %s12, %s19
    %p152 = scmp.eq.s32.totalorder %s151, 0
    %s154 = sadd.s32 %s153, 1
    %s155 = scalar_select %p152, %s153, %s154
    %p158 = pneg %p152
    %p159 = scmp.eq.s32.totalorder %s12, 1
    %p160 = por %p158, %p159
    %p161 = scmp.ne.s32.totalorder %s153, %s156
    %p162 = scmp.eq.s32.totalorder %s12, 0
    %p163 = por %p161, %p162
    %p164 = scmp.ne.s32.totalorder %s153, %s156
    %p165 = scmp.eq.s32.totalorder %s17, 1
    %p166 = por %p164, %p165
    %p167 = scmp.ne.s32.totalorder %s156, %s157
    %p168 = scmp.eq.s32.totalorder %s17, 0
    %p169 = por %p167, %p168
    %p170 = scmp.ne.s32.totalorder %s156, %s157
    %p171 = scmp.eq.s32.totalorder %s18, 1
    %p172 = por %p170, %p171
    %p174 = scmp.ne.s32.totalorder %s157, %s173
    %p175 = scmp.eq.s32.totalorder %s18, 0
    %p176 = por %p174, %p175
    %p177 = scmp.le.s32.totalorder 1, %s12
    %p178 = scmp.lt.s32.totalorder %s12, 3
    %p179 = pnand %p177, %p178
    %p180 = pneg %p179
    // Predicated region
    $region9: #{residual_block_forward.12} parent=5 // pred_check
      _
    $region10: #{residual_block_forward.12} parent=5 // pred_check_branch
      %182 = sbr.rel (%p179) target = $region12
    $region11: #{residual_block_forward.12} parent=5 // pred_region
      %s183 = ssub.s32 %s12, 1
      // Predicated region
      $region13: #{residual_block_forward.12} parent=11 // pred_check
        %p184 = pneg %p59
      $region14: #{residual_block_forward.12} parent=11 // pred_check_branch
        %186 = sbr.rel (%p184) target = $region16
      $region15: #{residual_block_forward.12} parent=11 // pred_region
        _
      $region16: #{residual_block_forward.12} parent=11 // pred_fallthru
        _
      // Predicated region
      $region17: #{residual_block_forward.12} parent=11 // pred_check
        %p187 = pneg %p80
      $region18: #{residual_block_forward.12} parent=11 // pred_check_branch
        %189 = sbr.rel (%p187) target = $region20
      $region19: #{residual_block_forward.12} parent=11 // pred_region
        _
      $region20: #{residual_block_forward.12} parent=11 // pred_fallthru
        _
      // Predicated region
      $region21: #{residual_block_forward.12} parent=11 // pred_check
        %p190 = pneg %p101
      $region22: #{residual_block_forward.12} parent=11 // pred_check_branch
        %192 = sbr.rel (%p190) target = $region24
      $region23: #{residual_block_forward.12} parent=11 // pred_region
        _
      $region24: #{residual_block_forward.12} parent=11 // pred_fallthru
        _
      // Predicated region
      $region25: #{residual_block_forward.12} parent=11 // pred_check
        %p193 = pneg %p122
      $region26: #{residual_block_forward.12} parent=11 // pred_check_branch
        %195 = sbr.rel (%p193) target = $region28
      $region27: #{residual_block_forward.12} parent=11 // pred_region
        _
      $region28: #{residual_block_forward.12} parent=11 // pred_fallthru
        _
      // Predicated region
      $region29: #{residual_block_forward.12} parent=11 // pred_check
        %p196 = pneg %p143
      $region30: #{residual_block_forward.12} parent=11 // pred_check_branch
        %198 = sbr.rel (%p196) target = $region32
      $region31: #{residual_block_forward.12} parent=11 // pred_region
        _
      $region32: #{residual_block_forward.12} parent=11 // pred_fallthru
        _
    $region12: #{residual_block_forward.12} parent=5 // pred_fallthru
      _
    %p199 = scmp.lt.s32.totalorder %s12, 2
    // Predicated region
    $region33: #{residual_block_forward.12} parent=5 // pred_check
      %p200 = pneg %p199
    $region34: #{residual_block_forward.12} parent=5 // pred_check_branch
      %202 = sbr.rel (%p200) target = $region36
    $region35: #{residual_block_forward.12} parent=5 // pred_region
      // Predicated region
      $region37: #{residual_block_forward.12} parent=35 // pred_check
        %p203 = pneg %p32
      $region38: #{residual_block_forward.12} parent=35 // pred_check_branch
        %205 = sbr.rel (%p203) target = $region40
      $region39: #{residual_block_forward.12} parent=35 // pred_region
        %s206 = smul.u32 32, %s12
        %p207 = scmp.lt.s32.totalorder %s206, 63
        %s208 = scalar_select %p207, %s206, 63
        %s209 = smul.addr %s208, 8
        %s210 = scalar_lea.vmem %s0, %s209
        %s211 = smul.u32 32, %s12
      $region40: #{residual_block_forward.12} parent=35 // pred_fallthru
        _
    $region36: #{residual_block_forward.12} parent=5 // pred_fallthru
      _
    %p212 = scmp.le.s32.totalorder 1, %s12
    %p213 = scmp.lt.s32.totalorder %s12, 3
    %p214 = pnand %p212, %p213
    %p215 = pneg %p214
    // Predicated region
    $region41: #{residual_block_forward.12} parent=5 // pred_check
      _
    $region42: #{residual_block_forward.12} parent=5 // pred_check_branch
      %217 = sbr.rel (%p214) target = $region44
    $region43: #{residual_block_forward.12} parent=5 // pred_region
      %s218 = ssub.s32 %s12, 1
      %s219 = smul.u32 32, %s17
      %p220 = scmp.lt.s32.totalorder %s219, 63
      %s221 = scalar_select %p220, %s219, 63
      %s222 = smul.addr %s221, 8
      %s223 = scalar_lea.vmem %s0, %s222
      %p224 = pneg %p38
      %p225 = pneg %p35
      %p226 = pneg %p59
      %p227 = pneg %p56
      %p228 = pneg %p80
      %p229 = pneg %p77
      %p230 = pneg %p101
      %p231 = pneg %p98
      %p232 = pneg %p122
      %p233 = pneg %p119
      %p234 = pneg %p143
      %p235 = pneg %p140
      %p236 = pneg %p169
      %p237 = pneg %p166
      %s238 = smul.u32 32, %s17
      %p239 = scmp.lt.s32.totalorder %s238, 63
      %s240 = scalar_select %p239, %s238, 63
      %s241 = smul.addr %s240, 8
      %s242 = scalar_lea.vmem %s6, %s241
      %s243 = smul.u32 32, %s17
      %p244 = scmp.lt.s32.totalorder %s243, 63
      %s245 = scalar_select %p244, %s243, 63
      %s246 = smul.addr %s245, 8
      %s247 = scalar_lea.vmem %s0, %s246
      %s248 = smul.u32 32, %s17
      %s249 = smul.u32 32, %s17
      %p250 = scmp.lt.s32.totalorder %s249, 63
      %s251 = scalar_select %p250, %s249, 63
      %s252 = smul.addr %s251, 8
      %s253 = scalar_lea.vmem %s6, %s252
      %s254 = smul.u32 32, %s17
      %v255 = vld [vmem:[%s247] sm:$0xff]
      %v256 = vld [vmem:[%s247 + $0x8] sm:$0xff]
      %v257 = vld [vmem:[%s247 + $0x10] sm:$0xff]
      %v258 = vld [vmem:[%s247 + $0x18] sm:$0xff]
      %v259 = vld [vmem:[%s247 + $0x20] sm:$0xff]
      %v260 = vld [vmem:[%s247 + $0x28] sm:$0xff]
      %v261 = vld [vmem:[%s247 + $0x30] sm:$0xff]
      %v262 = vld [vmem:[%s247 + $0x38] sm:$0xff]
      %v263 = vld [vmem:[%s247 + $0x40] sm:$0xff]
      %v264 = vld [vmem:[%s247 + $0x48] sm:$0xff]
      %v265 = vld [vmem:[%s247 + $0x50] sm:$0xff]
      %v266 = vld [vmem:[%s247 + $0x58] sm:$0xff]
      %v267 = vld [vmem:[%s247 + $0x60] sm:$0xff]
      %v268 = vld [vmem:[%s247 + $0x68] sm:$0xff]
      %v269 = vld [vmem:[%s247 + $0x70] sm:$0xff]
      %v270 = vld [vmem:[%s247 + $0x78] sm:$0xff]
      %v271 = vld [vmem:[%s247 + $0x80] sm:$0xff]
      %v272 = vld [vmem:[%s247 + $0x88] sm:$0xff]
      %v273 = vld [vmem:[%s247 + $0x90] sm:$0xff]
      %v274 = vld [vmem:[%s247 + $0x98] sm:$0xff]
      %v275 = vld [vmem:[%s247 + $0xa0] sm:$0xff]
      %v276 = vld [vmem:[%s247 + $0xa8] sm:$0xff]
      %v277 = vld [vmem:[%s247 + $0xb0] sm:$0xff]
      %v278 = vld [vmem:[%s247 + $0xb8] sm:$0xff]
      %v279 = vld [vmem:[%s247 + $0xc0] sm:$0xff]
      %v280 = vld [vmem:[%s247 + $0xc8] sm:$0xff]
      %v281 = vld [vmem:[%s247 + $0xd0] sm:$0xff]
      %v282 = vld [vmem:[%s247 + $0xd8] sm:$0xff]
      %v283 = vld [vmem:[%s247 + $0xe0] sm:$0xff]
      %v284 = vld [vmem:[%s247 + $0xe8] sm:$0xff]
      %v285 = vld [vmem:[%s247 + $0xf0] sm:$0xff]
      %v286 = vld [vmem:[%s247 + $0xf8] sm:$0xff]
      %v287 = vld [vmem:[%s1] sm:$0x1]
      %v289 = vlaneseq
      %v290 = vshrl.u32 %v289, 7
      %v291 = vsub.s32 0, %v290
      %v292 = vrot.slane %v287, %v291
      %v294 = vsub.f32 %v255, %v292
      %v295 = vsub.f32 %v256, %v292
      %v296 = vsub.f32 %v257, %v292
      %v297 = vsub.f32 %v258, %v292
      %v298 = vsub.f32 %v259, %v292
      %v299 = vsub.f32 %v260, %v292
      %v300 = vsub.f32 %v261, %v292
      %v301 = vsub.f32 %v262, %v292
      %v302 = vsub.f32 %v263, %v292
      %v303 = vsub.f32 %v264, %v292
      %v304 = vsub.f32 %v265, %v292
      %v305 = vsub.f32 %v266, %v292
      %v306 = vsub.f32 %v267, %v292
      %v307 = vsub.f32 %v268, %v292
      %v308 = vsub.f32 %v269, %v292
      %v309 = vsub.f32 %v270, %v292
      %v310 = vsub.f32 %v271, %v292
      %v311 = vsub.f32 %v272, %v292
      %v312 = vsub.f32 %v273, %v292
      %v313 = vsub.f32 %v274, %v292
      %v314 = vsub.f32 %v275, %v292
      %v315 = vsub.f32 %v276, %v292
      %v316 = vsub.f32 %v277, %v292
      %v317 = vsub.f32 %v278, %v292
      %v318 = vsub.f32 %v279, %v292
      %v319 = vsub.f32 %v280, %v292
      %v320 = vsub.f32 %v281, %v292
      %v321 = vsub.f32 %v282, %v292
      %v322 = vsub.f32 %v283, %v292
      %v323 = vsub.f32 %v284, %v292
      %v324 = vsub.f32 %v285, %v292
      %v325 = vsub.f32 %v286, %v292
      %v326 = vld [vmem:[%s2] sm:$0x1]
      %v327 = vadd.f32 %v326, 1e-05
      %v328 = vrsqrt.pop %v327
      %v330 = vlaneseq
      %v331 = vshrl.u32 %v330, 7
      %v332 = vsub.s32 0, %v331
      %v333 = vrot.slane %v328, %v332
      %v335 = vmul.f32 %v294, %v333
      %v336 = vmul.f32 %v295, %v333
      %v337 = vmul.f32 %v296, %v333
      %v338 = vmul.f32 %v297, %v333
      %v339 = vmul.f32 %v298, %v333
      %v340 = vmul.f32 %v299, %v333
      %v341 = vmul.f32 %v300, %v333
      %v342 = vmul.f32 %v301, %v333
      %v343 = vmul.f32 %v302, %v333
      %v344 = vmul.f32 %v303, %v333
      %v345 = vmul.f32 %v304, %v333
      %v346 = vmul.f32 %v305, %v333
      %v347 = vmul.f32 %v306, %v333
      %v348 = vmul.f32 %v307, %v333
      %v349 = vmul.f32 %v308, %v333
      %v350 = vmul.f32 %v309, %v333
      %v351 = vmul.f32 %v310, %v333
      %v352 = vmul.f32 %v311, %v333
      %v353 = vmul.f32 %v312, %v333
      %v354 = vmul.f32 %v313, %v333
      %v355 = vmul.f32 %v314, %v333
      %v356 = vmul.f32 %v315, %v333
      %v357 = vmul.f32 %v316, %v333
      %v358 = vmul.f32 %v317, %v333
      %v359 = vmul.f32 %v318, %v333
      %v360 = vmul.f32 %v319, %v333
      %v361 = vmul.f32 %v320, %v333
      %v362 = vmul.f32 %v321, %v333
      %v363 = vmul.f32 %v322, %v333
      %v364 = vmul.f32 %v323, %v333
      %v365 = vmul.f32 %v324, %v333
      %v366 = vmul.f32 %v325, %v333
      %v367 = vld [vmem:[%s3] sm:$0x1]
      %v369 = vlaneseq
      %v370 = vshrl.u32 %v369, 7
      %v371 = vsub.s32 0, %v370
      %v372 = vrot.slane %v367, %v371
      %v374 = vmul.f32 %v335, %v372
      %v375 = vmul.f32 %v336, %v372
      %v376 = vmul.f32 %v337, %v372
      %v377 = vmul.f32 %v338, %v372
      %v378 = vmul.f32 %v339, %v372
      %v379 = vmul.f32 %v340, %v372
      %v380 = vmul.f32 %v341, %v372
      %v381 = vmul.f32 %v342, %v372
      %v382 = vmul.f32 %v343, %v372
      %v383 = vmul.f32 %v344, %v372
      %v384 = vmul.f32 %v345, %v372
      %v385 = vmul.f32 %v346, %v372
      %v386 = vmul.f32 %v347, %v372
      %v387 = vmul.f32 %v348, %v372
      %v388 = vmul.f32 %v349, %v372
      %v389 = vmul.f32 %v350, %v372
      %v390 = vmul.f32 %v351, %v372
      %v391 = vmul.f32 %v352, %v372
      %v392 = vmul.f32 %v353, %v372
      %v393 = vmul.f32 %v354, %v372
      %v394 = vmul.f32 %v355, %v372
      %v395 = vmul.f32 %v356, %v372
      %v396 = vmul.f32 %v357, %v372
      %v397 = vmul.f32 %v358, %v372
      %v398 = vmul.f32 %v359, %v372
      %v399 = vmul.f32 %v360, %v372
      %v400 = vmul.f32 %v361, %v372
      %v401 = vmul.f32 %v362, %v372
      %v402 = vmul.f32 %v363, %v372
      %v403 = vmul.f32 %v364, %v372
      %v404 = vmul.f32 %v365, %v372
      %v405 = vmul.f32 %v366, %v372
      %v406 = vld [vmem:[%s4] sm:$0x1]
      %v408 = vlaneseq
      %v409 = vshrl.u32 %v408, 7
      %v410 = vsub.s32 0, %v409
      %v411 = vrot.slane %v406, %v410
      %v413 = vadd.f32 %v374, %v411
      %v414 = vadd.f32 %v375, %v411
      %v415 = vadd.f32 %v376, %v411
      %v416 = vadd.f32 %v377, %v411
      %v417 = vadd.f32 %v378, %v411
      %v418 = vadd.f32 %v379, %v411
      %v419 = vadd.f32 %v380, %v411
      %v420 = vadd.f32 %v381, %v411
      %v421 = vadd.f32 %v382, %v411
      %v422 = vadd.f32 %v383, %v411
      %v423 = vadd.f32 %v384, %v411
      %v424 = vadd.f32 %v385, %v411
      %v425 = vadd.f32 %v386, %v411
      %v426 = vadd.f32 %v387, %v411
      %v427 = vadd.f32 %v388, %v411
      %v428 = vadd.f32 %v389, %v411
      %v429 = vadd.f32 %v390, %v411
      %v430 = vadd.f32 %v391, %v411
      %v431 = vadd.f32 %v392, %v411
      %v432 = vadd.f32 %v393, %v411
      %v433 = vadd.f32 %v394, %v411
      %v434 = vadd.f32 %v395, %v411
      %v435 = vadd.f32 %v396, %v411
      %v436 = vadd.f32 %v397, %v411
      %v437 = vadd.f32 %v398, %v411
      %v438 = vadd.f32 %v399, %v411
      %v439 = vadd.f32 %v400, %v411
      %v440 = vadd.f32 %v401, %v411
      %v441 = vadd.f32 %v402, %v411
      %v442 = vadd.f32 %v403, %v411
      %v443 = vadd.f32 %v404, %v411
      %v444 = vadd.f32 %v405, %v411
      %vm445 = vcmp.ge.f32.partialorder %v413, 0.0
      %vm446 = vcmp.ge.f32.partialorder %v414, 0.0
      %vm447 = vcmp.ge.f32.partialorder %v415, 0.0
      %vm448 = vcmp.ge.f32.partialorder %v416, 0.0
      %vm449 = vcmp.ge.f32.partialorder %v417, 0.0
      %vm450 = vcmp.ge.f32.partialorder %v418, 0.0
      %vm451 = vcmp.ge.f32.partialorder %v419, 0.0
      %vm452 = vcmp.ge.f32.partialorder %v420, 0.0
      %vm453 = vcmp.ge.f32.partialorder %v421, 0.0
      %vm454 = vcmp.ge.f32.partialorder %v422, 0.0
      %vm455 = vcmp.ge.f32.partialorder %v423, 0.0
      %vm456 = vcmp.ge.f32.partialorder %v424, 0.0
      %vm457 = vcmp.ge.f32.partialorder %v425, 0.0
      %vm458 = vcmp.ge.f32.partialorder %v426, 0.0
      %vm459 = vcmp.ge.f32.partialorder %v427, 0.0
      %vm460 = vcmp.ge.f32.partialorder %v428, 0.0
      %vm461 = vcmp.ge.f32.partialorder %v429, 0.0
      %vm462 = vcmp.ge.f32.partialorder %v430, 0.0
      %vm463 = vcmp.ge.f32.partialorder %v431, 0.0
      %vm464 = vcmp.ge.f32.partialorder %v432, 0.0
      %vm465 = vcmp.ge.f32.partialorder %v433, 0.0
      %vm466 = vcmp.ge.f32.partialorder %v434, 0.0
      %vm467 = vcmp.ge.f32.partialorder %v435, 0.0
      %vm468 = vcmp.ge.f32.partialorder %v436, 0.0
      %vm469 = vcmp.ge.f32.partialorder %v437, 0.0
      %vm470 = vcmp.ge.f32.partialorder %v438, 0.0
      %vm471 = vcmp.ge.f32.partialorder %v439, 0.0
      %vm472 = vcmp.ge.f32.partialorder %v440, 0.0
      %vm473 = vcmp.ge.f32.partialorder %v441, 0.0
      %vm474 = vcmp.ge.f32.partialorder %v442, 0.0
      %vm475 = vcmp.ge.f32.partialorder %v443, 0.0
      %vm476 = vcmp.ge.f32.partialorder %v444, 0.0
      %v477 = vld [vmem:[%s5] sm:$0x1]
      %v479 = vlaneseq
      %v480 = vshrl.u32 %v479, 7
      %v481 = vsub.s32 0, %v480
      %v482 = vrot.slane %v477, %v481
      %v484 = vmul.f32 %v482, %v413
      %v485 = vmul.f32 %v482, %v414
      %v486 = vmul.f32 %v482, %v415
      %v487 = vmul.f32 %v482, %v416
      %v488 = vmul.f32 %v482, %v417
      %v489 = vmul.f32 %v482, %v418
      %v490 = vmul.f32 %v482, %v419
      %v491 = vmul.f32 %v482, %v420
      %v492 = vmul.f32 %v482, %v421
      %v493 = vmul.f32 %v482, %v422
      %v494 = vmul.f32 %v482, %v423
      %v495 = vmul.f32 %v482, %v424
      %v496 = vmul.f32 %v482, %v425
      %v497 = vmul.f32 %v482, %v426
      %v498 = vmul.f32 %v482, %v427
      %v499 = vmul.f32 %v482, %v428
      %v500 = vmul.f32 %v482, %v429
      %v501 = vmul.f32 %v482, %v430
      %v502 = vmul.f32 %v482, %v431
      %v503 = vmul.f32 %v482, %v432
      %v504 = vmul.f32 %v482, %v433
      %v505 = vmul.f32 %v482, %v434
      %v506 = vmul.f32 %v482, %v435
      %v507 = vmul.f32 %v482, %v436
      %v508 = vmul.f32 %v482, %v437
      %v509 = vmul.f32 %v482, %v438
      %v510 = vmul.f32 %v482, %v439
      %v511 = vmul.f32 %v482, %v440
      %v512 = vmul.f32 %v482, %v441
      %v513 = vmul.f32 %v482, %v442
      %v514 = vmul.f32 %v482, %v443
      %v515 = vmul.f32 %v482, %v444
      %v516 = vsel %vm445, %v413, %v484
      %v517 = vsel %vm446, %v414, %v485
      %v518 = vsel %vm447, %v415, %v486
      %v519 = vsel %vm448, %v416, %v487
      %v520 = vsel %vm449, %v417, %v488
      %v521 = vsel %vm450, %v418, %v489
      %v522 = vsel %vm451, %v419, %v490
      %v523 = vsel %vm452, %v420, %v491
      %v524 = vsel %vm453, %v421, %v492
      %v525 = vsel %vm454, %v422, %v493
      %v526 = vsel %vm455, %v423, %v494
      %v527 = vsel %vm456, %v424, %v495
      %v528 = vsel %vm457, %v425, %v496
      %v529 = vsel %vm458, %v426, %v497
      %v530 = vsel %vm459, %v427, %v498
      %v531 = vsel %vm460, %v428, %v499
      %v532 = vsel %vm461, %v429, %v500
      %v533 = vsel %vm462, %v430, %v501
      %v534 = vsel %vm463, %v431, %v502
      %v535 = vsel %vm464, %v432, %v503
      %v536 = vsel %vm465, %v433, %v504
      %v537 = vsel %vm466, %v434, %v505
      %v538 = vsel %vm467, %v435, %v506
      %v539 = vsel %vm468, %v436, %v507
      %v540 = vsel %vm469, %v437, %v508
      %v541 = vsel %vm470, %v438, %v509
      %v542 = vsel %vm471, %v439, %v510
      %v543 = vsel %vm472, %v440, %v511
      %v544 = vsel %vm473, %v441, %v512
      %v545 = vsel %vm474, %v442, %v513
      %v546 = vsel %vm475, %v443, %v514
      %v547 = vsel %vm476, %v444, %v515
      %vm548 = vcmask 31744
      %549 = vst.msk [vmem:[%s253] sm:$0xff] %vm548, %v516
      %550 = vst.msk [vmem:[%s253 + $0x8] sm:$0xff] %vm548, %v517
      %551 = vst.msk [vmem:[%s253 + $0x10] sm:$0xff] %vm548, %v518
      %552 = vst.msk [vmem:[%s253 + $0x18] sm:$0xff] %vm548, %v519
      %553 = vst.msk [vmem:[%s253 + $0x20] sm:$0xff] %vm548, %v520
      %554 = vst.msk [vmem:[%s253 + $0x28] sm:$0xff] %vm548, %v521
      %555 = vst.msk [vmem:[%s253 + $0x30] sm:$0xff] %vm548, %v522
      %556 = vst.msk [vmem:[%s253 + $0x38] sm:$0xff] %vm548, %v523
      %557 = vst.msk [vmem:[%s253 + $0x40] sm:$0xff] %vm548, %v524
      %558 = vst.msk [vmem:[%s253 + $0x48] sm:$0xff] %vm548, %v525
      %559 = vst.msk [vmem:[%s253 + $0x50] sm:$0xff] %vm548, %v526
      %560 = vst.msk [vmem:[%s253 + $0x58] sm:$0xff] %vm548, %v527
      %561 = vst.msk [vmem:[%s253 + $0x60] sm:$0xff] %vm548, %v528
      %562 = vst.msk [vmem:[%s253 + $0x68] sm:$0xff] %vm548, %v529
      %563 = vst.msk [vmem:[%s253 + $0x70] sm:$0xff] %vm548, %v530
      %564 = vst.msk [vmem:[%s253 + $0x78] sm:$0xff] %vm548, %v531
      %565 = vst.msk [vmem:[%s253 + $0x80] sm:$0xff] %vm548, %v532
      %566 = vst.msk [vmem:[%s253 + $0x88] sm:$0xff] %vm548, %v533
      %567 = vst.msk [vmem:[%s253 + $0x90] sm:$0xff] %vm548, %v534
      %568 = vst.msk [vmem:[%s253 + $0x98] sm:$0xff] %vm548, %v535
      %569 = vst.msk [vmem:[%s253 + $0xa0] sm:$0xff] %vm548, %v536
      %570 = vst.msk [vmem:[%s253 + $0xa8] sm:$0xff] %vm548, %v537
      %571 = vst.msk [vmem:[%s253 + $0xb0] sm:$0xff] %vm548, %v538
      %572 = vst.msk [vmem:[%s253 + $0xb8] sm:$0xff] %vm548, %v539
      %573 = vst.msk [vmem:[%s253 + $0xc0] sm:$0xff] %vm548, %v540
      %574 = vst.msk [vmem:[%s253 + $0xc8] sm:$0xff] %vm548, %v541
      %575 = vst.msk [vmem:[%s253 + $0xd0] sm:$0xff] %vm548, %v542
      %576 = vst.msk [vmem:[%s253 + $0xd8] sm:$0xff] %vm548, %v543
      %577 = vst.msk [vmem:[%s253 + $0xe0] sm:$0xff] %vm548, %v544
      %578 = vst.msk [vmem:[%s253 + $0xe8] sm:$0xff] %vm548, %v545
      %579 = vst.msk [vmem:[%s253 + $0xf0] sm:$0xff] %vm548, %v546
      %580 = vst.msk [vmem:[%s253 + $0xf8] sm:$0xff] %vm548, %v547
      %s581 = smul.u32 32, %s17
      %p582 = scmp.lt.s32.totalorder %s581, 63
      %s583 = scalar_select %p582, %s581, 63
      %s584 = smul.addr %s583, 8
      %s585 = scalar_lea.vmem %s6, %s584
      // Predicated region
      $region45: #{residual_block_forward.12} parent=43 // pred_check
        %p586 = pneg %p166
      $region46: #{residual_block_forward.12} parent=43 // pred_check_branch
        %588 = sbr.rel (%p586) target = $region48
      $region47: #{residual_block_forward.12} parent=43 // pred_region
        %s589 = smul.u32 32, %s17
      $region48: #{residual_block_forward.12} parent=43 // pred_fallthru
        _
    $region44: #{residual_block_forward.12} parent=5 // pred_fallthru
      _
    %p590 = scmp.le.s32.totalorder 2, %s12
    // Predicated region
    $region49: #{residual_block_forward.12} parent=5 // pred_check
      %p591 = pneg %p590
    $region50: #{residual_block_forward.12} parent=5 // pred_check_branch
      %593 = sbr.rel (%p591) target = $region52
    $region51: #{residual_block_forward.12} parent=5 // pred_region
      %s594 = ssub.s32 %s12, 2
      // Predicated region
      $region53: #{residual_block_forward.12} parent=51 // pred_check
        %p595 = pneg %p172
      $region54: #{residual_block_forward.12} parent=51 // pred_check_branch
        %597 = sbr.rel (%p595) target = $region56
      $region55: #{residual_block_forward.12} parent=51 // pred_region
        %s598 = smul.u32 32, %s18
        %p599 = scmp.lt.s32.totalorder %s598, 63
        %s600 = scalar_select %p599, %s598, 63
        %s601 = smul.addr %s600, 8
        %s602 = scalar_lea.vmem %s6, %s601
      $region56: #{residual_block_forward.12} parent=51 // pred_fallthru
        _
    $region52: #{residual_block_forward.12} parent=5 // pred_fallthru
      _
  $region6: #{residual_block_forward.12} parent=0 // loop_footer
    %s16 = sadd.s32 1, %s12
  $region7: #{residual_block_forward.12} parent=0 // loop_footer_branch
    %11 = sbr.rel target = $region3
  $region8: #{residual_block_forward.12} parent=0 // loop_exit
    _

// kernel: residual_block_forward.13
$region0: #{residual_block_forward.13}
  #allocation0 [shape = 'u32[]', space=smem, size = 0x4, offset = 0x4, fixed_abs, tag = 'smem constant byte address 0x4 - core index']
  #allocation1 [shape = 'u32[144,128]{1,0:T(1,128)}', space=vmem, size = 0x12000, scoped, tag = 'internal scratch']
  #allocation2 [shape = 'f32[256,4]{1,0:T(8,128)}', space=vmem, size = 0x20000, scoped, tag = 'scratch operand']
  %s0 = inlined_call_operand.vmem [shape: bf16[512,36], index: 0, kind: input, shape index: {}]
  %s1 = inlined_call_operand.vmem [shape: bf16[36,4], index: 1, kind: input, shape index: {}]
  %s2 = inlined_call_operand.vmem [shape: f32[1,4], index: 2, kind: input, shape index: {}]
  %s3 = inlined_call_operand.vmem [shape: f32[512,4], index: 3, kind: output, shape index: {}]
  %s4 = sld [smem:[#allocation0]]
  $region53: #{residual_block_forward.13} parent=0
    _
  %s6 = ssub.s32 1, %s4
  %s7 = scalar_select 0, %s6, %s4
  loop: start=0, step=1, limit=4
  $region2: #{residual_block_forward.13} parent=0 // loop_pre_header
    _
  $region3: #{residual_block_forward.13} parent=0 // loop_header
    %s9 = sphi 0, %s13
    %p10 = scmp.ge.s32.totalorder %s9, 4
    %s16 = sphi 0, %s35
    %s17 = sphi 0, %s31
    %s18 = sphi 0, %s27
    %s19 = sphi 0, %s16
    %s20 = sphi 0, %s17
    %s21 = sphi 0, %s18
    %s22 = sphi 0, %s19
    %s23 = sphi 0, %s20
    %s24 = sphi 0, %s21
    %s40 = sphi 0, %s42
    %s43 = sphi 0, %s40
    %s44 = sphi 0, %s43
    %s60 = sphi 0, %s44
    %s68 = sphi 0, %s70
    %s71 = sphi 0, %s68
    %s72 = sphi 0, %s71
    %s88 = sphi 0, %s72
    %s94 = sphi 0, %s96
    %s97 = sphi 0, %s94
    %s98 = sphi 0, %s97
    %s114 = sphi 0, %s98
    %s122 = sphi 0, %s124
    %s125 = sphi 0, %s122
    %s126 = sphi 0, %s125
    %s142 = sphi 0, %s126
  $region4: #{residual_block_forward.13} parent=0 // loop_header_branch
    %12 = sbr.rel (%p10) target = $region8
  $region5: #{residual_block_forward.13} parent=0 // loop_body
    %s14 = ssub.s32 %s9, 1
    %s15 = ssub.s32 %s9, 2
    %s25 = sadd.s32 1, %s18
    %p26 = scmp.ge.s32.totalorder %s25, 1
    %s27 = scalar_select %p26, 0, %s25
    %s28 = sadd.s32 1, %s17
    %s29 = scalar_select %p26, %s28, %s17
    %p30 = scmp.ge.s32.totalorder %s29, 1
    %s31 = scalar_select %p30, 0, %s29
    %s32 = sadd.s32 1, %s16
    %s33 = scalar_select %p30, %s32, %s16
    %p34 = scmp.ge.s32.totalorder %s33, 2
    %s35 = scalar_select %p34, 0, %s33
    %s36 = ssub.s32 %s16, %s35
    %s37 = ssub.s32 %s18, %s27
    %s38 = sor.u32 %s36, %s37
    %p39 = scmp.eq.s32.totalorder %s38, 0
    %s41 = sadd.s32 %s40, 1
    %s42 = scalar_select %p39, %s40, %s41
    %p45 = pneg %p39
    %p46 = scmp.eq.s32.totalorder %s9, 1
    %p47 = por %p45, %p46
    %p48 = scmp.ne.s32.totalorder %s40, %s43
    %p49 = scmp.eq.s32.totalorder %s9, 0
    %p50 = por %p48, %p49
    %p51 = scmp.ne.s32.totalorder %s40, %s43
    %p52 = scmp.eq.s32.totalorder %s14, 1
    %p53 = por %p51, %p52
    %p54 = scmp.ne.s32.totalorder %s43, %s44
    %p55 = scmp.eq.s32.totalorder %s14, 0
    %p56 = por %p54, %p55
    %p57 = scmp.ne.s32.totalorder %s43, %s44
    %p58 = scmp.eq.s32.totalorder %s15, 1
    %p59 = por %p57, %p58
    %p61 = scmp.ne.s32.totalorder %s44, %s60
    %p62 = scmp.eq.s32.totalorder %s15, 0
    %p63 = por %p61, %p62
    %s64 = ssub.s32 %s18, %s27
    %s65 = ssub.s32 %s17, %s31
    %s66 = sor.u32 %s64, %s65
    %p67 = scmp.eq.s32.totalorder %s66, 0
    %s69 = sadd.s32 %s68, 1
    %s70 = scalar_select %p67, %s68, %s69
    %p73 = pneg %p67
    %p74 = scmp.eq.s32.totalorder %s9, 1
    %p75 = por %p73, %p74
    %p76 = scmp.ne.s32.totalorder %s68, %s71
    %p77 = scmp.eq.s32.totalorder %s9, 0
    %p78 = por %p76, %p77
    %p79 = scmp.ne.s32.totalorder %s68, %s71
    %p80 = scmp.eq.s32.totalorder %s14, 1
    %p81 = por %p79, %p80
    %p82 = scmp.ne.s32.totalorder %s71, %s72
    %p83 = scmp.eq.s32.totalorder %s14, 0
    %p84 = por %p82, %p83
    %p85 = scmp.ne.s32.totalorder %s71, %s72
    %p86 = scmp.eq.s32.totalorder %s15, 1
    %p87 = por %p85, %p86
    %p89 = scmp.ne.s32.totalorder %s72, %s88
    %p90 = scmp.eq.s32.totalorder %s15, 0
    %p91 = por %p89, %p90
    %s92 = ssub.s32 %s17, %s31
    %p93 = scmp.eq.s32.totalorder %s92, 0
    %s95 = sadd.s32 %s94, 1
    %s96 = scalar_select %p93, %s94, %s95
    %p99 = pneg %p93
    %p100 = scmp.eq.s32.totalorder %s9, 1
    %p101 = por %p99, %p100
    %p102 = scmp.ne.s32.totalorder %s94, %s97
    %p103 = scmp.eq.s32.totalorder %s9, 0
    %p104 = por %p102, %p103
    %p105 = scmp.ne.s32.totalorder %s94, %s97
    %p106 = scmp.eq.s32.totalorder %s14, 1
    %p107 = por %p105, %p106
    %p108 = scmp.ne.s32.totalorder %s97, %s98
    %p109 = scmp.eq.s32.totalorder %s14, 0
    %p110 = por %p108, %p109
    %p111 = scmp.ne.s32.totalorder %s97, %s98
    %p112 = scmp.eq.s32.totalorder %s15, 1
    %p113 = por %p111, %p112
    %p115 = scmp.ne.s32.totalorder %s98, %s114
    %p116 = scmp.eq.s32.totalorder %s15, 0
    %p117 = por %p115, %p116
    %s118 = ssub.s32 %s16, %s35
    %s119 = ssub.s32 %s17, %s31
    %s120 = sor.u32 %s118, %s119
    %p121 = scmp.eq.s32.totalorder %s120, 0
    %s123 = sadd.s32 %s122, 1
    %s124 = scalar_select %p121, %s122, %s123
    %p127 = pneg %p121
    %p128 = scmp.eq.s32.totalorder %s9, 1
    %p129 = por %p127, %p128
    %p130 = scmp.ne.s32.totalorder %s122, %s125
    %p131 = scmp.eq.s32.totalorder %s9, 0
    %p132 = por %p130, %p131
    %p133 = scmp.ne.s32.totalorder %s122, %s125
    %p134 = scmp.eq.s32.totalorder %s14, 1
    %p135 = por %p133, %p134
    %p136 = scmp.ne.s32.totalorder %s125, %s126
    %p137 = scmp.eq.s32.totalorder %s14, 0
    %p138 = por %p136, %p137
    %p139 = scmp.ne.s32.totalorder %s125, %s126
    %p140 = scmp.eq.s32.totalorder %s15, 1
    %p141 = por %p139, %p140
    %p143 = scmp.ne.s32.totalorder %s126, %s142
    %p144 = scmp.eq.s32.totalorder %s15, 0
    %p145 = por %p143, %p144
    %p146 = scmp.le.s32.totalorder 1, %s9
    %p147 = scmp.lt.s32.totalorder %s9, 3
    %p148 = pnand %p146, %p147
    %p149 = pneg %p148
    // Predicated region
    $region9: #{residual_block_forward.13} parent=5 // pred_check
      _
    $region10: #{residual_block_forward.13} parent=5 // pred_check_branch
      %151 = sbr.rel (%p148) target = $region12
    $region11: #{residual_block_forward.13} parent=5 // pred_region
      %s152 = ssub.s32 %s9, 1
      // Predicated region
      $region13: #{residual_block_forward.13} parent=11 // pred_check
        %p153 = pneg %p84
      $region14: #{residual_block_forward.13} parent=11 // pred_check_branch
        %155 = sbr.rel (%p153) target = $region16
      $region15: #{residual_block_forward.13} parent=11 // pred_region
        %s156 = smul.u32 5, %s21
        %p157 = scmp.lt.s32.totalorder %s156, 4
        %s158 = scalar_select %p157, %s156, 4
        %p159 = scmp.lt.s32.totalorder %s20, 0
        %s160 = scalar_select %p159, %s20, 0
        %s161 = sadd.s32 %s160, %s158
        %s162 = smul.addr %s161, 4
        %s163 = scalar_lea.vmem %s1, %s162
        %s164 = smul.u32 5, %s21
      $region16: #{residual_block_forward.13} parent=11 // pred_fallthru
        _
      // Predicated region
      $region17: #{residual_block_forward.13} parent=11 // pred_check
        %p165 = pneg %p110
      $region18: #{residual_block_forward.13} parent=11 // pred_check_branch
        %167 = sbr.rel (%p165) target = $region20
      $region19: #{residual_block_forward.13} parent=11 // pred_region
        %p168 = scmp.lt.s32.totalorder %s20, 0
        %s169 = scalar_select %p168, %s20, 0
        %s170 = scalar_lea.vmem %s2, %s169
      $region20: #{residual_block_forward.13} parent=11 // pred_fallthru
        _
    $region12: #{residual_block_forward.13} parent=5 // pred_fallthru
      _
    %p171 = scmp.lt.s32.totalorder %s9, 2
    // Predicated region
    $region21: #{residual_block_forward.13} parent=5 // pred_check
      %p172 = pneg %p171
    $region22: #{residual_block_forward.13} parent=5 // pred_check_branch
      %174 = sbr.rel (%p172) target = $region24
    $region23: #{residual_block_forward.13} parent=5 // pred_region
      // Predicated region
      $region25: #{residual_block_forward.13} parent=23 // pred_check
        %p175 = pneg %p50
      $region26: #{residual_block_forward.13} parent=23 // pred_check_branch
        %177 = sbr.rel (%p175) target = $region28
      $region27: #{residual_block_forward.13} parent=23 // pred_region
        %s178 = smul.u32 32, %s16
        %p179 = scmp.lt.s32.totalorder %s178, 63
        %s180 = scalar_select %p179, %s178, 63
        %p181 = scmp.lt.s32.totalorder %s18, 0
        %s182 = scalar_select %p181, %s18, 0
        %s183 = sadd.s32 %s182, %s180
        %s184 = smul.addr %s183, 4
        %s185 = scalar_lea.vmem %s0, %s184
        %s186 = smul.u32 32, %s16
      $region28: #{residual_block_forward.13} parent=23 // pred_fallthru
        _
    $region24: #{residual_block_forward.13} parent=5 // pred_fallthru
      _
    %p187 = scmp.le.s32.totalorder 1, %s9
    %p188 = scmp.lt.s32.totalorder %s9, 3
    %p189 = pnand %p187, %p188
    %p190 = pneg %p189
    // Predicated region
    $region29: #{residual_block_forward.13} parent=5 // pred_check
      _
    $region30: #{residual_block_forward.13} parent=5 // pred_check_branch
      %192 = sbr.rel (%p189) target = $region32
    $region31: #{residual_block_forward.13} parent=5 // pred_region
      %s193 = ssub.s32 %s9, 1
      %s194 = smul.u32 32, %s19
      %p195 = scmp.lt.s32.totalorder %s194, 63
      %s196 = scalar_select %p195, %s194, 63
      %p197 = scmp.lt.s32.totalorder %s21, 0
      %s198 = scalar_select %p197, %s21, 0
      %s199 = sadd.s32 %s198, %s196
      %s200 = smul.addr %s199, 4
      %s201 = scalar_lea.vmem %s0, %s200
      %p202 = pneg %p56
      %p203 = pneg %p53
      %s204 = smul.u32 5, %s21
      %p205 = scmp.lt.s32.totalorder %s204, 4
      %s206 = scalar_select %p205, %s204, 4
      %p207 = scmp.lt.s32.totalorder %s20, 0
      %s208 = scalar_select %p207, %s20, 0
      %s209 = sadd.s32 %s208, %s206
      %s210 = smul.addr %s209, 4
      %s211 = scalar_lea.vmem %s1, %s210
      %p212 = pneg %p84
      %p213 = pneg %p81
      %p214 = scmp.lt.s32.totalorder %s20, 0
      %s215 = scalar_select %p214, %s20, 0
      %s216 = scalar_lea.vmem %s2, %s215
      %p217 = pneg %p110
      %p218 = pneg %p107
      %p219 = pneg %p138
      %p220 = pneg %p135
      %s221 = smul.u32 32, %s19
      %p222 = scmp.lt.s32.totalorder %s221, 63
      %s223 = scalar_select %p222, %s221, 63
      %p224 = scmp.lt.s32.totalorder %s20, 0
      %s225 = scalar_select %p224, %s20, 0
      %s226 = sadd.s32 %s225, %s223
      %s227 = smul.addr %s226, 8
      %s228 = scalar_lea.vmem %s3, %s227
      %s229 = smul.u32 32, %s19
      %p230 = scmp.lt.s32.totalorder %s229, 63
      %s231 = scalar_select %p230, %s229, 63
      %p232 = scmp.lt.s32.totalorder %s21, 0
      %s233 = scalar_select %p232, %s21, 0
      %s234 = sadd.s32 %s233, %s231
      %s235 = smul.addr %s234, 4
      %s236 = scalar_lea.vmem %s0, %s235
      %s237 = smul.u32 32, %s19
      %s238 = smul.u32 5, %s21
      %p239 = scmp.lt.s32.totalorder %s238, 4
      %s240 = scalar_select %p239, %s238, 4
      %p241 = scmp.lt.s32.totalorder %s20, 0
      %s242 = scalar_select %p241, %s20, 0
      %s243 = sadd.s32 %s242, %s240
      %s244 = smul.addr %s243, 4
      %s245 = scalar_lea.vmem %s1, %s244
      %s246 = smul.u32 5, %s21
      %p247 = scmp.lt.s32.totalorder %s20, 0
      %s248 = scalar_select %p247, %s20, 0
      %s249 = scalar_lea.vmem %s2, %s248
      %s250 = smul.u32 32, %s19
      %p251 = scmp.lt.s32.totalorder %s250, 63
      %s252 = scalar_select %p251, %s250, 63
      %p253 = scmp.lt.s32.totalorder %s20, 0
      %s254 = scalar_select %p253, %s20, 0
      %s255 = sadd.s32 %s254, %s252
      %s256 = smul.addr %s255, 8
      %s257 = scalar_lea.vmem %s3, %s256
      %s258 = smul.u32 32, %s19
      %p260 = scmp.eq.s32.totalorder %s21, 0
      // Predicated region
      $region33: #{residual_block_forward.13} parent=31 // pred_check
        %p261 = pneg %p260
      $region34: #{residual_block_forward.13} parent=31 // pred_check_branch
        %263 = sbr.rel (%p261) target = $region36
      $region35: #{residual_block_forward.13} parent=31 // pred_region
        %vm264 = vcmask 31744
        %265 = vst.msk [vmem:[#allocation2] sm:$0xff] %vm264, 0.0
        %266 = vst.msk [vmem:[#allocation2 + $0x8] sm:$0xff] %vm264, 0.0
        %267 = vst.msk [vmem:[#allocation2 + $0x10] sm:$0xff] %vm264, 0.0
        %268 = vst.msk [vmem:[#allocation2 + $0x18] sm:$0xff] %vm264, 0.0
        %269 = vst.msk [vmem:[#allocation2 + $0x20] sm:$0xff] %vm264, 0.0
        %270 = vst.msk [vmem:[#allocation2 + $0x28] sm:$0xff] %vm264, 0.0
        %271 = vst.msk [vmem:[#allocation2 + $0x30] sm:$0xff] %vm264, 0.0
        %272 = vst.msk [vmem:[#allocation2 + $0x38] sm:$0xff] %vm264, 0.0
        %273 = vst.msk [vmem:[#allocation2 + $0x40] sm:$0xff] %vm264, 0.0
        %274 = vst.msk [vmem:[#allocation2 + $0x48] sm:$0xff] %vm264, 0.0
        %275 = vst.msk [vmem:[#allocation2 + $0x50] sm:$0xff] %vm264, 0.0
        %276 = vst.msk [vmem:[#allocation2 + $0x58] sm:$0xff] %vm264, 0.0
        %277 = vst.msk [vmem:[#allocation2 + $0x60] sm:$0xff] %vm264, 0.0
        %278 = vst.msk [vmem:[#allocation2 + $0x68] sm:$0xff] %vm264, 0.0
        %279 = vst.msk [vmem:[#allocation2 + $0x70] sm:$0xff] %vm264, 0.0
        %280 = vst.msk [vmem:[#allocation2 + $0x78] sm:$0xff] %vm264, 0.0
        %281 = vst.msk [vmem:[#allocation2 + $0x80] sm:$0xff] %vm264, 0.0
        %282 = vst.msk [vmem:[#allocation2 + $0x88] sm:$0xff] %vm264, 0.0
        %283 = vst.msk [vmem:[#allocation2 + $0x90] sm:$0xff] %vm264, 0.0
        %284 = vst.msk [vmem:[#allocation2 + $0x98] sm:$0xff] %vm264, 0.0
        %285 = vst.msk [vmem:[#allocation2 + $0xa0] sm:$0xff] %vm264, 0.0
        %286 = vst.msk [vmem:[#allocation2 + $0xa8] sm:$0xff] %vm264, 0.0
        %287 = vst.msk [vmem:[#allocation2 + $0xb0] sm:$0xff] %vm264, 0.0
        %288 = vst.msk [vmem:[#allocation2 + $0xb8] sm:$0xff] %vm264, 0.0
        %289 = vst.msk [vmem:[#allocation2 + $0xc0] sm:$0xff] %vm264, 0.0
        %290 = vst.msk [vmem:[#allocation2 + $0xc8] sm:$0xff] %vm264, 0.0
        %291 = vst.msk [vmem:[#allocation2 + $0xd0] sm:$0xff] %vm264, 0.0
        %292 = vst.msk [vmem:[#allocation2 + $0xd8] sm:$0xff] %vm264, 0.0
        %293 = vst.msk [vmem:[#allocation2 + $0xe0] sm:$0xff] %vm264, 0.0
        %294 = vst.msk [vmem:[#allocation2 + $0xe8] sm:$0xff] %vm264, 0.0
        %295 = vst.msk [vmem:[#allocation2 + $0xf0] sm:$0xff] %vm264, 0.0
        %296 = vst.msk [vmem:[#allocation2 + $0xf8] sm:$0xff] %vm264, 0.0
      $region36: #{residual_block_forward.13} parent=31 // pred_fallthru
        _
      %v297 = vld [vmem:[#allocation2] sm:$0xff]
      %v298 = vld [vmem:[#allocation2 + $0x8] sm:$0xff]
      %v299 = vld [vmem:[#allocation2 + $0x10] sm:$0xff]
      %v300 = vld [vmem:[#allocation2 + $0x18] sm:$0xff]
      %v301 = vld [vmem:[#allocation2 + $0x20] sm:$0xff]
      %v302 = vld [vmem:[#allocation2 + $0x28] sm:$0xff]
      %v303 = vld [vmem:[#allocation2 + $0x30] sm:$0xff]
      %v304 = vld [vmem:[#allocation2 + $0x38] sm:$0xff]
      %v305 = vld [vmem:[#allocation2 + $0x40] sm:$0xff]
      %v306 = vld [vmem:[#allocation2 + $0x48] sm:$0xff]
      %v307 = vld [vmem:[#allocation2 + $0x50] sm:$0xff]
      %v308 = vld [vmem:[#allocation2 + $0x58] sm:$0xff]
      %v309 = vld [vmem:[#allocation2 + $0x60] sm:$0xff]
      %v310 = vld [vmem:[#allocation2 + $0x68] sm:$0xff]
      %v311 = vld [vmem:[#allocation2 + $0x70] sm:$0xff]
      %v312 = vld [vmem:[#allocation2 + $0x78] sm:$0xff]
      %v313 = vld [vmem:[#allocation2 + $0x80] sm:$0xff]
      %v314 = vld [vmem:[#allocation2 + $0x88] sm:$0xff]
      %v315 = vld [vmem:[#allocation2 + $0x90] sm:$0xff]
      %v316 = vld [vmem:[#allocation2 + $0x98] sm:$0xff]
      %v317 = vld [vmem:[#allocation2 + $0xa0] sm:$0xff]
      %v318 = vld [vmem:[#allocation2 + $0xa8] sm:$0xff]
      %v319 = vld [vmem:[#allocation2 + $0xb0] sm:$0xff]
      %v320 = vld [vmem:[#allocation2 + $0xb8] sm:$0xff]
      %v321 = vld [vmem:[#allocation2 + $0xc0] sm:$0xff]
      %v322 = vld [vmem:[#allocation2 + $0xc8] sm:$0xff]
      %v323 = vld [vmem:[#allocation2 + $0xd0] sm:$0xff]
      %v324 = vld [vmem:[#allocation2 + $0xd8] sm:$0xff]
      %v325 = vld [vmem:[#allocation2 + $0xe0] sm:$0xff]
      %v326 = vld [vmem:[#allocation2 + $0xe8] sm:$0xff]
      %v327 = vld [vmem:[#allocation2 + $0xf0] sm:$0xff]
      %v328 = vld [vmem:[#allocation2 + $0xf8] sm:$0xff]
      %v329 = vld [vmem:[%s236] sm:$0xf]
      %v330 = vld [vmem:[%s236 + $0x4] sm:$0xf]
      %v331 = vld [vmem:[%s236 + $0x8] sm:$0xf]
      %v332 = vld [vmem:[%s236 + $0xc] sm:$0xf]
      %v333 = vld [vmem:[%s236 + $0x10] sm:$0xf]
      %v334 = vld [vmem:[%s236 + $0x14] sm:$0xf]
      %v335 = vld [vmem:[%s236 + $0x18] sm:$0xf]
      %v336 = vld [vmem:[%s236 + $0x1c] sm:$0xf]
      %v337 = vld [vmem:[%s236 + $0x20] sm:$0xf]
      %v338 = vld [vmem:[%s236 + $0x24] sm:$0xf]
      %v339 = vld [vmem:[%s236 + $0x28] sm:$0xf]
      %v340 = vld [vmem:[%s236 + $0x2c] sm:$0xf]
      %v341 = vld [vmem:[%s236 + $0x30] sm:$0xf]
      %v342 = vld [vmem:[%s236 + $0x34] sm:$0xf]
      %v343 = vld [vmem:[%s236 + $0x38] sm:$0xf]
      %v344 = vld [vmem:[%s236 + $0x3c] sm:$0xf]
      %v345 = vld [vmem:[%s236 + $0x40] sm:$0xf]
      %v346 = vld [vmem:[%s236 + $0x44] sm:$0xf]
      %v347 = vld [vmem:[%s236 + $0x48] sm:$0xf]
      %v348 = vld [vmem:[%s236 + $0x4c] sm:$0xf]
      %v349 = vld [vmem:[%s236 + $0x50] sm:$0xf]
      %v350 = vld [vmem:[%s236 + $0x54] sm:$0xf]
      %v351 = vld [vmem:[%s236 + $0x58] sm:$0xf]
      %v352 = vld [vmem:[%s236 + $0x5c] sm:$0xf]
      %v353 = vld [vmem:[%s236 + $0x60] sm:$0xf]
      %v354 = vld [vmem:[%s236 + $0x64] sm:$0xf]
      %v355 = vld [vmem:[%s236 + $0x68] sm:$0xf]
      %v356 = vld [vmem:[%s236 + $0x6c] sm:$0xf]
      %v357 = vld [vmem:[%s236 + $0x70] sm:$0xf]
      %v358 = vld [vmem:[%s236 + $0x74] sm:$0xf]
      %v359 = vld [vmem:[%s236 + $0x78] sm:$0xf]
      %v360 = vld [vmem:[%s236 + $0x7c] sm:$0xf]
      %v361 = vld [vmem:[%s245] sm:$0xf]
      %v362 = vld [vmem:[%s245 + $0x4] sm:$0xf]
      %v363 = vld [vmem:[%s245 + $0x8] sm:$0xf]
      %v364 = vld [vmem:[%s245 + $0xc] sm:$0xf]
      %v365 = vld [vmem:[%s245 + $0x10] sm:$0x3]
      %v398 = vunpack.c.l.b16 %v329
      %v399 = vunpack.c.l.b16 %v330
      %v400 = vunpack.c.l.b16 %v331
      %v401 = vunpack.c.l.b16 %v332
      %v402 = vunpack.c.l.b16 %v333
      %v403 = vunpack.c.l.b16 %v334
      %v404 = vunpack.c.l.b16 %v335
      %v405 = vunpack.c.l.b16 %v336
      %v406 = vunpack.c.l.b16 %v337
      %v407 = vunpack.c.l.b16 %v338
      %v408 = vunpack.c.l.b16 %v339
      %v409 = vunpack.c.l.b16 %v340
      %v410 = vunpack.c.l.b16 %v341
      %v411 = vunpack.c.l.b16 %v342
      %v412 = vunpack.c.l.b16 %v343
      %v413 = vunpack.c.l.b16 %v344
      %v414 = vunpack.c.l.b16 %v345
      %v415 = vunpack.c.l.b16 %v346
      %v416 = vunpack.c.l.b16 %v347
      %v417 = vunpack.c.l.b16 %v348
      %v418 = vunpack.c.l.b16 %v349
      %v419 = vunpack.c.l.b16 %v350
      %v420 = vunpack.c.l.b16 %v351
      %v421 = vunpack.c.l.b16 %v352
      %v422 = vunpack.c.l.b16 %v353
      %v423 = vunpack.c.l.b16 %v354
      %v424 = vunpack.c.l.b16 %v355
      %v425 = vunpack.c.l.b16 %v356
      %v426 = vunpack.c.l.b16 %v357
      %v427 = vunpack.c.l.b16 %v358
      %v428 = vunpack.c.l.b16 %v359
      %v429 = vunpack.c.l.b16 %v360
      %v430 = vpack.c.b16 %v399, %v398
      %v431 = vpack.c.b16 %v401, %v400
      %v432 = vpack.c.b16 %v403, %v402
      %v433 = vpack.c.b16 %v405, %v404
      %v434 = vpack.c.b16 %v407, %v406
      %v435 = vpack.c.b16 %v409, %v408
      %v436 = vpack.c.b16 %v411, %v410
      %v437 = vpack.c.b16 %v413, %v412
      %v438 = vpack.c.b16 %v415, %v414
      %v439 = vpack.c.b16 %v417, %v416
      %v440 = vpack.c.b16 %v419, %v418
      %v441 = vpack.c.b16 %v421, %v420
      %v442 = vpack.c.b16 %v423, %v422
      %v443 = vpack.c.b16 %v425, %v424
      %v444 = vpack.c.b16 %v427, %v426
      %v445 = vpack.c.b16 %v429, %v428
      %v451 = vunpack.c.l.b16 %v361
      %v452 = vunpack.c.l.b16 %v362
      %v453 = vunpack.c.l.b16 %v363
      %v454 = vunpack.c.l.b16 %v364
      %v455 = vunpack.c.l.b16 %v365
      %v456 = vpack.c.b16 %v452, %v451
      %v457 = vpack.c.b16 %v454, %v453
      %v458 = vpack.c.b16 %v455, %v455
      %vm461 = vcmask 293888
      %v463 = vsel %vm461, %v430, 0
      %v466 = vsel %vm461, %v431, 0
      %v469 = vsel %vm461, %v432, 0
      %v472 = vsel %vm461, %v433, 0
      %v475 = vsel %vm461, %v434, 0
      %v478 = vsel %vm461, %v435, 0
      %v481 = vsel %vm461, %v436, 0
      %v484 = vsel %vm461, %v437, 0
      %v487 = vsel %vm461, %v438, 0
      %v490 = vsel %vm461, %v439, 0
      %v493 = vsel %vm461, %v440, 0
      %v496 = vsel %vm461, %v441, 0
      %v499 = vsel %vm461, %v442, 0
      %v502 = vsel %vm461, %v443, 0
      %v505 = vsel %vm461, %v444, 0
      %v508 = vsel %vm461, %v445, 0
      %vm510 = vcmask 1041408
      %v512 = vsel %vm510, %v458, 0
      %514 = vmatprep.subr.bf16.mxu0 0
      %515 = vmatpush1.bf16.msra.mxu0 %v456
      %516 = vmatprep.subr.bf16.mxu0 0
      %517 = vmatpush1.bf16.msra.mxu0 %v457
      %518 = vmatprep.subr.bf16.mxu0 0
      %519 = vmatpush1.bf16.msra.mxu0 %v512
      %520 = vmatprep.subr.bf16.mxu0 0
      %521 = vmatpush1.bf16.msra.mxu0 0
      %522 = vmatprep.subr.bf16.mxu0 0
      %523 = vmatpush1.bf16.msra.mxu0 0
      %524 = vmatprep.subr.bf16.mxu0 0
      %525 = vmatpush1.bf16.msra.mxu0 0
      %526 = vmatprep.subr.bf16.mxu0 0
      %527 = vmatpush1.bf16.msra.mxu0 0
      %528 = vmatprep.subr.bf16.mxu0 0
      %529 = vmatpush1.bf16.msra.mxu0 0
      %530 = vmatprep.subr.bf16.mxu0 0
      %531 = vmatpush1.bf16.msra.mxu0 0
      %532 = vmatprep.subr.bf16.mxu0 0
      %533 = vmatpush1.bf16.msra.mxu0 0
      %534 = vmatprep.subr.bf16.mxu0 0
      %535 = vmatpush1.bf16.msra.mxu0 0
      %536 = vmatprep.subr.bf16.mxu0 0
      %537 = vmatpush1.bf16.msra.mxu0 0
      %538 = vmatprep.subr.bf16.mxu0 0
      %539 = vmatpush1.bf16.msra.mxu0 0
      %540 = vmatprep.subr.bf16.mxu0 0
      %541 = vmatpush1.bf16.msra.mxu0 0
      %542 = vmatprep.subr.bf16.mxu0 0
      %543 = vmatpush1.bf16.msra.mxu0 0
      %544 = vmatprep.subr.bf16.mxu0 0
      %545 = vmatpush1.bf16.msra.mxu0 0
      %546 = vmatprep.mubr.bf16.mxu0 0
      %547 = vmatmul.mubr.bf16.gmra.mrb[0].mxu0 %v463
      %v548 = vpop.f32.mrb[0].mxu0
      %v549 = vadd.f32 0.0, %v548
      %v550 = vpop.f32.mrb[0].mxu0
      %v551 = vpop.f32.mrb[0].mxu0
      %v552 = vadd.f32 0.0, %v551
      %v553 = vpop.f32.mrb[0].mxu0
      %554 = vmatprep.mubr.bf16.mxu0 0
      %555 = vmatmul.mubr.bf16.gmra.mrb[0].mxu0 %v466
      %v556 = vpop.f32.mrb[0].mxu0
      %v557 = vadd.f32 0.0, %v556
      %v558 = vpop.f32.mrb[0].mxu0
      %v559 = vpop.f32.mrb[0].mxu0
      %v560 = vadd.f32 0.0, %v559
      %v561 = vpop.f32.mrb[0].mxu0
      %562 = vmatprep.mubr.bf16.mxu0 0
      %563 = vmatmul.mubr.bf16.gmra.mrb[0].mxu0 %v469
      %v564 = vpop.f32.mrb[0].mxu0
      %v565 = vadd.f32 0.0, %v564
      %v566 = vpop.f32.mrb[0].mxu0
      %v567 = vpop.f32.mrb[0].mxu0
      %v568 = vadd.f32 0.0, %v567
      %v569 = vpop.f32.mrb[0].mxu0
      %570 = vmatprep.mubr.bf16.mxu0 0
      %571 = vmatmul.mubr.bf16.gmra.mrb[0].mxu0 %v472
      %v572 = vpop.f32.mrb[0].mxu0
      %v573 = vadd.f32 0.0, %v572
      %v574 = vpop.f32.mrb[0].mxu0
      %v575 = vpop.f32.mrb[0].mxu0
      %v576 = vadd.f32 0.0, %v575
      %v577 = vpop.f32.mrb[0].mxu0
      %578 = vmatprep.mubr.bf16.mxu0 0
      %579 = vmatmul.mubr.bf16.gmra.mrb[0].mxu0 %v475
      %v580 = vpop.f32.mrb[0].mxu0
      %v581 = vadd.f32 0.0, %v580
      %v582 = vpop.f32.mrb[0].mxu0
      %v583 = vpop.f32.mrb[0].mxu0
      %v584 = vadd.f32 0.0, %v583
      %v585 = vpop.f32.mrb[0].mxu0
      %586 = vmatprep.mubr.bf16.mxu0 0
      %587 = vmatmul.mubr.bf16.gmra.mrb[0].mxu0 %v478
      %v588 = vpop.f32.mrb[0].mxu0
      %v589 = vadd.f32 0.0, %v588
      %v590 = vpop.f32.mrb[0].mxu0
      %v591 = vpop.f32.mrb[0].mxu0
      %v592 = vadd.f32 0.0, %v591
      %v593 = vpop.f32.mrb[0].mxu0
      %594 = vmatprep.mubr.bf16.mxu0 0
      %595 = vmatmul.mubr.bf16.gmra.mrb[0].mxu0 %v481
      %v596 = vpop.f32.mrb[0].mxu0
      %v597 = vadd.f32 0.0, %v596
      %v598 = vpop.f32.mrb[0].mxu0
      %v599 = vpop.f32.mrb[0].mxu0
      %v600 = vadd.f32 0.0, %v599
      %v601 = vpop.f32.mrb[0].mxu0
      %602 = vmatprep.mubr.bf16.mxu0 0
      %603 = vmatmul.mubr.bf16.gmra.mrb[0].mxu0 %v484
      %v604 = vpop.f32.mrb[0].mxu0
      %v605 = vadd.f32 0.0, %v604
      %v606 = vpop.f32.mrb[0].mxu0
      %v607 = vpop.f32.mrb[0].mxu0
      %v608 = vadd.f32 0.0, %v607
      %v609 = vpop.f32.mrb[0].mxu0
      %610 = vmatprep.mubr.bf16.mxu0 0
      %611 = vmatmul.mubr.bf16.gmra.mrb[0].mxu0 %v487
      %v612 = vpop.f32.mrb[0].mxu0
      %v613 = vadd.f32 0.0, %v612
      %v614 = vpop.f32.mrb[0].mxu0
      %v615 = vpop.f32.mrb[0].mxu0
      %v616 = vadd.f32 0.0, %v615
      %v617 = vpop.f32.mrb[0].mxu0
      %618 = vmatprep.mubr.bf16.mxu0 0
      %619 = vmatmul.mubr.bf16.gmra.mrb[0].mxu0 %v490
      %v620 = vpop.f32.mrb[0].mxu0
      %v621 = vadd.f32 0.0, %v620
      %v622 = vpop.f32.mrb[0].mxu0
      %v623 = vpop.f32.mrb[0].mxu0
      %v624 = vadd.f32 0.0, %v623
      %v625 = vpop.f32.mrb[0].mxu0
      %626 = vmatprep.mubr.bf16.mxu0 0
      %627 = vmatmul.mubr.bf16.gmra.mrb[0].mxu0 %v493
      %v628 = vpop.f32.mrb[0].mxu0
      %v629 = vadd.f32 0.0, %v628
      %v630 = vpop.f32.mrb[0].mxu0
      %v631 = vpop.f32.mrb[0].mxu0
      %v632 = vadd.f32 0.0, %v631
      %v633 = vpop.f32.mrb[0].mxu0
      %634 = vmatprep.mubr.bf16.mxu0 0
      %635 = vmatmul.mubr.bf16.gmra.mrb[0].mxu0 %v496
      %v636 = vpop.f32.mrb[0].mxu0
      %v637 = vadd.f32 0.0, %v636
      %v638 = vpop.f32.mrb[0].mxu0
      %v639 = vpop.f32.mrb[0].mxu0
      %v640 = vadd.f32 0.0, %v639
      %v641 = vpop.f32.mrb[0].mxu0
      %642 = vmatprep.mubr.bf16.mxu0 0
      %643 = vmatmul.mubr.bf16.gmra.mrb[0].mxu0 %v499
      %v644 = vpop.f32.mrb[0].mxu0
      %v645 = vadd.f32 0.0, %v644
      %v646 = vpop.f32.mrb[0].mxu0
      %v647 = vpop.f32.mrb[0].mxu0
      %v648 = vadd.f32 0.0, %v647
      %v649 = vpop.f32.mrb[0].mxu0
      %650 = vmatprep.mubr.bf16.mxu0 0
      %651 = vmatmul.mubr.bf16.gmra.mrb[0].mxu0 %v502
      %v652 = vpop.f32.mrb[0].mxu0
      %v653 = vadd.f32 0.0, %v652
      %v654 = vpop.f32.mrb[0].mxu0
      %v655 = vpop.f32.mrb[0].mxu0
      %v656 = vadd.f32 0.0, %v655
      %v657 = vpop.f32.mrb[0].mxu0
      %658 = vmatprep.mubr.bf16.mxu0 0
      %659 = vmatmul.mubr.bf16.gmra.mrb[0].mxu0 %v505
      %v660 = vpop.f32.mrb[0].mxu0
      %v661 = vadd.f32 0.0, %v660
      %v662 = vpop.f32.mrb[0].mxu0
      %v663 = vpop.f32.mrb[0].mxu0
      %v664 = vadd.f32 0.0, %v663
      %v665 = vpop.f32.mrb[0].mxu0
      %666 = vmatprep.mubr.bf16.mxu0 0
      %667 = vmatmul.mubr.bf16.gmra.mrb[0].mxu0 %v508
      %v668 = vpop.f32.mrb[0].mxu0
      %v669 = vadd.f32 0.0, %v668
      %v670 = vpop.f32.mrb[0].mxu0
      %v671 = vpop.f32.mrb[0].mxu0
      %v672 = vadd.f32 0.0, %v671
      %v673 = vpop.f32.mrb[0].mxu0
      %674 = vdwg.mxu0
      %v675 = vadd.f32 %v297, %v549
      %v676 = vadd.f32 %v298, %v552
      %v677 = vadd.f32 %v299, %v557
      %v678 = vadd.f32 %v300, %v560
      %v679 = vadd.f32 %v301, %v565
      %v680 = vadd.f32 %v302, %v568
      %v681 = vadd.f32 %v303, %v573
      %v682 = vadd.f32 %v304, %v576
      %v683 = vadd.f32 %v305, %v581
      %v684 = vadd.f32 %v306, %v584
      %v685 = vadd.f32 %v307, %v589
      %v686 = vadd.f32 %v308, %v592
      %v687 = vadd.f32 %v309, %v597
      %v688 = vadd.f32 %v310, %v600
      %v689 = vadd.f32 %v311, %v605
      %v690 = vadd.f32 %v312, %v608
      %v691 = vadd.f32 %v313, %v613
      %v692 = vadd.f32 %v314, %v616
      %v693 = vadd.f32 %v315, %v621
      %v694 = vadd.f32 %v316, %v624
      %v695 = vadd.f32 %v317, %v629
      %v696 = vadd.f32 %v318, %v632
      %v697 = vadd.f32 %v319, %v637
      %v698 = vadd.f32 %v320, %v640
      %v699 = vadd.f32 %v321, %v645
      %v700 = vadd.f32 %v322, %v648
      %v701 = vadd.f32 %v323, %v653
      %v702 = vadd.f32 %v324, %v656
      %v703 = vadd.f32 %v325, %v661
      %v704 = vadd.f32 %v326, %v664
      %v705 = vadd.f32 %v327, %v669
      %v706 = vadd.f32 %v328, %v672
      %vm707 = vcmask 31744
      %708 = vst.msk [vmem:[#allocation2] sm:$0xff] %vm707, %v675
      %709 = vst.msk [vmem:[#allocation2 + $0x8] sm:$0xff] %vm707, %v676
      %710 = vst.msk [vmem:[#allocation2 + $0x10] sm:$0xff] %vm707, %v677
      %711 = vst.msk [vmem:[#allocation2 + $0x18] sm:$0xff] %vm707, %v678
      %712 = vst.msk [vmem:[#allocation2 + $0x20] sm:$0xff] %vm707, %v679
      %713 = vst.msk [vmem:[#allocation2 + $0x28] sm:$0xff] %vm707, %v680
      %714 = vst.msk [vmem:[#allocation2 + $0x30] sm:$0xff] %vm707, %v681
      %715 = vst.msk [vmem:[#allocation2 + $0x38] sm:$0xff] %vm707, %v682
      %716 = vst.msk [vmem:[#allocation2 + $0x40] sm:$0xff] %vm707, %v683
      %717 = vst.msk [vmem:[#allocation2 + $0x48] sm:$0xff] %vm707, %v684
      %718 = vst.msk [vmem:[#allocation2 + $0x50] sm:$0xff] %vm707, %v685
      %719 = vst.msk [vmem:[#allocation2 + $0x58] sm:$0xff] %vm707, %v686
      %720 = vst.msk [vmem:[#allocation2 + $0x60] sm:$0xff] %vm707, %v687
      %721 = vst.msk [vmem:[#allocation2 + $0x68] sm:$0xff] %vm707, %v688
      %722 = vst.msk [vmem:[#allocation2 + $0x70] sm:$0xff] %vm707, %v689
      %723 = vst.msk [vmem:[#allocation2 + $0x78] sm:$0xff] %vm707, %v690
      %724 = vst.msk [vmem:[#allocation2 + $0x80] sm:$0xff] %vm707, %v691
      %725 = vst.msk [vmem:[#allocation2 + $0x88] sm:$0xff] %vm707, %v692
      %726 = vst.msk [vmem:[#allocation2 + $0x90] sm:$0xff] %vm707, %v693
      %727 = vst.msk [vmem:[#allocation2 + $0x98] sm:$0xff] %vm707, %v694
      %728 = vst.msk [vmem:[#allocation2 + $0xa0] sm:$0xff] %vm707, %v695
      %729 = vst.msk [vmem:[#allocation2 + $0xa8] sm:$0xff] %vm707, %v696
      %730 = vst.msk [vmem:[#allocation2 + $0xb0] sm:$0xff] %vm707, %v697
      %731 = vst.msk [vmem:[#allocation2 + $0xb8] sm:$0xff] %vm707, %v698
      %732 = vst.msk [vmem:[#allocation2 + $0xc0] sm:$0xff] %vm707, %v699
      %733 = vst.msk [vmem:[#allocation2 + $0xc8] sm:$0xff] %vm707, %v700
      %734 = vst.msk [vmem:[#allocation2 + $0xd0] sm:$0xff] %vm707, %v701
      %735 = vst.msk [vmem:[#allocation2 + $0xd8] sm:$0xff] %vm707, %v702
      %736 = vst.msk [vmem:[#allocation2 + $0xe0] sm:$0xff] %vm707, %v703
      %737 = vst.msk [vmem:[#allocation2 + $0xe8] sm:$0xff] %vm707, %v704
      %738 = vst.msk [vmem:[#allocation2 + $0xf0] sm:$0xff] %vm707, %v705
      %739 = vst.msk [vmem:[#allocation2 + $0xf8] sm:$0xff] %vm707, %v706
      // Predicated region
      $region37: #{residual_block_forward.13} parent=31 // pred_check
        %p740 = pneg %p260
      $region38: #{residual_block_forward.13} parent=31 // pred_check_branch
        %742 = sbr.rel (%p740) target = $region40
      $region39: #{residual_block_forward.13} parent=31 // pred_region
        %v743 = vld [vmem:[#allocation2] sm:$0xff]
        %v744 = vld [vmem:[#allocation2 + $0x8] sm:$0xff]
        %v745 = vld [vmem:[#allocation2 + $0x10] sm:$0xff]
        %v746 = vld [vmem:[#allocation2 + $0x18] sm:$0xff]
        %v747 = vld [vmem:[#allocation2 + $0x20] sm:$0xff]
        %v748 = vld [vmem:[#allocation2 + $0x28] sm:$0xff]
        %v749 = vld [vmem:[#allocation2 + $0x30] sm:$0xff]
        %v750 = vld [vmem:[#allocation2 + $0x38] sm:$0xff]
        %v751 = vld [vmem:[#allocation2 + $0x40] sm:$0xff]
        %v752 = vld [vmem:[#allocation2 + $0x48] sm:$0xff]
        %v753 = vld [vmem:[#allocation2 + $0x50] sm:$0xff]
        %v754 = vld [vmem:[#allocation2 + $0x58] sm:$0xff]
        %v755 = vld [vmem:[#allocation2 + $0x60] sm:$0xff]
        %v756 = vld [vmem:[#allocation2 + $0x68] sm:$0xff]
        %v757 = vld [vmem:[#allocation2 + $0x70] sm:$0xff]
        %v758 = vld [vmem:[#allocation2 + $0x78] sm:$0xff]
        %v759 = vld [vmem:[#allocation2 + $0x80] sm:$0xff]
        %v760 = vld [vmem:[#allocation2 + $0x88] sm:$0xff]
        %v761 = vld [vmem:[#allocation2 + $0x90] sm:$0xff]
        %v762 = vld [vmem:[#allocation2 + $0x98] sm:$0xff]
        %v763 = vld [vmem:[#allocation2 + $0xa0] sm:$0xff]
        %v764 = vld [vmem:[#allocation2 + $0xa8] sm:$0xff]
        %v765 = vld [vmem:[#allocation2 + $0xb0] sm:$0xff]
        %v766 = vld [vmem:[#allocation2 + $0xb8] sm:$0xff]
        %v767 = vld [vmem:[#allocation2 + $0xc0] sm:$0xff]
        %v768 = vld [vmem:[#allocation2 + $0xc8] sm:$0xff]
        %v769 = vld [vmem:[#allocation2 + $0xd0] sm:$0xff]
        %v770 = vld [vmem:[#allocation2 + $0xd8] sm:$0xff]
        %v771 = vld [vmem:[#allocation2 + $0xe0] sm:$0xff]
        %v772 = vld [vmem:[#allocation2 + $0xe8] sm:$0xff]
        %v773 = vld [vmem:[#allocation2 + $0xf0] sm:$0xff]
        %v774 = vld [vmem:[#allocation2 + $0xf8] sm:$0xff]
        %v775 = vld [vmem:[%s249] sm:$0x1]
        %v777 = vlaneseq
        %v778 = vshrl.u32 %v777, 7
        %v779 = vsub.s32 0, %v778
        %v780 = vrot.slane %v775, %v779
        %v782 = vadd.f32 %v743, %v780
        %v783 = vadd.f32 %v744, %v780
        %v784 = vadd.f32 %v745, %v780
        %v785 = vadd.f32 %v746, %v780
        %v786 = vadd.f32 %v747, %v780
        %v787 = vadd.f32 %v748, %v780
        %v788 = vadd.f32 %v749, %v780
        %v789 = vadd.f32 %v750, %v780
        %v790 = vadd.f32 %v751, %v780
        %v791 = vadd.f32 %v752, %v780
        %v792 = vadd.f32 %v753, %v780
        %v793 = vadd.f32 %v754, %v780
        %v794 = vadd.f32 %v755, %v780
        %v795 = vadd.f32 %v756, %v780
        %v796 = vadd.f32 %v757, %v780
        %v797 = vadd.f32 %v758, %v780
        %v798 = vadd.f32 %v759, %v780
        %v799 = vadd.f32 %v760, %v780
        %v800 = vadd.f32 %v761, %v780
        %v801 = vadd.f32 %v762, %v780
        %v802 = vadd.f32 %v763, %v780
        %v803 = vadd.f32 %v764, %v780
        %v804 = vadd.f32 %v765, %v780
        %v805 = vadd.f32 %v766, %v780
        %v806 = vadd.f32 %v767, %v780
        %v807 = vadd.f32 %v768, %v780
        %v808 = vadd.f32 %v769, %v780
        %v809 = vadd.f32 %v770, %v780
        %v810 = vadd.f32 %v771, %v780
        %v811 = vadd.f32 %v772, %v780
        %v812 = vadd.f32 %v773, %v780
        %v813 = vadd.f32 %v774, %v780
        %814 = vst.msk [vmem:[%s257] sm:$0xff] %vm707, %v782
        %815 = vst.msk [vmem:[%s257 + $0x8] sm:$0xff] %vm707, %v783
        %816 = vst.msk [vmem:[%s257 + $0x10] sm:$0xff] %vm707, %v784
        %817 = vst.msk [vmem:[%s257 + $0x18] sm:$0xff] %vm707, %v785
        %818 = vst.msk [vmem:[%s257 + $0x20] sm:$0xff] %vm707, %v786
        %819 = vst.msk [vmem:[%s257 + $0x28] sm:$0xff] %vm707, %v787
        %820 = vst.msk [vmem:[%s257 + $0x30] sm:$0xff] %vm707, %v788
        %821 = vst.msk [vmem:[%s257 + $0x38] sm:$0xff] %vm707, %v789
        %822 = vst.msk [vmem:[%s257 + $0x40] sm:$0xff] %vm707, %v790
        %823 = vst.msk [vmem:[%s257 + $0x48] sm:$0xff] %vm707, %v791
        %824 = vst.msk [vmem:[%s257 + $0x50] sm:$0xff] %vm707, %v792
        %825 = vst.msk [vmem:[%s257 + $0x58] sm:$0xff] %vm707, %v793
        %826 = vst.msk [vmem:[%s257 + $0x60] sm:$0xff] %vm707, %v794
        %827 = vst.msk [vmem:[%s257 + $0x68] sm:$0xff] %vm707, %v795
        %828 = vst.msk [vmem:[%s257 + $0x70] sm:$0xff] %vm707, %v796
        %829 = vst.msk [vmem:[%s257 + $0x78] sm:$0xff] %vm707, %v797
        %830 = vst.msk [vmem:[%s257 + $0x80] sm:$0xff] %vm707, %v798
        %831 = vst.msk [vmem:[%s257 + $0x88] sm:$0xff] %vm707, %v799
        %832 = vst.msk [vmem:[%s257 + $0x90] sm:$0xff] %vm707, %v800
        %833 = vst.msk [vmem:[%s257 + $0x98] sm:$0xff] %vm707, %v801
        %834 = vst.msk [vmem:[%s257 + $0xa0] sm:$0xff] %vm707, %v802
        %835 = vst.msk [vmem:[%s257 + $0xa8] sm:$0xff] %vm707, %v803
        %836 = vst.msk [vmem:[%s257 + $0xb0] sm:$0xff] %vm707, %v804
        %837 = vst.msk [vmem:[%s257 + $0xb8] sm:$0xff] %vm707, %v805
        %838 = vst.msk [vmem:[%s257 + $0xc0] sm:$0xff] %vm707, %v806
        %839 = vst.msk [vmem:[%s257 + $0xc8] sm:$0xff] %vm707, %v807
        %840 = vst.msk [vmem:[%s257 + $0xd0] sm:$0xff] %vm707, %v808
        %841 = vst.msk [vmem:[%s257 + $0xd8] sm:$0xff] %vm707, %v809
        %842 = vst.msk [vmem:[%s257 + $0xe0] sm:$0xff] %vm707, %v810
        %843 = vst.msk [vmem:[%s257 + $0xe8] sm:$0xff] %vm707, %v811
        %844 = vst.msk [vmem:[%s257 + $0xf0] sm:$0xff] %vm707, %v812
        %845 = vst.msk [vmem:[%s257 + $0xf8] sm:$0xff] %vm707, %v813
      $region40: #{residual_block_forward.13} parent=31 // pred_fallthru
        _
      %s846 = smul.u32 32, %s19
      %p847 = scmp.lt.s32.totalorder %s846, 63
      %s848 = scalar_select %p847, %s846, 63
      %p849 = scmp.lt.s32.totalorder %s20, 0
      %s850 = scalar_select %p849, %s20, 0
      %s851 = sadd.s32 %s850, %s848
      %s852 = smul.addr %s851, 8
      %s853 = scalar_lea.vmem %s3, %s852
      // Predicated region
      $region41: #{residual_block_forward.13} parent=31 // pred_check
        %p854 = pneg %p135
      $region42: #{residual_block_forward.13} parent=31 // pred_check_branch
        %856 = sbr.rel (%p854) target = $region44
      $region43: #{residual_block_forward.13} parent=31 // pred_region
        %s857 = smul.u32 32, %s19
      $region44: #{residual_block_forward.13} parent=31 // pred_fallthru
        _
    $region32: #{residual_block_forward.13} parent=5 // pred_fallthru
      _
    %p858 = scmp.le.s32.totalorder 2, %s9
    // Predicated region
    $region45: #{residual_block_forward.13} parent=5 // pred_check
      %p859 = pneg %p858
    $region46: #{residual_block_forward.13} parent=5 // pred_check_branch
      %861 = sbr.rel (%p859) target = $region48
    $region47: #{residual_block_forward.13} parent=5 // pred_region
      %s862 = ssub.s32 %s9, 2
      // Predicated region
      $region49: #{residual_block_forward.13} parent=47 // pred_check
        %p863 = pneg %p141
      $region50: #{residual_block_forward.13} parent=47 // pred_check_branch
        %865 = sbr.rel (%p863) target = $region52
      $region51: #{residual_block_forward.13} parent=47 // pred_region
        %s866 = smul.u32 32, %s22
        %p867 = scmp.lt.s32.totalorder %s866, 63
        %s868 = scalar_select %p867, %s866, 63
        %p869 = scmp.lt.s32.totalorder %s23, 0
        %s870 = scalar_select %p869, %s23, 0
        %s871 = sadd.s32 %s870, %s868
        %s872 = smul.addr %s871, 8
        %s873 = scalar_lea.vmem %s3, %s872
      $region52: #{residual_block_forward.13} parent=47 // pred_fallthru
        _
    $region48: #{residual_block_forward.13} parent=5 // pred_fallthru
      _
  $region6: #{residual_block_forward.13} parent=0 // loop_footer
    %s13 = sadd.s32 1, %s9
  $region7: #{residual_block_forward.13} parent=0 // loop_footer_branch
    %8 = sbr.rel target = $region3
  $region8: #{residual_block_forward.13} parent=0 // loop_exit
    _

// kernel: residual_block_forward.18
$region0: #{residual_block_forward.18}
  #allocation0 [shape = 'u32[]', space=smem, size = 0x4, offset = 0x4, fixed_abs, tag = 'smem constant byte address 0x4 - core index']
  #allocation1 [shape = 'u32[144,128]{1,0:T(1,128)}', space=vmem, size = 0x12000, scoped, tag = 'internal scratch']
  %s0 = inlined_call_operand.vmem [shape: f32[512,4], index: 0, kind: input, shape index: {}]
  %s1 = inlined_call_operand.vmem [shape: f32[1,4], index: 1, kind: input, shape index: {}]
  %s2 = inlined_call_operand.vmem [shape: f32[1,4], index: 2, kind: input, shape index: {}]
  %s3 = inlined_call_operand.vmem [shape: f32[1,4], index: 3, kind: input, shape index: {}]
  %s4 = inlined_call_operand.vmem [shape: f32[1,4], index: 4, kind: input, shape index: {}]
  %s5 = inlined_call_operand.vmem [shape: f32[1,4], index: 5, kind: input, shape index: {}]
  %s6 = inlined_call_operand.vmem [shape: f32[512,4], index: 6, kind: output, shape index: {}]
  %s7 = sld [smem:[#allocation0]]
  $region57: #{residual_block_forward.18} parent=0
    _
  %s9 = ssub.s32 1, %s7
  %s10 = scalar_select 0, %s9, %s7
  loop: start=0, step=1, limit=4
  $region2: #{residual_block_forward.18} parent=0 // loop_pre_header
    _
  $region3: #{residual_block_forward.18} parent=0 // loop_header
    %s12 = sphi 0, %s16
    %p13 = scmp.ge.s32.totalorder %s12, 4
    %s22 = sphi 0, %s24
    %s25 = sphi 0, %s22
    %s26 = sphi 0, %s25
    %s42 = sphi 0, %s26
    %s46 = sphi 0, %s46
    %s48 = sphi 0, %s46
    %s49 = sphi 0, %s48
    %s63 = sphi 0, %s49
    %s67 = sphi 0, %s67
    %s69 = sphi 0, %s67
    %s70 = sphi 0, %s69
    %s84 = sphi 0, %s70
    %s88 = sphi 0, %s88
    %s90 = sphi 0, %s88
    %s91 = sphi 0, %s90
    %s105 = sphi 0, %s91
    %s109 = sphi 0, %s109
    %s111 = sphi 0, %s109
    %s112 = sphi 0, %s111
    %s126 = sphi 0, %s112
    %s130 = sphi 0, %s130
    %s132 = sphi 0, %s130
    %s133 = sphi 0, %s132
    %s147 = sphi 0, %s133
    %s153 = sphi 0, %s155
    %s156 = sphi 0, %s153
    %s157 = sphi 0, %s156
    %s173 = sphi 0, %s157
  $region4: #{residual_block_forward.18} parent=0 // loop_header_branch
    %15 = sbr.rel (%p13) target = $region8
  $region5: #{residual_block_forward.18} parent=0 // loop_body
    %s17 = ssub.s32 %s12, 1
    %s18 = ssub.s32 %s12, 2
    %s19 = sadd.s32 %s12, 1
    %s20 = ssub.s32 %s12, %s19
    %p21 = scmp.eq.s32.totalorder %s20, 0
    %s23 = sadd.s32 %s22, 1
    %s24 = scalar_select %p21, %s22, %s23
    %p27 = pneg %p21
    %p28 = scmp.eq.s32.totalorder %s12, 1
    %p29 = por %p27, %p28
    %p30 = scmp.ne.s32.totalorder %s22, %s25
    %p31 = scmp.eq.s32.totalorder %s12, 0
    %p32 = por %p30, %p31
    %p33 = scmp.ne.s32.totalorder %s22, %s25
    %p34 = scmp.eq.s32.totalorder %s17, 1
    %p35 = por %p33, %p34
    %p36 = scmp.ne.s32.totalorder %s25, %s26
    %p37 = scmp.eq.s32.totalorder %s17, 0
    %p38 = por %p36, %p37
    %p39 = scmp.ne.s32.totalorder %s25, %s26
    %p40 = scmp.eq.s32.totalorder %s18, 1
    %p41 = por %p39, %p40
    %p43 = scmp.ne.s32.totalorder %s26, %s42
    %p44 = scmp.eq.s32.totalorder %s18, 0
    %p45 = por %p43, %p44
    %s47 = sadd.s32 %s46, 1
    %p50 = scmp.eq.s32.totalorder %s12, 1
    %p51 = scmp.ne.s32.totalorder %s46, %s48
    %p52 = scmp.eq.s32.totalorder %s12, 0
    %p53 = por %p51, %p52
    %p54 = scmp.ne.s32.totalorder %s46, %s48
    %p55 = scmp.eq.s32.totalorder %s17, 1
    %p56 = por %p54, %p55
    %p57 = scmp.ne.s32.totalorder %s48, %s49
    %p58 = scmp.eq.s32.totalorder %s17, 0
    %p59 = por %p57, %p58
    %p60 = scmp.ne.s32.totalorder %s48, %s49
    %p61 = scmp.eq.s32.totalorder %s18, 1
    %p62 = por %p60, %p61
    %p64 = scmp.ne.s32.totalorder %s49, %s63
    %p65 = scmp.eq.s32.totalorder %s18, 0
    %p66 = por %p64, %p65
    %s68 = sadd.s32 %s67, 1
    %p71 = scmp.eq.s32.totalorder %s12, 1
    %p72 = scmp.ne.s32.totalorder %s67, %s69
    %p73 = scmp.eq.s32.totalorder %s12, 0
    %p74 = por %p72, %p73
    %p75 = scmp.ne.s32.totalorder %s67, %s69
    %p76 = scmp.eq.s32.totalorder %s17, 1
    %p77 = por %p75, %p76
    %p78 = scmp.ne.s32.totalorder %s69, %s70
    %p79 = scmp.eq.s32.totalorder %s17, 0
    %p80 = por %p78, %p79
    %p81 = scmp.ne.s32.totalorder %s69, %s70
    %p82 = scmp.eq.s32.totalorder %s18, 1
    %p83 = por %p81, %p82
    %p85 = scmp.ne.s32.totalorder %s70, %s84
    %p86 = scmp.eq.s32.totalorder %s18, 0
    %p87 = por %p85, %p86
    %s89 = sadd.s32 %s88, 1
    %p92 = scmp.eq.s32.totalorder %s12, 1
    %p93 = scmp.ne.s32.totalorder %s88, %s90
    %p94 = scmp.eq.s32.totalorder %s12, 0
    %p95 = por %p93, %p94
    %p96 = scmp.ne.s32.totalorder %s88, %s90
    %p97 = scmp.eq.s32.totalorder %s17, 1
    %p98 = por %p96, %p97
    %p99 = scmp.ne.s32.totalorder %s90, %s91
    %p100 = scmp.eq.s32.totalorder %s17, 0
    %p101 = por %p99, %p100
    %p102 = scmp.ne.s32.totalorder %s90, %s91
    %p103 = scmp.eq.s32.totalorder %s18, 1
    %p104 = por %p102, %p103
    %p106 = scmp.ne.s32.totalorder %s91, %s105
    %p107 = scmp.eq.s32.totalorder %s18, 0
    %p108 = por %p106, %p107
    %s110 = sadd.s32 %s109, 1
    %p113 = scmp.eq.s32.totalorder %s12, 1
    %p114 = scmp.ne.s32.totalorder %s109, %s111
    %p115 = scmp.eq.s32.totalorder %s12, 0
    %p116 = por %p114, %p115
    %p117 = scmp.ne.s32.totalorder %s109, %s111
    %p118 = scmp.eq.s32.totalorder %s17, 1
    %p119 = por %p117, %p118
    %p120 = scmp.ne.s32.totalorder %s111, %s112
    %p121 = scmp.eq.s32.totalorder %s17, 0
    %p122 = por %p120, %p121
    %p123 = scmp.ne.s32.totalorder %s111, %s112
    %p124 = scmp.eq.s32.totalorder %s18, 1
    %p125 = por %p123, %p124
    %p127 = scmp.ne.s32.totalorder %s112, %s126
    %p128 = scmp.eq.s32.totalorder %s18, 0
    %p129 = por %p127, %p128
    %s131 = sadd.s32 %s130, 1
    %p134 = scmp.eq.s32.totalorder %s12, 1
    %p135 = scmp.ne.s32.totalorder %s130, %s132
    %p136 = scmp.eq.s32.totalorder %s12, 0
    %p137 = por %p135, %p136
    %p138 = scmp.ne.s32.totalorder %s130, %s132
    %p139 = scmp.eq.s32.totalorder %s17, 1
    %p140 = por %p138, %p139
    %p141 = scmp.ne.s32.totalorder %s132, %s133
    %p142 = scmp.eq.s32.totalorder %s17, 0
    %p143 = por %p141, %p142
    %p144 = scmp.ne.s32.totalorder %s132, %s133
    %p145 = scmp.eq.s32.totalorder %s18, 1
    %p146 = por %p144, %p145
    %p148 = scmp.ne.s32.totalorder %s133, %s147
    %p149 = scmp.eq.s32.totalorder %s18, 0
    %p150 = por %p148, %p149
    %s151 = ssub.s32 %s12, %s19
    %p152 = scmp.eq.s32.totalorder %s151, 0
    %s154 = sadd.s32 %s153, 1
    %s155 = scalar_select %p152, %s153, %s154
    %p158 = pneg %p152
    %p159 = scmp.eq.s32.totalorder %s12, 1
    %p160 = por %p158, %p159
    %p161 = scmp.ne.s32.totalorder %s153, %s156
    %p162 = scmp.eq.s32.totalorder %s12, 0
    %p163 = por %p161, %p162
    %p164 = scmp.ne.s32.totalorder %s153, %s156
    %p165 = scmp.eq.s32.totalorder %s17, 1
    %p166 = por %p164, %p165
    %p167 = scmp.ne.s32.totalorder %s156, %s157
    %p168 = scmp.eq.s32.totalorder %s17, 0
    %p169 = por %p167, %p168
    %p170 = scmp.ne.s32.totalorder %s156, %s157
    %p171 = scmp.eq.s32.totalorder %s18, 1
    %p172 = por %p170, %p171
    %p174 = scmp.ne.s32.totalorder %s157, %s173
    %p175 = scmp.eq.s32.totalorder %s18, 0
    %p176 = por %p174, %p175
    %p177 = scmp.le.s32.totalorder 1, %s12
    %p178 = scmp.lt.s32.totalorder %s12, 3
    %p179 = pnand %p177, %p178
    %p180 = pneg %p179
    // Predicated region
    $region9: #{residual_block_forward.18} parent=5 // pred_check
      _
    $region10: #{residual_block_forward.18} parent=5 // pred_check_branch
      %182 = sbr.rel (%p179) target = $region12
    $region11: #{residual_block_forward.18} parent=5 // pred_region
      %s183 = ssub.s32 %s12, 1
      // Predicated region
      $region13: #{residual_block_forward.18} parent=11 // pred_check
        %p184 = pneg %p59
      $region14: #{residual_block_forward.18} parent=11 // pred_check_branch
        %186 = sbr.rel (%p184) target = $region16
      $region15: #{residual_block_forward.18} parent=11 // pred_region
        _
      $region16: #{residual_block_forward.18} parent=11 // pred_fallthru
        _
      // Predicated region
      $region17: #{residual_block_forward.18} parent=11 // pred_check
        %p187 = pneg %p80
      $region18: #{residual_block_forward.18} parent=11 // pred_check_branch
        %189 = sbr.rel (%p187) target = $region20
      $region19: #{residual_block_forward.18} parent=11 // pred_region
        _
      $region20: #{residual_block_forward.18} parent=11 // pred_fallthru
        _
      // Predicated region
      $region21: #{residual_block_forward.18} parent=11 // pred_check
        %p190 = pneg %p101
      $region22: #{residual_block_forward.18} parent=11 // pred_check_branch
        %192 = sbr.rel (%p190) target = $region24
      $region23: #{residual_block_forward.18} parent=11 // pred_region
        _
      $region24: #{residual_block_forward.18} parent=11 // pred_fallthru
        _
      // Predicated region
      $region25: #{residual_block_forward.18} parent=11 // pred_check
        %p193 = pneg %p122
      $region26: #{residual_block_forward.18} parent=11 // pred_check_branch
        %195 = sbr.rel (%p193) target = $region28
      $region27: #{residual_block_forward.18} parent=11 // pred_region
        _
      $region28: #{residual_block_forward.18} parent=11 // pred_fallthru
        _
      // Predicated region
      $region29: #{residual_block_forward.18} parent=11 // pred_check
        %p196 = pneg %p143
      $region30: #{residual_block_forward.18} parent=11 // pred_check_branch
        %198 = sbr.rel (%p196) target = $region32
      $region31: #{residual_block_forward.18} parent=11 // pred_region
        _
      $region32: #{residual_block_forward.18} parent=11 // pred_fallthru
        _
    $region12: #{residual_block_forward.18} parent=5 // pred_fallthru
      _
    %p199 = scmp.lt.s32.totalorder %s12, 2
    // Predicated region
    $region33: #{residual_block_forward.18} parent=5 // pred_check
      %p200 = pneg %p199
    $region34: #{residual_block_forward.18} parent=5 // pred_check_branch
      %202 = sbr.rel (%p200) target = $region36
    $region35: #{residual_block_forward.18} parent=5 // pred_region
      // Predicated region
      $region37: #{residual_block_forward.18} parent=35 // pred_check
        %p203 = pneg %p32
      $region38: #{residual_block_forward.18} parent=35 // pred_check_branch
        %205 = sbr.rel (%p203) target = $region40
      $region39: #{residual_block_forward.18} parent=35 // pred_region
        %s206 = smul.u32 32, %s12
        %p207 = scmp.lt.s32.totalorder %s206, 63
        %s208 = scalar_select %p207, %s206, 63
        %s209 = smul.addr %s208, 8
        %s210 = scalar_lea.vmem %s0, %s209
        %s211 = smul.u32 32, %s12
      $region40: #{residual_block_forward.18} parent=35 // pred_fallthru
        _
    $region36: #{residual_block_forward.18} parent=5 // pred_fallthru
      _
    %p212 = scmp.le.s32.totalorder 1, %s12
    %p213 = scmp.lt.s32.totalorder %s12, 3
    %p214 = pnand %p212, %p213
    %p215 = pneg %p214
    // Predicated region
    $region41: #{residual_block_forward.18} parent=5 // pred_check
      _
    $region42: #{residual_block_forward.18} parent=5 // pred_check_branch
      %217 = sbr.rel (%p214) target = $region44
    $region43: #{residual_block_forward.18} parent=5 // pred_region
      %s218 = ssub.s32 %s12, 1
      %s219 = smul.u32 32, %s17
      %p220 = scmp.lt.s32.totalorder %s219, 63
      %s221 = scalar_select %p220, %s219, 63
      %s222 = smul.addr %s221, 8
      %s223 = scalar_lea.vmem %s0, %s222
      %p224 = pneg %p38
      %p225 = pneg %p35
      %p226 = pneg %p59
      %p227 = pneg %p56
      %p228 = pneg %p80
      %p229 = pneg %p77
      %p230 = pneg %p101
      %p231 = pneg %p98
      %p232 = pneg %p122
      %p233 = pneg %p119
      %p234 = pneg %p143
      %p235 = pneg %p140
      %p236 = pneg %p169
      %p237 = pneg %p166
      %s238 = smul.u32 32, %s17
      %p239 = scmp.lt.s32.totalorder %s238, 63
      %s240 = scalar_select %p239, %s238, 63
      %s241 = smul.addr %s240, 8
      %s242 = scalar_lea.vmem %s6, %s241
      %s243 = smul.u32 32, %s17
      %p244 = scmp.lt.s32.totalorder %s243, 63
      %s245 = scalar_select %p244, %s243, 63
      %s246 = smul.addr %s245, 8
      %s247 = scalar_lea.vmem %s0, %s246
      %s248 = smul.u32 32, %s17
      %s249 = smul.u32 32, %s17
      %p250 = scmp.lt.s32.totalorder %s249, 63
      %s251 = scalar_select %p250, %s249, 63
      %s252 = smul.addr %s251, 8
      %s253 = scalar_lea.vmem %s6, %s252
      %s254 = smul.u32 32, %s17
      %v255 = vld [vmem:[%s247] sm:$0xff]
      %v256 = vld [vmem:[%s247 + $0x8] sm:$0xff]
      %v257 = vld [vmem:[%s247 + $0x10] sm:$0xff]
      %v258 = vld [vmem:[%s247 + $0x18] sm:$0xff]
      %v259 = vld [vmem:[%s247 + $0x20] sm:$0xff]
      %v260 = vld [vmem:[%s247 + $0x28] sm:$0xff]
      %v261 = vld [vmem:[%s247 + $0x30] sm:$0xff]
      %v262 = vld [vmem:[%s247 + $0x38] sm:$0xff]
      %v263 = vld [vmem:[%s247 + $0x40] sm:$0xff]
      %v264 = vld [vmem:[%s247 + $0x48] sm:$0xff]
      %v265 = vld [vmem:[%s247 + $0x50] sm:$0xff]
      %v266 = vld [vmem:[%s247 + $0x58] sm:$0xff]
      %v267 = vld [vmem:[%s247 + $0x60] sm:$0xff]
      %v268 = vld [vmem:[%s247 + $0x68] sm:$0xff]
      %v269 = vld [vmem:[%s247 + $0x70] sm:$0xff]
      %v270 = vld [vmem:[%s247 + $0x78] sm:$0xff]
      %v271 = vld [vmem:[%s247 + $0x80] sm:$0xff]
      %v272 = vld [vmem:[%s247 + $0x88] sm:$0xff]
      %v273 = vld [vmem:[%s247 + $0x90] sm:$0xff]
      %v274 = vld [vmem:[%s247 + $0x98] sm:$0xff]
      %v275 = vld [vmem:[%s247 + $0xa0] sm:$0xff]
      %v276 = vld [vmem:[%s247 + $0xa8] sm:$0xff]
      %v277 = vld [vmem:[%s247 + $0xb0] sm:$0xff]
      %v278 = vld [vmem:[%s247 + $0xb8] sm:$0xff]
      %v279 = vld [vmem:[%s247 + $0xc0] sm:$0xff]
      %v280 = vld [vmem:[%s247 + $0xc8] sm:$0xff]
      %v281 = vld [vmem:[%s247 + $0xd0] sm:$0xff]
      %v282 = vld [vmem:[%s247 + $0xd8] sm:$0xff]
      %v283 = vld [vmem:[%s247 + $0xe0] sm:$0xff]
      %v284 = vld [vmem:[%s247 + $0xe8] sm:$0xff]
      %v285 = vld [vmem:[%s247 + $0xf0] sm:$0xff]
      %v286 = vld [vmem:[%s247 + $0xf8] sm:$0xff]
      %v287 = vld [vmem:[%s1] sm:$0x1]
      %v289 = vlaneseq
      %v290 = vshrl.u32 %v289, 7
      %v291 = vsub.s32 0, %v290
      %v292 = vrot.slane %v287, %v291
      %v294 = vsub.f32 %v255, %v292
      %v295 = vsub.f32 %v256, %v292
      %v296 = vsub.f32 %v257, %v292
      %v297 = vsub.f32 %v258, %v292
      %v298 = vsub.f32 %v259, %v292
      %v299 = vsub.f32 %v260, %v292
      %v300 = vsub.f32 %v261, %v292
      %v301 = vsub.f32 %v262, %v292
      %v302 = vsub.f32 %v263, %v292
      %v303 = vsub.f32 %v264, %v292
      %v304 = vsub.f32 %v265, %v292
      %v305 = vsub.f32 %v266, %v292
      %v306 = vsub.f32 %v267, %v292
      %v307 = vsub.f32 %v268, %v292
      %v308 = vsub.f32 %v269, %v292
      %v309 = vsub.f32 %v270, %v292
      %v310 = vsub.f32 %v271, %v292
      %v311 = vsub.f32 %v272, %v292
      %v312 = vsub.f32 %v273, %v292
      %v313 = vsub.f32 %v274, %v292
      %v314 = vsub.f32 %v275, %v292
      %v315 = vsub.f32 %v276, %v292
      %v316 = vsub.f32 %v277, %v292
      %v317 = vsub.f32 %v278, %v292
      %v318 = vsub.f32 %v279, %v292
      %v319 = vsub.f32 %v280, %v292
      %v320 = vsub.f32 %v281, %v292
      %v321 = vsub.f32 %v282, %v292
      %v322 = vsub.f32 %v283, %v292
      %v323 = vsub.f32 %v284, %v292
      %v324 = vsub.f32 %v285, %v292
      %v325 = vsub.f32 %v286, %v292
      %v326 = vld [vmem:[%s2] sm:$0x1]
      %v327 = vadd.f32 %v326, 1e-05
      %v328 = vrsqrt.pop %v327
      %v330 = vlaneseq
      %v331 = vshrl.u32 %v330, 7
      %v332 = vsub.s32 0, %v331
      %v333 = vrot.slane %v328, %v332
      %v335 = vmul.f32 %v294, %v333
      %v336 = vmul.f32 %v295, %v333
      %v337 = vmul.f32 %v296, %v333
      %v338 = vmul.f32 %v297, %v333
      %v339 = vmul.f32 %v298, %v333
      %v340 = vmul.f32 %v299, %v333
      %v341 = vmul.f32 %v300, %v333
      %v342 = vmul.f32 %v301, %v333
      %v343 = vmul.f32 %v302, %v333
      %v344 = vmul.f32 %v303, %v333
      %v345 = vmul.f32 %v304, %v333
      %v346 = vmul.f32 %v305, %v333
      %v347 = vmul.f32 %v306, %v333
      %v348 = vmul.f32 %v307, %v333
      %v349 = vmul.f32 %v308, %v333
      %v350 = vmul.f32 %v309, %v333
      %v351 = vmul.f32 %v310, %v333
      %v352 = vmul.f32 %v311, %v333
      %v353 = vmul.f32 %v312, %v333
      %v354 = vmul.f32 %v313, %v333
      %v355 = vmul.f32 %v314, %v333
      %v356 = vmul.f32 %v315, %v333
      %v357 = vmul.f32 %v316, %v333
      %v358 = vmul.f32 %v317, %v333
      %v359 = vmul.f32 %v318, %v333
      %v360 = vmul.f32 %v319, %v333
      %v361 = vmul.f32 %v320, %v333
      %v362 = vmul.f32 %v321, %v333
      %v363 = vmul.f32 %v322, %v333
      %v364 = vmul.f32 %v323, %v333
      %v365 = vmul.f32 %v324, %v333
      %v366 = vmul.f32 %v325, %v333
      %v367 = vld [vmem:[%s3] sm:$0x1]
      %v369 = vlaneseq
      %v370 = vshrl.u32 %v369, 7
      %v371 = vsub.s32 0, %v370
      %v372 = vrot.slane %v367, %v371
      %v374 = vmul.f32 %v335, %v372
      %v375 = vmul.f32 %v336, %v372
      %v376 = vmul.f32 %v337, %v372
      %v377 = vmul.f32 %v338, %v372
      %v378 = vmul.f32 %v339, %v372
      %v379 = vmul.f32 %v340, %v372
      %v380 = vmul.f32 %v341, %v372
      %v381 = vmul.f32 %v342, %v372
      %v382 = vmul.f32 %v343, %v372
      %v383 = vmul.f32 %v344, %v372
      %v384 = vmul.f32 %v345, %v372
      %v385 = vmul.f32 %v346, %v372
      %v386 = vmul.f32 %v347, %v372
      %v387 = vmul.f32 %v348, %v372
      %v388 = vmul.f32 %v349, %v372
      %v389 = vmul.f32 %v350, %v372
      %v390 = vmul.f32 %v351, %v372
      %v391 = vmul.f32 %v352, %v372
      %v392 = vmul.f32 %v353, %v372
      %v393 = vmul.f32 %v354, %v372
      %v394 = vmul.f32 %v355, %v372
      %v395 = vmul.f32 %v356, %v372
      %v396 = vmul.f32 %v357, %v372
      %v397 = vmul.f32 %v358, %v372
      %v398 = vmul.f32 %v359, %v372
      %v399 = vmul.f32 %v360, %v372
      %v400 = vmul.f32 %v361, %v372
      %v401 = vmul.f32 %v362, %v372
      %v402 = vmul.f32 %v363, %v372
      %v403 = vmul.f32 %v364, %v372
      %v404 = vmul.f32 %v365, %v372
      %v405 = vmul.f32 %v366, %v372
      %v406 = vld [vmem:[%s4] sm:$0x1]
      %v408 = vlaneseq
      %v409 = vshrl.u32 %v408, 7
      %v410 = vsub.s32 0, %v409
      %v411 = vrot.slane %v406, %v410
      %v413 = vadd.f32 %v374, %v411
      %v414 = vadd.f32 %v375, %v411
      %v415 = vadd.f32 %v376, %v411
      %v416 = vadd.f32 %v377, %v411
      %v417 = vadd.f32 %v378, %v411
      %v418 = vadd.f32 %v379, %v411
      %v419 = vadd.f32 %v380, %v411
      %v420 = vadd.f32 %v381, %v411
      %v421 = vadd.f32 %v382, %v411
      %v422 = vadd.f32 %v383, %v411
      %v423 = vadd.f32 %v384, %v411
      %v424 = vadd.f32 %v385, %v411
      %v425 = vadd.f32 %v386, %v411
      %v426 = vadd.f32 %v387, %v411
      %v427 = vadd.f32 %v388, %v411
      %v428 = vadd.f32 %v389, %v411
      %v429 = vadd.f32 %v390, %v411
      %v430 = vadd.f32 %v391, %v411
      %v431 = vadd.f32 %v392, %v411
      %v432 = vadd.f32 %v393, %v411
      %v433 = vadd.f32 %v394, %v411
      %v434 = vadd.f32 %v395, %v411
      %v435 = vadd.f32 %v396, %v411
      %v436 = vadd.f32 %v397, %v411
      %v437 = vadd.f32 %v398, %v411
      %v438 = vadd.f32 %v399, %v411
      %v439 = vadd.f32 %v400, %v411
      %v440 = vadd.f32 %v401, %v411
      %v441 = vadd.f32 %v402, %v411
      %v442 = vadd.f32 %v403, %v411
      %v443 = vadd.f32 %v404, %v411
      %v444 = vadd.f32 %v405, %v411
      %vm445 = vcmask 31744
      %446 = vst.msk [vmem:[%s253] sm:$0xff] %vm445, %v413
      %447 = vst.msk [vmem:[%s253 + $0x8] sm:$0xff] %vm445, %v414
      %448 = vst.msk [vmem:[%s253 + $0x10] sm:$0xff] %vm445, %v415
      %449 = vst.msk [vmem:[%s253 + $0x18] sm:$0xff] %vm445, %v416
      %450 = vst.msk [vmem:[%s253 + $0x20] sm:$0xff] %vm445, %v417
      %451 = vst.msk [vmem:[%s253 + $0x28] sm:$0xff] %vm445, %v418
      %452 = vst.msk [vmem:[%s253 + $0x30] sm:$0xff] %vm445, %v419
      %453 = vst.msk [vmem:[%s253 + $0x38] sm:$0xff] %vm445, %v420
      %454 = vst.msk [vmem:[%s253 + $0x40] sm:$0xff] %vm445, %v421
      %455 = vst.msk [vmem:[%s253 + $0x48] sm:$0xff] %vm445, %v422
      %456 = vst.msk [vmem:[%s253 + $0x50] sm:$0xff] %vm445, %v423
      %457 = vst.msk [vmem:[%s253 + $0x58] sm:$0xff] %vm445, %v424
      %458 = vst.msk [vmem:[%s253 + $0x60] sm:$0xff] %vm445, %v425
      %459 = vst.msk [vmem:[%s253 + $0x68] sm:$0xff] %vm445, %v426
      %460 = vst.msk [vmem:[%s253 + $0x70] sm:$0xff] %vm445, %v427
      %461 = vst.msk [vmem:[%s253 + $0x78] sm:$0xff] %vm445, %v428
      %462 = vst.msk [vmem:[%s253 + $0x80] sm:$0xff] %vm445, %v429
      %463 = vst.msk [vmem:[%s253 + $0x88] sm:$0xff] %vm445, %v430
      %464 = vst.msk [vmem:[%s253 + $0x90] sm:$0xff] %vm445, %v431
      %465 = vst.msk [vmem:[%s253 + $0x98] sm:$0xff] %vm445, %v432
      %466 = vst.msk [vmem:[%s253 + $0xa0] sm:$0xff] %vm445, %v433
      %467 = vst.msk [vmem:[%s253 + $0xa8] sm:$0xff] %vm445, %v434
      %468 = vst.msk [vmem:[%s253 + $0xb0] sm:$0xff] %vm445, %v435
      %469 = vst.msk [vmem:[%s253 + $0xb8] sm:$0xff] %vm445, %v436
      %470 = vst.msk [vmem:[%s253 + $0xc0] sm:$0xff] %vm445, %v437
      %471 = vst.msk [vmem:[%s253 + $0xc8] sm:$0xff] %vm445, %v438
      %472 = vst.msk [vmem:[%s253 + $0xd0] sm:$0xff] %vm445, %v439
      %473 = vst.msk [vmem:[%s253 + $0xd8] sm:$0xff] %vm445, %v440
      %474 = vst.msk [vmem:[%s253 + $0xe0] sm:$0xff] %vm445, %v441
      %475 = vst.msk [vmem:[%s253 + $0xe8] sm:$0xff] %vm445, %v442
      %476 = vst.msk [vmem:[%s253 + $0xf0] sm:$0xff] %vm445, %v443
      %477 = vst.msk [vmem:[%s253 + $0xf8] sm:$0xff] %vm445, %v444
      %s478 = smul.u32 32, %s17
      %p479 = scmp.lt.s32.totalorder %s478, 63
      %s480 = scalar_select %p479, %s478, 63
      %s481 = smul.addr %s480, 8
      %s482 = scalar_lea.vmem %s6, %s481
      // Predicated region
      $region45: #{residual_block_forward.18} parent=43 // pred_check
        %p483 = pneg %p166
      $region46: #{residual_block_forward.18} parent=43 // pred_check_branch
        %485 = sbr.rel (%p483) target = $region48
      $region47: #{residual_block_forward.18} parent=43 // pred_region
        %s486 = smul.u32 32, %s17
      $region48: #{residual_block_forward.18} parent=43 // pred_fallthru
        _
    $region44: #{residual_block_forward.18} parent=5 // pred_fallthru
      _
    %p487 = scmp.le.s32.totalorder 2, %s12
    // Predicated region
    $region49: #{residual_block_forward.18} parent=5 // pred_check
      %p488 = pneg %p487
    $region50: #{residual_block_forward.18} parent=5 // pred_check_branch
      %490 = sbr.rel (%p488) target = $region52
    $region51: #{residual_block_forward.18} parent=5 // pred_region
      %s491 = ssub.s32 %s12, 2
      // Predicated region
      $region53: #{residual_block_forward.18} parent=51 // pred_check
        %p492 = pneg %p172
      $region54: #{residual_block_forward.18} parent=51 // pred_check_branch
        %494 = sbr.rel (%p492) target = $region56
      $region55: #{residual_block_forward.18} parent=51 // pred_region
        %s495 = smul.u32 32, %s18
        %p496 = scmp.lt.s32.totalorder %s495, 63
        %s497 = scalar_select %p496, %s495, 63
        %s498 = smul.addr %s497, 8
        %s499 = scalar_lea.vmem %s6, %s498
      $region56: #{residual_block_forward.18} parent=51 // pred_fallthru
        _
    $region52: #{residual_block_forward.18} parent=5 // pred_fallthru
      _
  $region6: #{residual_block_forward.18} parent=0 // loop_footer
    %s16 = sadd.s32 1, %s12
  $region7: #{residual_block_forward.18} parent=0 // loop_footer_branch
    %11 = sbr.rel target = $region3
  $region8: #{residual_block_forward.18} parent=0 // loop_exit
    _

// kernel: residual_block_forward.20
$region0: #{residual_block_forward.20}
  #allocation0 [shape = 'u32[]', space=smem, size = 0x4, offset = 0x4, fixed_abs, tag = 'smem constant byte address 0x4 - core index']
  #allocation1 [shape = 'u32[144,128]{1,0:T(1,128)}', space=vmem, size = 0x12000, scoped, tag = 'internal scratch']
  %s0 = inlined_call_operand.vmem [shape: f32[2,256,4], index: 0, kind: input, shape index: {}]
  %s1 = inlined_call_operand.vmem [shape: f32[2,256,4], index: 1, kind: output, shape index: {}]
  %s2 = sld [smem:[#allocation0]]
  $region37: #{residual_block_forward.20} parent=0
    _
  %s4 = ssub.s32 1, %s2
  %s5 = scalar_select 0, %s4, %s2
  loop: start=0, step=1, limit=4
  $region2: #{residual_block_forward.20} parent=0 // loop_pre_header
    _
  $region3: #{residual_block_forward.20} parent=0 // loop_header
    %s7 = sphi 0, %s11
    %p8 = scmp.ge.s32.totalorder %s7, 4
    %s17 = sphi 0, %s19
    %s20 = sphi 0, %s17
    %s21 = sphi 0, %s20
    %s37 = sphi 0, %s21
    %s43 = sphi 0, %s45
    %s46 = sphi 0, %s43
    %s47 = sphi 0, %s46
    %s63 = sphi 0, %s47
  $region4: #{residual_block_forward.20} parent=0 // loop_header_branch
    %10 = sbr.rel (%p8) target = $region8
  $region5: #{residual_block_forward.20} parent=0 // loop_body
    %s12 = ssub.s32 %s7, 1
    %s13 = ssub.s32 %s7, 2
    %s14 = sadd.s32 %s7, 1
    %s15 = ssub.s32 %s7, %s14
    %p16 = scmp.eq.s32.totalorder %s15, 0
    %s18 = sadd.s32 %s17, 1
    %s19 = scalar_select %p16, %s17, %s18
    %p22 = pneg %p16
    %p23 = scmp.eq.s32.totalorder %s7, 1
    %p24 = por %p22, %p23
    %p25 = scmp.ne.s32.totalorder %s17, %s20
    %p26 = scmp.eq.s32.totalorder %s7, 0
    %p27 = por %p25, %p26
    %p28 = scmp.ne.s32.totalorder %s17, %s20
    %p29 = scmp.eq.s32.totalorder %s12, 1
    %p30 = por %p28, %p29
    %p31 = scmp.ne.s32.totalorder %s20, %s21
    %p32 = scmp.eq.s32.totalorder %s12, 0
    %p33 = por %p31, %p32
    %p34 = scmp.ne.s32.totalorder %s20, %s21
    %p35 = scmp.eq.s32.totalorder %s13, 1
    %p36 = por %p34, %p35
    %p38 = scmp.ne.s32.totalorder %s21, %s37
    %p39 = scmp.eq.s32.totalorder %s13, 0
    %p40 = por %p38, %p39
    %s41 = ssub.s32 %s7, %s14
    %p42 = scmp.eq.s32.totalorder %s41, 0
    %s44 = sadd.s32 %s43, 1
    %s45 = scalar_select %p42, %s43, %s44
    %p48 = pneg %p42
    %p49 = scmp.eq.s32.totalorder %s7, 1
    %p50 = por %p48, %p49
    %p51 = scmp.ne.s32.totalorder %s43, %s46
    %p52 = scmp.eq.s32.totalorder %s7, 0
    %p53 = por %p51, %p52
    %p54 = scmp.ne.s32.totalorder %s43, %s46
    %p55 = scmp.eq.s32.totalorder %s12, 1
    %p56 = por %p54, %p55
    %p57 = scmp.ne.s32.totalorder %s46, %s47
    %p58 = scmp.eq.s32.totalorder %s12, 0
    %p59 = por %p57, %p58
    %p60 = scmp.ne.s32.totalorder %s46, %s47
    %p61 = scmp.eq.s32.totalorder %s13, 1
    %p62 = por %p60, %p61
    %p64 = scmp.ne.s32.totalorder %s47, %s63
    %p65 = scmp.eq.s32.totalorder %s13, 0
    %p66 = por %p64, %p65
    %p67 = scmp.le.s32.totalorder 1, %s7
    %p68 = scmp.lt.s32.totalorder %s7, 3
    %p69 = pnand %p67, %p68
    %p70 = pneg %p69
    // Predicated region
    $region9: #{residual_block_forward.20} parent=5 // pred_check
      _
    $region10: #{residual_block_forward.20} parent=5 // pred_check_branch
      %72 = sbr.rel (%p69) target = $region12
    $region11: #{residual_block_forward.20} parent=5 // pred_region
      %s73 = ssub.s32 %s7, 1
    $region12: #{residual_block_forward.20} parent=5 // pred_fallthru
      _
    %p74 = scmp.lt.s32.totalorder %s7, 2
    // Predicated region
    $region13: #{residual_block_forward.20} parent=5 // pred_check
      %p75 = pneg %p74
    $region14: #{residual_block_forward.20} parent=5 // pred_check_branch
      %77 = sbr.rel (%p75) target = $region16
    $region15: #{residual_block_forward.20} parent=5 // pred_region
      // Predicated region
      $region17: #{residual_block_forward.20} parent=15 // pred_check
        %p78 = pneg %p27
      $region18: #{residual_block_forward.20} parent=15 // pred_check_branch
        %80 = sbr.rel (%p78) target = $region20
      $region19: #{residual_block_forward.20} parent=15 // pred_region
        %p81 = scmp.lt.s32.totalorder %s7, 1
        %s82 = scalar_select %p81, %s7, 1
        %s83 = smul.addr %s82, 32
        %s84 = smul.addr %s83, 8
        %s85 = scalar_lea.vmem %s0, %s84
      $region20: #{residual_block_forward.20} parent=15 // pred_fallthru
        _
    $region16: #{residual_block_forward.20} parent=5 // pred_fallthru
      _
    %p86 = scmp.le.s32.totalorder 1, %s7
    %p87 = scmp.lt.s32.totalorder %s7, 3
    %p88 = pnand %p86, %p87
    %p89 = pneg %p88
    // Predicated region
    $region21: #{residual_block_forward.20} parent=5 // pred_check
      _
    $region22: #{residual_block_forward.20} parent=5 // pred_check_branch
      %91 = sbr.rel (%p88) target = $region24
    $region23: #{residual_block_forward.20} parent=5 // pred_region
      %s92 = ssub.s32 %s7, 1
      %p93 = scmp.lt.s32.totalorder %s12, 1
      %s94 = scalar_select %p93, %s12, 1
      %s95 = smul.addr %s94, 32
      %s96 = smul.addr %s95, 8
      %s97 = scalar_lea.vmem %s0, %s96
      %p98 = pneg %p33
      %p99 = pneg %p30
      %p100 = pneg %p59
      %p101 = pneg %p56
      %p102 = scmp.lt.s32.totalorder %s12, 1
      %s103 = scalar_select %p102, %s12, 1
      %s104 = smul.addr %s103, 32
      %s105 = smul.addr %s104, 8
      %s106 = scalar_lea.vmem %s1, %s105
      %p107 = scmp.lt.s32.totalorder %s12, 1
      %s108 = scalar_select %p107, %s12, 1
      %s109 = smul.addr %s108, 32
      %s110 = smul.addr %s109, 8
      %s111 = scalar_lea.vmem %s0, %s110
      %p112 = scmp.lt.s32.totalorder %s12, 1
      %s113 = scalar_select %p112, %s12, 1
      %s114 = smul.addr %s113, 32
      %s115 = smul.addr %s114, 8
      %s116 = scalar_lea.vmem %s1, %s115
      %v117 = vld [vmem:[%s111] sm:$0xff]
      %v118 = vld [vmem:[%s111 + $0x8] sm:$0xff]
      %v119 = vld [vmem:[%s111 + $0x10] sm:$0xff]
      %v120 = vld [vmem:[%s111 + $0x18] sm:$0xff]
      %v121 = vld [vmem:[%s111 + $0x20] sm:$0xff]
      %v122 = vld [vmem:[%s111 + $0x28] sm:$0xff]
      %v123 = vld [vmem:[%s111 + $0x30] sm:$0xff]
      %v124 = vld [vmem:[%s111 + $0x38] sm:$0xff]
      %v125 = vld [vmem:[%s111 + $0x40] sm:$0xff]
      %v126 = vld [vmem:[%s111 + $0x48] sm:$0xff]
      %v127 = vld [vmem:[%s111 + $0x50] sm:$0xff]
      %v128 = vld [vmem:[%s111 + $0x58] sm:$0xff]
      %v129 = vld [vmem:[%s111 + $0x60] sm:$0xff]
      %v130 = vld [vmem:[%s111 + $0x68] sm:$0xff]
      %v131 = vld [vmem:[%s111 + $0x70] sm:$0xff]
      %v132 = vld [vmem:[%s111 + $0x78] sm:$0xff]
      %v133 = vld [vmem:[%s111 + $0x80] sm:$0xff]
      %v134 = vld [vmem:[%s111 + $0x88] sm:$0xff]
      %v135 = vld [vmem:[%s111 + $0x90] sm:$0xff]
      %v136 = vld [vmem:[%s111 + $0x98] sm:$0xff]
      %v137 = vld [vmem:[%s111 + $0xa0] sm:$0xff]
      %v138 = vld [vmem:[%s111 + $0xa8] sm:$0xff]
      %v139 = vld [vmem:[%s111 + $0xb0] sm:$0xff]
      %v140 = vld [vmem:[%s111 + $0xb8] sm:$0xff]
      %v141 = vld [vmem:[%s111 + $0xc0] sm:$0xff]
      %v142 = vld [vmem:[%s111 + $0xc8] sm:$0xff]
      %v143 = vld [vmem:[%s111 + $0xd0] sm:$0xff]
      %v144 = vld [vmem:[%s111 + $0xd8] sm:$0xff]
      %v145 = vld [vmem:[%s111 + $0xe0] sm:$0xff]
      %v146 = vld [vmem:[%s111 + $0xe8] sm:$0xff]
      %v147 = vld [vmem:[%s111 + $0xf0] sm:$0xff]
      %v148 = vld [vmem:[%s111 + $0xf8] sm:$0xff]
      %v149 = vmax.f32 %v117, 0.0
      %v150 = vmax.f32 %v118, 0.0
      %v151 = vmax.f32 %v119, 0.0
      %v152 = vmax.f32 %v120, 0.0
      %v153 = vmax.f32 %v121, 0.0
      %v154 = vmax.f32 %v122, 0.0
      %v155 = vmax.f32 %v123, 0.0
      %v156 = vmax.f32 %v124, 0.0
      %v157 = vmax.f32 %v125, 0.0
      %v158 = vmax.f32 %v126, 0.0
      %v159 = vmax.f32 %v127, 0.0
      %v160 = vmax.f32 %v128, 0.0
      %v161 = vmax.f32 %v129, 0.0
      %v162 = vmax.f32 %v130, 0.0
      %v163 = vmax.f32 %v131, 0.0
      %v164 = vmax.f32 %v132, 0.0
      %v165 = vmax.f32 %v133, 0.0
      %v166 = vmax.f32 %v134, 0.0
      %v167 = vmax.f32 %v135, 0.0
      %v168 = vmax.f32 %v136, 0.0
      %v169 = vmax.f32 %v137, 0.0
      %v170 = vmax.f32 %v138, 0.0
      %v171 = vmax.f32 %v139, 0.0
      %v172 = vmax.f32 %v140, 0.0
      %v173 = vmax.f32 %v141, 0.0
      %v174 = vmax.f32 %v142, 0.0
      %v175 = vmax.f32 %v143, 0.0
      %v176 = vmax.f32 %v144, 0.0
      %v177 = vmax.f32 %v145, 0.0
      %v178 = vmax.f32 %v146, 0.0
      %v179 = vmax.f32 %v147, 0.0
      %v180 = vmax.f32 %v148, 0.0
      %vm181 = vcmask 31744
      %v182 = vsel %vm181, %v149, 0.0
      %v183 = vsel %vm181, %v150, 0.0
      %v184 = vadd.f32 %v182, %v183
      %v185 = vsel %vm181, %v151, 0.0
      %v186 = vadd.f32 %v184, %v185
      %v187 = vsel %vm181, %v152, 0.0
      %v188 = vadd.f32 %v186, %v187
      %v189 = vsel %vm181, %v153, 0.0
      %v190 = vadd.f32 %v188, %v189
      %v191 = vsel %vm181, %v154, 0.0
      %v192 = vadd.f32 %v190, %v191
      %v193 = vsel %vm181, %v155, 0.0
      %v194 = vadd.f32 %v192, %v193
      %v195 = vsel %vm181, %v156, 0.0
      %v196 = vadd.f32 %v194, %v195
      %v197 = vsel %vm181, %v157, 0.0
      %v198 = vadd.f32 %v196, %v197
      %v199 = vsel %vm181, %v158, 0.0
      %v200 = vadd.f32 %v198, %v199
      %v201 = vsel %vm181, %v159, 0.0
      %v202 = vadd.f32 %v200, %v201
      %v203 = vsel %vm181, %v160, 0.0
      %v204 = vadd.f32 %v202, %v203
      %v205 = vsel %vm181, %v161, 0.0
      %v206 = vadd.f32 %v204, %v205
      %v207 = vsel %vm181, %v162, 0.0
      %v208 = vadd.f32 %v206, %v207
      %v209 = vsel %vm181, %v163, 0.0
      %v210 = vadd.f32 %v208, %v209
      %v211 = vsel %vm181, %v164, 0.0
      %v212 = vadd.f32 %v210, %v211
      %v213 = vsel %vm181, %v165, 0.0
      %v214 = vadd.f32 %v212, %v213
      %v215 = vsel %vm181, %v166, 0.0
      %v216 = vadd.f32 %v214, %v215
      %v217 = vsel %vm181, %v167, 0.0
      %v218 = vadd.f32 %v216, %v217
      %v219 = vsel %vm181, %v168, 0.0
      %v220 = vadd.f32 %v218, %v219
      %v221 = vsel %vm181, %v169, 0.0
      %v222 = vadd.f32 %v220, %v221
      %v223 = vsel %vm181, %v170, 0.0
      %v224 = vadd.f32 %v222, %v223
      %v225 = vsel %vm181, %v171, 0.0
      %v226 = vadd.f32 %v224, %v225
      %v227 = vsel %vm181, %v172, 0.0
      %v228 = vadd.f32 %v226, %v227
      %v229 = vsel %vm181, %v173, 0.0
      %v230 = vadd.f32 %v228, %v229
      %v231 = vsel %vm181, %v174, 0.0
      %v232 = vadd.f32 %v230, %v231
      %v233 = vsel %vm181, %v175, 0.0
      %v234 = vadd.f32 %v232, %v233
      %v235 = vsel %vm181, %v176, 0.0
      %v236 = vadd.f32 %v234, %v235
      %v237 = vsel %vm181, %v177, 0.0
      %v238 = vadd.f32 %v236, %v237
      %v239 = vsel %vm181, %v178, 0.0
      %v240 = vadd.f32 %v238, %v239
      %v241 = vsel %vm181, %v179, 0.0
      %v242 = vadd.f32 %v240, %v241
      %v243 = vsel %vm181, %v180, 0.0
      %v244 = vadd.f32 %v242, %v243
      %v245 = vrot.slane %v244, 4
      %v246 = vadd.f32 %v244, %v245
      %v247 = vrot.slane %v246, 2
      %v248 = vadd.f32 %v246, %v247
      %v249 = vrot.slane %v248, 1
      %v250 = vadd.f32 %v248, %v249
      %v251 = vrcp.pop 256.0
      %v252 = vmul.f32 %v250, %v251
      %v253 = vsub.f32 %v149, %v252
      %v254 = vsub.f32 %v150, %v252
      %v255 = vsub.f32 %v151, %v252
      %v256 = vsub.f32 %v152, %v252
      %v257 = vsub.f32 %v153, %v252
      %v258 = vsub.f32 %v154, %v252
      %v259 = vsub.f32 %v155, %v252
      %v260 = vsub.f32 %v156, %v252
      %v261 = vsub.f32 %v157, %v252
      %v262 = vsub.f32 %v158, %v252
      %v263 = vsub.f32 %v159, %v252
      %v264 = vsub.f32 %v160, %v252
      %v265 = vsub.f32 %v161, %v252
      %v266 = vsub.f32 %v162, %v252
      %v267 = vsub.f32 %v163, %v252
      %v268 = vsub.f32 %v164, %v252
      %v269 = vsub.f32 %v165, %v252
      %v270 = vsub.f32 %v166, %v252
      %v271 = vsub.f32 %v167, %v252
      %v272 = vsub.f32 %v168, %v252
      %v273 = vsub.f32 %v169, %v252
      %v274 = vsub.f32 %v170, %v252
      %v275 = vsub.f32 %v171, %v252
      %v276 = vsub.f32 %v172, %v252
      %v277 = vsub.f32 %v173, %v252
      %v278 = vsub.f32 %v174, %v252
      %v279 = vsub.f32 %v175, %v252
      %v280 = vsub.f32 %v176, %v252
      %v281 = vsub.f32 %v177, %v252
      %v282 = vsub.f32 %v178, %v252
      %v283 = vsub.f32 %v179, %v252
      %v284 = vsub.f32 %v180, %v252
      %v285 = vmul.f32 %v253, %v253
      %v286 = vmul.f32 %v254, %v254
      %v287 = vmul.f32 %v255, %v255
      %v288 = vmul.f32 %v256, %v256
      %v289 = vmul.f32 %v257, %v257
      %v290 = vmul.f32 %v258, %v258
      %v291 = vmul.f32 %v259, %v259
      %v292 = vmul.f32 %v260, %v260
      %v293 = vmul.f32 %v261, %v261
      %v294 = vmul.f32 %v262, %v262
      %v295 = vmul.f32 %v263, %v263
      %v296 = vmul.f32 %v264, %v264
      %v297 = vmul.f32 %v265, %v265
      %v298 = vmul.f32 %v266, %v266
      %v299 = vmul.f32 %v267, %v267
      %v300 = vmul.f32 %v268, %v268
      %v301 = vmul.f32 %v269, %v269
      %v302 = vmul.f32 %v270, %v270
      %v303 = vmul.f32 %v271, %v271
      %v304 = vmul.f32 %v272, %v272
      %v305 = vmul.f32 %v273, %v273
      %v306 = vmul.f32 %v274, %v274
      %v307 = vmul.f32 %v275, %v275
      %v308 = vmul.f32 %v276, %v276
      %v309 = vmul.f32 %v277, %v277
      %v310 = vmul.f32 %v278, %v278
      %v311 = vmul.f32 %v279, %v279
      %v312 = vmul.f32 %v280, %v280
      %v313 = vmul.f32 %v281, %v281
      %v314 = vmul.f32 %v282, %v282
      %v315 = vmul.f32 %v283, %v283
      %v316 = vmul.f32 %v284, %v284
      %v317 = vsel %vm181, %v285, 0.0
      %v318 = vsel %vm181, %v286, 0.0
      %v319 = vadd.f32 %v317, %v318
      %v320 = vsel %vm181, %v287, 0.0
      %v321 = vadd.f32 %v319, %v320
      %v322 = vsel %vm181, %v288, 0.0
      %v323 = vadd.f32 %v321, %v322
      %v324 = vsel %vm181, %v289, 0.0
      %v325 = vadd.f32 %v323, %v324
      %v326 = vsel %vm181, %v290, 0.0
      %v327 = vadd.f32 %v325, %v326
      %v328 = vsel %vm181, %v291, 0.0
      %v329 = vadd.f32 %v327, %v328
      %v330 = vsel %vm181, %v292, 0.0
      %v331 = vadd.f32 %v329, %v330
      %v332 = vsel %vm181, %v293, 0.0
      %v333 = vadd.f32 %v331, %v332
      %v334 = vsel %vm181, %v294, 0.0
      %v335 = vadd.f32 %v333, %v334
      %v336 = vsel %vm181, %v295, 0.0
      %v337 = vadd.f32 %v335, %v336
      %v338 = vsel %vm181, %v296, 0.0
      %v339 = vadd.f32 %v337, %v338
      %v340 = vsel %vm181, %v297, 0.0
      %v341 = vadd.f32 %v339, %v340
      %v342 = vsel %vm181, %v298, 0.0
      %v343 = vadd.f32 %v341, %v342
      %v344 = vsel %vm181, %v299, 0.0
      %v345 = vadd.f32 %v343, %v344
      %v346 = vsel %vm181, %v300, 0.0
      %v347 = vadd.f32 %v345, %v346
      %v348 = vsel %vm181, %v301, 0.0
      %v349 = vadd.f32 %v347, %v348
      %v350 = vsel %vm181, %v302, 0.0
      %v351 = vadd.f32 %v349, %v350
      %v352 = vsel %vm181, %v303, 0.0
      %v353 = vadd.f32 %v351, %v352
      %v354 = vsel %vm181, %v304, 0.0
      %v355 = vadd.f32 %v353, %v354
      %v356 = vsel %vm181, %v305, 0.0
      %v357 = vadd.f32 %v355, %v356
      %v358 = vsel %vm181, %v306, 0.0
      %v359 = vadd.f32 %v357, %v358
      %v360 = vsel %vm181, %v307, 0.0
      %v361 = vadd.f32 %v359, %v360
      %v362 = vsel %vm181, %v308, 0.0
      %v363 = vadd.f32 %v361, %v362
      %v364 = vsel %vm181, %v309, 0.0
      %v365 = vadd.f32 %v363, %v364
      %v366 = vsel %vm181, %v310, 0.0
      %v367 = vadd.f32 %v365, %v366
      %v368 = vsel %vm181, %v311, 0.0
      %v369 = vadd.f32 %v367, %v368
      %v370 = vsel %vm181, %v312, 0.0
      %v371 = vadd.f32 %v369, %v370
      %v372 = vsel %vm181, %v313, 0.0
      %v373 = vadd.f32 %v371, %v372
      %v374 = vsel %vm181, %v314, 0.0
      %v375 = vadd.f32 %v373, %v374
      %v376 = vsel %vm181, %v315, 0.0
      %v377 = vadd.f32 %v375, %v376
      %v378 = vsel %vm181, %v316, 0.0
      %v379 = vadd.f32 %v377, %v378
      %v380 = vrot.slane %v379, 4
      %v381 = vadd.f32 %v379, %v380
      %v382 = vrot.slane %v381, 2
      %v383 = vadd.f32 %v381, %v382
      %v384 = vrot.slane %v383, 1
      %v385 = vadd.f32 %v383, %v384
      %v386 = vmul.f32 %v385, %v251
      %v387 = vadd.f32 %v386, 1e-05
      %v388 = vrsqrt.pop %v387
      %v389 = vmul.f32 %v253, %v388
      %v390 = vmul.f32 %v254, %v388
      %v391 = vmul.f32 %v255, %v388
      %v392 = vmul.f32 %v256, %v388
      %v393 = vmul.f32 %v257, %v388
      %v394 = vmul.f32 %v258, %v388
      %v395 = vmul.f32 %v259, %v388
      %v396 = vmul.f32 %v260, %v388
      %v397 = vmul.f32 %v261, %v388
      %v398 = vmul.f32 %v262, %v388
      %v399 = vmul.f32 %v263, %v388
      %v400 = vmul.f32 %v264, %v388
      %v401 = vmul.f32 %v265, %v388
      %v402 = vmul.f32 %v266, %v388
      %v403 = vmul.f32 %v267, %v388
      %v404 = vmul.f32 %v268, %v388
      %v405 = vmul.f32 %v269, %v388
      %v406 = vmul.f32 %v270, %v388
      %v407 = vmul.f32 %v271, %v388
      %v408 = vmul.f32 %v272, %v388
      %v409 = vmul.f32 %v273, %v388
      %v410 = vmul.f32 %v274, %v388
      %v411 = vmul.f32 %v275, %v388
      %v412 = vmul.f32 %v276, %v388
      %v413 = vmul.f32 %v277, %v388
      %v414 = vmul.f32 %v278, %v388
      %v415 = vmul.f32 %v279, %v388
      %v416 = vmul.f32 %v280, %v388
      %v417 = vmul.f32 %v281, %v388
      %v418 = vmul.f32 %v282, %v388
      %v419 = vmul.f32 %v283, %v388
      %v420 = vmul.f32 %v284, %v388
      %421 = vst.msk [vmem:[%s116] sm:$0xff] %vm181, %v389
      %422 = vst.msk [vmem:[%s116 + $0x8] sm:$0xff] %vm181, %v390
      %423 = vst.msk [vmem:[%s116 + $0x10] sm:$0xff] %vm181, %v391
      %424 = vst.msk [vmem:[%s116 + $0x18] sm:$0xff] %vm181, %v392
      %425 = vst.msk [vmem:[%s116 + $0x20] sm:$0xff] %vm181, %v393
      %426 = vst.msk [vmem:[%s116 + $0x28] sm:$0xff] %vm181, %v394
      %427 = vst.msk [vmem:[%s116 + $0x30] sm:$0xff] %vm181, %v395
      %428 = vst.msk [vmem:[%s116 + $0x38] sm:$0xff] %vm181, %v396
      %429 = vst.msk [vmem:[%s116 + $0x40] sm:$0xff] %vm181, %v397
      %430 = vst.msk [vmem:[%s116 + $0x48] sm:$0xff] %vm181, %v398
      %431 = vst.msk [vmem:[%s116 + $0x50] sm:$0xff] %vm181, %v399
      %432 = vst.msk [vmem:[%s116 + $0x58] sm:$0xff] %vm181, %v400
      %433 = vst.msk [vmem:[%s116 + $0x60] sm:$0xff] %vm181, %v401
      %434 = vst.msk [vmem:[%s116 + $0x68] sm:$0xff] %vm181, %v402
      %435 = vst.msk [vmem:[%s116 + $0x70] sm:$0xff] %vm181, %v403
      %436 = vst.msk [vmem:[%s116 + $0x78] sm:$0xff] %vm181, %v404
      %437 = vst.msk [vmem:[%s116 + $0x80] sm:$0xff] %vm181, %v405
      %438 = vst.msk [vmem:[%s116 + $0x88] sm:$0xff] %vm181, %v406
      %439 = vst.msk [vmem:[%s116 + $0x90] sm:$0xff] %vm181, %v407
      %440 = vst.msk [vmem:[%s116 + $0x98] sm:$0xff] %vm181, %v408
      %441 = vst.msk [vmem:[%s116 + $0xa0] sm:$0xff] %vm181, %v409
      %442 = vst.msk [vmem:[%s116 + $0xa8] sm:$0xff] %vm181, %v410
      %443 = vst.msk [vmem:[%s116 + $0xb0] sm:$0xff] %vm181, %v411
      %444 = vst.msk [vmem:[%s116 + $0xb8] sm:$0xff] %vm181, %v412
      %445 = vst.msk [vmem:[%s116 + $0xc0] sm:$0xff] %vm181, %v413
      %446 = vst.msk [vmem:[%s116 + $0xc8] sm:$0xff] %vm181, %v414
      %447 = vst.msk [vmem:[%s116 + $0xd0] sm:$0xff] %vm181, %v415
      %448 = vst.msk [vmem:[%s116 + $0xd8] sm:$0xff] %vm181, %v416
      %449 = vst.msk [vmem:[%s116 + $0xe0] sm:$0xff] %vm181, %v417
      %450 = vst.msk [vmem:[%s116 + $0xe8] sm:$0xff] %vm181, %v418
      %451 = vst.msk [vmem:[%s116 + $0xf0] sm:$0xff] %vm181, %v419
      %452 = vst.msk [vmem:[%s116 + $0xf8] sm:$0xff] %vm181, %v420
      %p453 = scmp.lt.s32.totalorder %s12, 1
      %s454 = scalar_select %p453, %s12, 1
      %s455 = smul.addr %s454, 32
      %s456 = smul.addr %s455, 8
      %s457 = scalar_lea.vmem %s1, %s456
      // Predicated region
      $region25: #{residual_block_forward.20} parent=23 // pred_check
        %p458 = pneg %p56
      $region26: #{residual_block_forward.20} parent=23 // pred_check_branch
        %460 = sbr.rel (%p458) target = $region28
      $region27: #{residual_block_forward.20} parent=23 // pred_region
        _
      $region28: #{residual_block_forward.20} parent=23 // pred_fallthru
        _
    $region24: #{residual_block_forward.20} parent=5 // pred_fallthru
      _
    %p461 = scmp.le.s32.totalorder 2, %s7
    // Predicated region
    $region29: #{residual_block_forward.20} parent=5 // pred_check
      %p462 = pneg %p461
    $region30: #{residual_block_forward.20} parent=5 // pred_check_branch
      %464 = sbr.rel (%p462) target = $region32
    $region31: #{residual_block_forward.20} parent=5 // pred_region
      %s465 = ssub.s32 %s7, 2
      // Predicated region
      $region33: #{residual_block_forward.20} parent=31 // pred_check
        %p466 = pneg %p62
      $region34: #{residual_block_forward.20} parent=31 // pred_check_branch
        %468 = sbr.rel (%p466) target = $region36
      $region35: #{residual_block_forward.20} parent=31 // pred_region
        %p469 = scmp.lt.s32.totalorder %s13, 1
        %s470 = scalar_select %p469, %s13, 1
        %s471 = smul.addr %s470, 32
        %s472 = smul.addr %s471, 8
        %s473 = scalar_lea.vmem %s1, %s472
      $region36: #{residual_block_forward.20} parent=31 // pred_fallthru
        _
    $region32: #{residual_block_forward.20} parent=5 // pred_fallthru
      _
  $region6: #{residual_block_forward.20} parent=0 // loop_footer
    %s11 = sadd.s32 1, %s7
  $region7: #{residual_block_forward.20} parent=0 // loop_footer_branch
    %6 = sbr.rel target = $region3
  $region8: #{residual_block_forward.20} parent=0 // loop_exit
    _

// kernel: residual_block_forward.19
$region0: #{residual_block_forward.19}
  #allocation0 [shape = 'u32[]', space=smem, size = 0x4, offset = 0x4, fixed_abs, tag = 'smem constant byte address 0x4 - core index']
  #allocation1 [shape = 'u32[144,128]{1,0:T(1,128)}', space=vmem, size = 0x12000, scoped, tag = 'internal scratch']
  #allocation2 [shape = 'f32[256,4]{1,0:T(8,128)}', space=vmem, size = 0x20000, scoped, tag = 'scratch operand']
  %s0 = inlined_call_operand.vmem [shape: bf16[512,196], index: 0, kind: input, shape index: {}]
  %s1 = inlined_call_operand.vmem [shape: bf16[196,4], index: 1, kind: input, shape index: {}]
  %s2 = inlined_call_operand.vmem [shape: f32[1,4], index: 2, kind: input, shape index: {}]
  %s3 = inlined_call_operand.vmem [shape: f32[512,4], index: 3, kind: output, shape index: {}]
  %s4 = sld [smem:[#allocation0]]
  $region53: #{residual_block_forward.19} parent=0
    _
  %s6 = ssub.s32 1, %s4
  %s7 = scalar_select 0, %s6, %s4
  loop: start=0, step=1, limit=4
  $region2: #{residual_block_forward.19} parent=0 // loop_pre_header
    _
  $region3: #{residual_block_forward.19} parent=0 // loop_header
    %s9 = sphi 0, %s13
    %p10 = scmp.ge.s32.totalorder %s9, 4
    %s16 = sphi 0, %s35
    %s17 = sphi 0, %s31
    %s18 = sphi 0, %s27
    %s19 = sphi 0, %s16
    %s20 = sphi 0, %s17
    %s21 = sphi 0, %s18
    %s22 = sphi 0, %s19
    %s23 = sphi 0, %s20
    %s24 = sphi 0, %s21
    %s40 = sphi 0, %s42
    %s43 = sphi 0, %s40
    %s44 = sphi 0, %s43
    %s60 = sphi 0, %s44
    %s68 = sphi 0, %s70
    %s71 = sphi 0, %s68
    %s72 = sphi 0, %s71
    %s88 = sphi 0, %s72
    %s94 = sphi 0, %s96
    %s97 = sphi 0, %s94
    %s98 = sphi 0, %s97
    %s114 = sphi 0, %s98
    %s122 = sphi 0, %s124
    %s125 = sphi 0, %s122
    %s126 = sphi 0, %s125
    %s142 = sphi 0, %s126
  $region4: #{residual_block_forward.19} parent=0 // loop_header_branch
    %12 = sbr.rel (%p10) target = $region8
  $region5: #{residual_block_forward.19} parent=0 // loop_body
    %s14 = ssub.s32 %s9, 1
    %s15 = ssub.s32 %s9, 2
    %s25 = sadd.s32 1, %s18
    %p26 = scmp.ge.s32.totalorder %s25, 1
    %s27 = scalar_select %p26, 0, %s25
    %s28 = sadd.s32 1, %s17
    %s29 = scalar_select %p26, %s28, %s17
    %p30 = scmp.ge.s32.totalorder %s29, 1
    %s31 = scalar_select %p30, 0, %s29
    %s32 = sadd.s32 1, %s16
    %s33 = scalar_select %p30, %s32, %s16
    %p34 = scmp.ge.s32.totalorder %s33, 2
    %s35 = scalar_select %p34, 0, %s33
    %s36 = ssub.s32 %s16, %s35
    %s37 = ssub.s32 %s18, %s27
    %s38 = sor.u32 %s36, %s37
    %p39 = scmp.eq.s32.totalorder %s38, 0
    %s41 = sadd.s32 %s40, 1
    %s42 = scalar_select %p39, %s40, %s41
    %p45 = pneg %p39
    %p46 = scmp.eq.s32.totalorder %s9, 1
    %p47 = por %p45, %p46
    %p48 = scmp.ne.s32.totalorder %s40, %s43
    %p49 = scmp.eq.s32.totalorder %s9, 0
    %p50 = por %p48, %p49
    %p51 = scmp.ne.s32.totalorder %s40, %s43
    %p52 = scmp.eq.s32.totalorder %s14, 1
    %p53 = por %p51, %p52
    %p54 = scmp.ne.s32.totalorder %s43, %s44
    %p55 = scmp.eq.s32.totalorder %s14, 0
    %p56 = por %p54, %p55
    %p57 = scmp.ne.s32.totalorder %s43, %s44
    %p58 = scmp.eq.s32.totalorder %s15, 1
    %p59 = por %p57, %p58
    %p61 = scmp.ne.s32.totalorder %s44, %s60
    %p62 = scmp.eq.s32.totalorder %s15, 0
    %p63 = por %p61, %p62
    %s64 = ssub.s32 %s18, %s27
    %s65 = ssub.s32 %s17, %s31
    %s66 = sor.u32 %s64, %s65
    %p67 = scmp.eq.s32.totalorder %s66, 0
    %s69 = sadd.s32 %s68, 1
    %s70 = scalar_select %p67, %s68, %s69
    %p73 = pneg %p67
    %p74 = scmp.eq.s32.totalorder %s9, 1
    %p75 = por %p73, %p74
    %p76 = scmp.ne.s32.totalorder %s68, %s71
    %p77 = scmp.eq.s32.totalorder %s9, 0
    %p78 = por %p76, %p77
    %p79 = scmp.ne.s32.totalorder %s68, %s71
    %p80 = scmp.eq.s32.totalorder %s14, 1
    %p81 = por %p79, %p80
    %p82 = scmp.ne.s32.totalorder %s71, %s72
    %p83 = scmp.eq.s32.totalorder %s14, 0
    %p84 = por %p82, %p83
    %p85 = scmp.ne.s32.totalorder %s71, %s72
    %p86 = scmp.eq.s32.totalorder %s15, 1
    %p87 = por %p85, %p86
    %p89 = scmp.ne.s32.totalorder %s72, %s88
    %p90 = scmp.eq.s32.totalorder %s15, 0
    %p91 = por %p89, %p90
    %s92 = ssub.s32 %s17, %s31
    %p93 = scmp.eq.s32.totalorder %s92, 0
    %s95 = sadd.s32 %s94, 1
    %s96 = scalar_select %p93, %s94, %s95
    %p99 = pneg %p93
    %p100 = scmp.eq.s32.totalorder %s9, 1
    %p101 = por %p99, %p100
    %p102 = scmp.ne.s32.totalorder %s94, %s97
    %p103 = scmp.eq.s32.totalorder %s9, 0
    %p104 = por %p102, %p103
    %p105 = scmp.ne.s32.totalorder %s94, %s97
    %p106 = scmp.eq.s32.totalorder %s14, 1
    %p107 = por %p105, %p106
    %p108 = scmp.ne.s32.totalorder %s97, %s98
    %p109 = scmp.eq.s32.totalorder %s14, 0
    %p110 = por %p108, %p109
    %p111 = scmp.ne.s32.totalorder %s97, %s98
    %p112 = scmp.eq.s32.totalorder %s15, 1
    %p113 = por %p111, %p112
    %p115 = scmp.ne.s32.totalorder %s98, %s114
    %p116 = scmp.eq.s32.totalorder %s15, 0
    %p117 = por %p115, %p116
    %s118 = ssub.s32 %s16, %s35
    %s119 = ssub.s32 %s17, %s31
    %s120 = sor.u32 %s118, %s119
    %p121 = scmp.eq.s32.totalorder %s120, 0
    %s123 = sadd.s32 %s122, 1
    %s124 = scalar_select %p121, %s122, %s123
    %p127 = pneg %p121
    %p128 = scmp.eq.s32.totalorder %s9, 1
    %p129 = por %p127, %p128
    %p130 = scmp.ne.s32.totalorder %s122, %s125
    %p131 = scmp.eq.s32.totalorder %s9, 0
    %p132 = por %p130, %p131
    %p133 = scmp.ne.s32.totalorder %s122, %s125
    %p134 = scmp.eq.s32.totalorder %s14, 1
    %p135 = por %p133, %p134
    %p136 = scmp.ne.s32.totalorder %s125, %s126
    %p137 = scmp.eq.s32.totalorder %s14, 0
    %p138 = por %p136, %p137
    %p139 = scmp.ne.s32.totalorder %s125, %s126
    %p140 = scmp.eq.s32.totalorder %s15, 1
    %p141 = por %p139, %p140
    %p143 = scmp.ne.s32.totalorder %s126, %s142
    %p144 = scmp.eq.s32.totalorder %s15, 0
    %p145 = por %p143, %p144
    %p146 = scmp.le.s32.totalorder 1, %s9
    %p147 = scmp.lt.s32.totalorder %s9, 3
    %p148 = pnand %p146, %p147
    %p149 = pneg %p148
    // Predicated region
    $region9: #{residual_block_forward.19} parent=5 // pred_check
      _
    $region10: #{residual_block_forward.19} parent=5 // pred_check_branch
      %151 = sbr.rel (%p148) target = $region12
    $region11: #{residual_block_forward.19} parent=5 // pred_region
      %s152 = ssub.s32 %s9, 1
      // Predicated region
      $region13: #{residual_block_forward.19} parent=11 // pred_check
        %p153 = pneg %p84
      $region14: #{residual_block_forward.19} parent=11 // pred_check_branch
        %155 = sbr.rel (%p153) target = $region16
      $region15: #{residual_block_forward.19} parent=11 // pred_region
        %s156 = smul.u32 25, %s21
        %p157 = scmp.lt.s32.totalorder %s156, 24
        %s158 = scalar_select %p157, %s156, 24
        %p159 = scmp.lt.s32.totalorder %s20, 0
        %s160 = scalar_select %p159, %s20, 0
        %s161 = sadd.s32 %s160, %s158
        %s162 = smul.addr %s161, 4
        %s163 = scalar_lea.vmem %s1, %s162
        %s164 = smul.u32 25, %s21
      $region16: #{residual_block_forward.19} parent=11 // pred_fallthru
        _
      // Predicated region
      $region17: #{residual_block_forward.19} parent=11 // pred_check
        %p165 = pneg %p110
      $region18: #{residual_block_forward.19} parent=11 // pred_check_branch
        %167 = sbr.rel (%p165) target = $region20
      $region19: #{residual_block_forward.19} parent=11 // pred_region
        %p168 = scmp.lt.s32.totalorder %s20, 0
        %s169 = scalar_select %p168, %s20, 0
        %s170 = scalar_lea.vmem %s2, %s169
      $region20: #{residual_block_forward.19} parent=11 // pred_fallthru
        _
    $region12: #{residual_block_forward.19} parent=5 // pred_fallthru
      _
    %p171 = scmp.lt.s32.totalorder %s9, 2
    // Predicated region
    $region21: #{residual_block_forward.19} parent=5 // pred_check
      %p172 = pneg %p171
    $region22: #{residual_block_forward.19} parent=5 // pred_check_branch
      %174 = sbr.rel (%p172) target = $region24
    $region23: #{residual_block_forward.19} parent=5 // pred_region
      // Predicated region
      $region25: #{residual_block_forward.19} parent=23 // pred_check
        %p175 = pneg %p50
      $region26: #{residual_block_forward.19} parent=23 // pred_check_branch
        %177 = sbr.rel (%p175) target = $region28
      $region27: #{residual_block_forward.19} parent=23 // pred_region
        %s178 = smul.u32 32, %s16
        %s179 = smul.u32 2, %s18
        %p180 = scmp.lt.s32.totalorder %s178, 63
        %s181 = scalar_select %p180, %s178, 63
        %p182 = scmp.lt.s32.totalorder %s179, 1
        %s183 = scalar_select %p182, %s179, 1
        %s184 = smul.addr %s181, 2
        %s185 = sadd.s32 %s183, %s184
        %s186 = smul.addr %s185, 4
        %s187 = scalar_lea.vmem %s0, %s186
        %s188 = smul.u32 32, %s16
        %s189 = smul.u32 2, %s18
      $region28: #{residual_block_forward.19} parent=23 // pred_fallthru
        _
    $region24: #{residual_block_forward.19} parent=5 // pred_fallthru
      _
    %p190 = scmp.le.s32.totalorder 1, %s9
    %p191 = scmp.lt.s32.totalorder %s9, 3
    %p192 = pnand %p190, %p191
    %p193 = pneg %p192
    // Predicated region
    $region29: #{residual_block_forward.19} parent=5 // pred_check
      _
    $region30: #{residual_block_forward.19} parent=5 // pred_check_branch
      %195 = sbr.rel (%p192) target = $region32
    $region31: #{residual_block_forward.19} parent=5 // pred_region
      %s196 = ssub.s32 %s9, 1
      %s197 = smul.u32 32, %s19
      %s198 = smul.u32 2, %s21
      %p199 = scmp.lt.s32.totalorder %s197, 63
      %s200 = scalar_select %p199, %s197, 63
      %p201 = scmp.lt.s32.totalorder %s198, 1
      %s202 = scalar_select %p201, %s198, 1
      %s203 = smul.addr %s200, 2
      %s204 = sadd.s32 %s202, %s203
      %s205 = smul.addr %s204, 4
      %s206 = scalar_lea.vmem %s0, %s205
      %p207 = pneg %p56
      %p208 = pneg %p53
      %s209 = smul.u32 25, %s21
      %p210 = scmp.lt.s32.totalorder %s209, 24
      %s211 = scalar_select %p210, %s209, 24
      %p212 = scmp.lt.s32.totalorder %s20, 0
      %s213 = scalar_select %p212, %s20, 0
      %s214 = sadd.s32 %s213, %s211
      %s215 = smul.addr %s214, 4
      %s216 = scalar_lea.vmem %s1, %s215
      %p217 = pneg %p84
      %p218 = pneg %p81
      %p219 = scmp.lt.s32.totalorder %s20, 0
      %s220 = scalar_select %p219, %s20, 0
      %s221 = scalar_lea.vmem %s2, %s220
      %p222 = pneg %p110
      %p223 = pneg %p107
      %p224 = pneg %p138
      %p225 = pneg %p135
      %s226 = smul.u32 32, %s19
      %p227 = scmp.lt.s32.totalorder %s226, 63
      %s228 = scalar_select %p227, %s226, 63
      %p229 = scmp.lt.s32.totalorder %s20, 0
      %s230 = scalar_select %p229, %s20, 0
      %s231 = sadd.s32 %s230, %s228
      %s232 = smul.addr %s231, 8
      %s233 = scalar_lea.vmem %s3, %s232
      %s234 = smul.u32 32, %s19
      %s235 = smul.u32 2, %s21
      %p236 = scmp.lt.s32.totalorder %s234, 63
      %s237 = scalar_select %p236, %s234, 63
      %p238 = scmp.lt.s32.totalorder %s235, 1
      %s239 = scalar_select %p238, %s235, 1
      %s240 = smul.addr %s237, 2
      %s241 = sadd.s32 %s239, %s240
      %s242 = smul.addr %s241, 4
      %s243 = scalar_lea.vmem %s0, %s242
      %s244 = smul.u32 32, %s19
      %s245 = smul.u32 2, %s21
      %s246 = smul.u32 25, %s21
      %p247 = scmp.lt.s32.totalorder %s246, 24
      %s248 = scalar_select %p247, %s246, 24
      %p249 = scmp.lt.s32.totalorder %s20, 0
      %s250 = scalar_select %p249, %s20, 0
      %s251 = sadd.s32 %s250, %s248
      %s252 = smul.addr %s251, 4
      %s253 = scalar_lea.vmem %s1, %s252
      %s254 = smul.u32 25, %s21
      %p255 = scmp.lt.s32.totalorder %s20, 0
      %s256 = scalar_select %p255, %s20, 0
      %s257 = scalar_lea.vmem %s2, %s256
      %s258 = smul.u32 32, %s19
      %p259 = scmp.lt.s32.totalorder %s258, 63
      %s260 = scalar_select %p259, %s258, 63
      %p261 = scmp.lt.s32.totalorder %s20, 0
      %s262 = scalar_select %p261, %s20, 0
      %s263 = sadd.s32 %s262, %s260
      %s264 = smul.addr %s263, 8
      %s265 = scalar_lea.vmem %s3, %s264
      %s266 = smul.u32 32, %s19
      %p268 = scmp.eq.s32.totalorder %s21, 0
      // Predicated region
      $region33: #{residual_block_forward.19} parent=31 // pred_check
        %p269 = pneg %p268
      $region34: #{residual_block_forward.19} parent=31 // pred_check_branch
        %271 = sbr.rel (%p269) target = $region36
      $region35: #{residual_block_forward.19} parent=31 // pred_region
        %vm272 = vcmask 31744
        %273 = vst.msk [vmem:[#allocation2] sm:$0xff] %vm272, 0.0
        %274 = vst.msk [vmem:[#allocation2 + $0x8] sm:$0xff] %vm272, 0.0
        %275 = vst.msk [vmem:[#allocation2 + $0x10] sm:$0xff] %vm272, 0.0
        %276 = vst.msk [vmem:[#allocation2 + $0x18] sm:$0xff] %vm272, 0.0
        %277 = vst.msk [vmem:[#allocation2 + $0x20] sm:$0xff] %vm272, 0.0
        %278 = vst.msk [vmem:[#allocation2 + $0x28] sm:$0xff] %vm272, 0.0
        %279 = vst.msk [vmem:[#allocation2 + $0x30] sm:$0xff] %vm272, 0.0
        %280 = vst.msk [vmem:[#allocation2 + $0x38] sm:$0xff] %vm272, 0.0
        %281 = vst.msk [vmem:[#allocation2 + $0x40] sm:$0xff] %vm272, 0.0
        %282 = vst.msk [vmem:[#allocation2 + $0x48] sm:$0xff] %vm272, 0.0
        %283 = vst.msk [vmem:[#allocation2 + $0x50] sm:$0xff] %vm272, 0.0
        %284 = vst.msk [vmem:[#allocation2 + $0x58] sm:$0xff] %vm272, 0.0
        %285 = vst.msk [vmem:[#allocation2 + $0x60] sm:$0xff] %vm272, 0.0
        %286 = vst.msk [vmem:[#allocation2 + $0x68] sm:$0xff] %vm272, 0.0
        %287 = vst.msk [vmem:[#allocation2 + $0x70] sm:$0xff] %vm272, 0.0
        %288 = vst.msk [vmem:[#allocation2 + $0x78] sm:$0xff] %vm272, 0.0
        %289 = vst.msk [vmem:[#allocation2 + $0x80] sm:$0xff] %vm272, 0.0
        %290 = vst.msk [vmem:[#allocation2 + $0x88] sm:$0xff] %vm272, 0.0
        %291 = vst.msk [vmem:[#allocation2 + $0x90] sm:$0xff] %vm272, 0.0
        %292 = vst.msk [vmem:[#allocation2 + $0x98] sm:$0xff] %vm272, 0.0
        %293 = vst.msk [vmem:[#allocation2 + $0xa0] sm:$0xff] %vm272, 0.0
        %294 = vst.msk [vmem:[#allocation2 + $0xa8] sm:$0xff] %vm272, 0.0
        %295 = vst.msk [vmem:[#allocation2 + $0xb0] sm:$0xff] %vm272, 0.0
        %296 = vst.msk [vmem:[#allocation2 + $0xb8] sm:$0xff] %vm272, 0.0
        %297 = vst.msk [vmem:[#allocation2 + $0xc0] sm:$0xff] %vm272, 0.0
        %298 = vst.msk [vmem:[#allocation2 + $0xc8] sm:$0xff] %vm272, 0.0
        %299 = vst.msk [vmem:[#allocation2 + $0xd0] sm:$0xff] %vm272, 0.0
        %300 = vst.msk [vmem:[#allocation2 + $0xd8] sm:$0xff] %vm272, 0.0
        %301 = vst.msk [vmem:[#allocation2 + $0xe0] sm:$0xff] %vm272, 0.0
        %302 = vst.msk [vmem:[#allocation2 + $0xe8] sm:$0xff] %vm272, 0.0
        %303 = vst.msk [vmem:[#allocation2 + $0xf0] sm:$0xff] %vm272, 0.0
        %304 = vst.msk [vmem:[#allocation2 + $0xf8] sm:$0xff] %vm272, 0.0
      $region36: #{residual_block_forward.19} parent=31 // pred_fallthru
        _
      %v305 = vld [vmem:[#allocation2] sm:$0xff]
      %v306 = vld [vmem:[#allocation2 + $0x8] sm:$0xff]
      %v307 = vld [vmem:[#allocation2 + $0x10] sm:$0xff]
      %v308 = vld [vmem:[#allocation2 + $0x18] sm:$0xff]
      %v309 = vld [vmem:[#allocation2 + $0x20] sm:$0xff]
      %v310 = vld [vmem:[#allocation2 + $0x28] sm:$0xff]
      %v311 = vld [vmem:[#allocation2 + $0x30] sm:$0xff]
      %v312 = vld [vmem:[#allocation2 + $0x38] sm:$0xff]
      %v313 = vld [vmem:[#allocation2 + $0x40] sm:$0xff]
      %v314 = vld [vmem:[#allocation2 + $0x48] sm:$0xff]
      %v315 = vld [vmem:[#allocation2 + $0x50] sm:$0xff]
      %v316 = vld [vmem:[#allocation2 + $0x58] sm:$0xff]
      %v317 = vld [vmem:[#allocation2 + $0x60] sm:$0xff]
      %v318 = vld [vmem:[#allocation2 + $0x68] sm:$0xff]
      %v319 = vld [vmem:[#allocation2 + $0x70] sm:$0xff]
      %v320 = vld [vmem:[#allocation2 + $0x78] sm:$0xff]
      %v321 = vld [vmem:[#allocation2 + $0x80] sm:$0xff]
      %v322 = vld [vmem:[#allocation2 + $0x88] sm:$0xff]
      %v323 = vld [vmem:[#allocation2 + $0x90] sm:$0xff]
      %v324 = vld [vmem:[#allocation2 + $0x98] sm:$0xff]
      %v325 = vld [vmem:[#allocation2 + $0xa0] sm:$0xff]
      %v326 = vld [vmem:[#allocation2 + $0xa8] sm:$0xff]
      %v327 = vld [vmem:[#allocation2 + $0xb0] sm:$0xff]
      %v328 = vld [vmem:[#allocation2 + $0xb8] sm:$0xff]
      %v329 = vld [vmem:[#allocation2 + $0xc0] sm:$0xff]
      %v330 = vld [vmem:[#allocation2 + $0xc8] sm:$0xff]
      %v331 = vld [vmem:[#allocation2 + $0xd0] sm:$0xff]
      %v332 = vld [vmem:[#allocation2 + $0xd8] sm:$0xff]
      %v333 = vld [vmem:[#allocation2 + $0xe0] sm:$0xff]
      %v334 = vld [vmem:[#allocation2 + $0xe8] sm:$0xff]
      %v335 = vld [vmem:[#allocation2 + $0xf0] sm:$0xff]
      %v336 = vld [vmem:[#allocation2 + $0xf8] sm:$0xff]
      %v337 = vld [vmem:[%s243] sm:$0xff]
      %v338 = vld [vmem:[%s243 + $0x8] sm:$0xff]
      %v339 = vld [vmem:[%s243 + $0x10] sm:$0xff]
      %v340 = vld [vmem:[%s243 + $0x18] sm:$0xff]
      %v341 = vld [vmem:[%s243 + $0x20] sm:$0xff]
      %v342 = vld [vmem:[%s243 + $0x28] sm:$0xff]
      %v343 = vld [vmem:[%s243 + $0x30] sm:$0xff]
      %v344 = vld [vmem:[%s243 + $0x38] sm:$0xff]
      %v345 = vld [vmem:[%s243 + $0x40] sm:$0xff]
      %v346 = vld [vmem:[%s243 + $0x48] sm:$0xff]
      %v347 = vld [vmem:[%s243 + $0x50] sm:$0xff]
      %v348 = vld [vmem:[%s243 + $0x58] sm:$0xff]
      %v349 = vld [vmem:[%s243 + $0x60] sm:$0xff]
      %v350 = vld [vmem:[%s243 + $0x68] sm:$0xff]
      %v351 = vld [vmem:[%s243 + $0x70] sm:$0xff]
      %v352 = vld [vmem:[%s243 + $0x78] sm:$0xff]
      %v353 = vld [vmem:[%s243 + $0x80] sm:$0xff]
      %v354 = vld [vmem:[%s243 + $0x88] sm:$0xff]
      %v355 = vld [vmem:[%s243 + $0x90] sm:$0xff]
      %v356 = vld [vmem:[%s243 + $0x98] sm:$0xff]
      %v357 = vld [vmem:[%s243 + $0xa0] sm:$0xff]
      %v358 = vld [vmem:[%s243 + $0xa8] sm:$0xff]
      %v359 = vld [vmem:[%s243 + $0xb0] sm:$0xff]
      %v360 = vld [vmem:[%s243 + $0xb8] sm:$0xff]
      %v361 = vld [vmem:[%s243 + $0xc0] sm:$0xff]
      %v362 = vld [vmem:[%s243 + $0xc8] sm:$0xff]
      %v363 = vld [vmem:[%s243 + $0xd0] sm:$0xff]
      %v364 = vld [vmem:[%s243 + $0xd8] sm:$0xff]
      %v365 = vld [vmem:[%s243 + $0xe0] sm:$0xff]
      %v366 = vld [vmem:[%s243 + $0xe8] sm:$0xff]
      %v367 = vld [vmem:[%s243 + $0xf0] sm:$0xff]
      %v368 = vld [vmem:[%s243 + $0xf8] sm:$0xff]
      %v369 = vld [vmem:[%s253] sm:$0xf]
      %v370 = vld [vmem:[%s253 + $0x4] sm:$0xf]
      %v371 = vld [vmem:[%s253 + $0x8] sm:$0xf]
      %v372 = vld [vmem:[%s253 + $0xc] sm:$0xf]
      %v373 = vld [vmem:[%s253 + $0x10] sm:$0xf]
      %v374 = vld [vmem:[%s253 + $0x14] sm:$0xf]
      %v375 = vld [vmem:[%s253 + $0x18] sm:$0xf]
      %v376 = vld [vmem:[%s253 + $0x1c] sm:$0xf]
      %v377 = vld [vmem:[%s253 + $0x20] sm:$0xf]
      %v378 = vld [vmem:[%s253 + $0x24] sm:$0xf]
      %v379 = vld [vmem:[%s253 + $0x28] sm:$0xf]
      %v380 = vld [vmem:[%s253 + $0x2c] sm:$0xf]
      %v381 = vld [vmem:[%s253 + $0x30] sm:$0xf]
      %v382 = vld [vmem:[%s253 + $0x34] sm:$0xf]
      %v383 = vld [vmem:[%s253 + $0x38] sm:$0xf]
      %v384 = vld [vmem:[%s253 + $0x3c] sm:$0xf]
      %v385 = vld [vmem:[%s253 + $0x40] sm:$0xf]
      %v386 = vld [vmem:[%s253 + $0x44] sm:$0xf]
      %v387 = vld [vmem:[%s253 + $0x48] sm:$0xf]
      %v388 = vld [vmem:[%s253 + $0x4c] sm:$0xf]
      %v389 = vld [vmem:[%s253 + $0x50] sm:$0xf]
      %v390 = vld [vmem:[%s253 + $0x54] sm:$0xf]
      %v391 = vld [vmem:[%s253 + $0x58] sm:$0xf]
      %v392 = vld [vmem:[%s253 + $0x5c] sm:$0xf]
      %v393 = vld [vmem:[%s253 + $0x60] sm:$0x3]
      %v426 = vunpack.c.l.b16 %v337
      %v427 = vunpack.c.h.b16 %v337
      %v428 = vunpack.c.l.b16 %v338
      %v429 = vunpack.c.h.b16 %v338
      %v430 = vunpack.c.l.b16 %v339
      %v431 = vunpack.c.h.b16 %v339
      %v432 = vunpack.c.l.b16 %v340
      %v433 = vunpack.c.h.b16 %v340
      %v434 = vunpack.c.l.b16 %v341
      %v435 = vunpack.c.h.b16 %v341
      %v436 = vunpack.c.l.b16 %v342
      %v437 = vunpack.c.h.b16 %v342
      %v438 = vunpack.c.l.b16 %v343
      %v439 = vunpack.c.h.b16 %v343
      %v440 = vunpack.c.l.b16 %v344
      %v441 = vunpack.c.h.b16 %v344
      %v442 = vunpack.c.l.b16 %v345
      %v443 = vunpack.c.h.b16 %v345
      %v444 = vunpack.c.l.b16 %v346
      %v445 = vunpack.c.h.b16 %v346
      %v446 = vunpack.c.l.b16 %v347
      %v447 = vunpack.c.h.b16 %v347
      %v448 = vunpack.c.l.b16 %v348
      %v449 = vunpack.c.h.b16 %v348
      %v450 = vunpack.c.l.b16 %v349
      %v451 = vunpack.c.h.b16 %v349
      %v452 = vunpack.c.l.b16 %v350
      %v453 = vunpack.c.h.b16 %v350
      %v454 = vunpack.c.l.b16 %v351
      %v455 = vunpack.c.h.b16 %v351
      %v456 = vunpack.c.l.b16 %v352
      %v457 = vunpack.c.h.b16 %v352
      %v458 = vunpack.c.l.b16 %v353
      %v459 = vunpack.c.h.b16 %v353
      %v460 = vunpack.c.l.b16 %v354
      %v461 = vunpack.c.h.b16 %v354
      %v462 = vunpack.c.l.b16 %v355
      %v463 = vunpack.c.h.b16 %v355
      %v464 = vunpack.c.l.b16 %v356
      %v465 = vunpack.c.h.b16 %v356
      %v466 = vunpack.c.l.b16 %v357
      %v467 = vunpack.c.h.b16 %v357
      %v468 = vunpack.c.l.b16 %v358
      %v469 = vunpack.c.h.b16 %v358
      %v470 = vunpack.c.l.b16 %v359
      %v471 = vunpack.c.h.b16 %v359
      %v472 = vunpack.c.l.b16 %v360
      %v473 = vunpack.c.h.b16 %v360
      %v474 = vunpack.c.l.b16 %v361
      %v475 = vunpack.c.h.b16 %v361
      %v476 = vunpack.c.l.b16 %v362
      %v477 = vunpack.c.h.b16 %v362
      %v478 = vunpack.c.l.b16 %v363
      %v479 = vunpack.c.h.b16 %v363
      %v480 = vunpack.c.l.b16 %v364
      %v481 = vunpack.c.h.b16 %v364
      %v482 = vunpack.c.l.b16 %v365
      %v483 = vunpack.c.h.b16 %v365
      %v484 = vunpack.c.l.b16 %v366
      %v485 = vunpack.c.h.b16 %v366
      %v486 = vunpack.c.l.b16 %v367
      %v487 = vunpack.c.h.b16 %v367
      %v488 = vunpack.c.l.b16 %v368
      %v489 = vunpack.c.h.b16 %v368
      %v490 = vpack.c.b16 %v428, %v426
      %v491 = vpack.c.b16 %v429, %v427
      %v492 = vpack.c.b16 %v432, %v430
      %v493 = vpack.c.b16 %v433, %v431
      %v494 = vpack.c.b16 %v436, %v434
      %v495 = vpack.c.b16 %v437, %v435
      %v496 = vpack.c.b16 %v440, %v438
      %v497 = vpack.c.b16 %v441, %v439
      %v498 = vpack.c.b16 %v444, %v442
      %v499 = vpack.c.b16 %v445, %v443
      %v500 = vpack.c.b16 %v448, %v446
      %v501 = vpack.c.b16 %v449, %v447
      %v502 = vpack.c.b16 %v452, %v450
      %v503 = vpack.c.b16 %v453, %v451
      %v504 = vpack.c.b16 %v456, %v454
      %v505 = vpack.c.b16 %v457, %v455
      %v506 = vpack.c.b16 %v460, %v458
      %v507 = vpack.c.b16 %v461, %v459
      %v508 = vpack.c.b16 %v464, %v462
      %v509 = vpack.c.b16 %v465, %v463
      %v510 = vpack.c.b16 %v468, %v466
      %v511 = vpack.c.b16 %v469, %v467
      %v512 = vpack.c.b16 %v472, %v470
      %v513 = vpack.c.b16 %v473, %v471
      %v514 = vpack.c.b16 %v476, %v474
      %v515 = vpack.c.b16 %v477, %v475
      %v516 = vpack.c.b16 %v480, %v478
      %v517 = vpack.c.b16 %v481, %v479
      %v518 = vpack.c.b16 %v484, %v482
      %v519 = vpack.c.b16 %v485, %v483
      %v520 = vpack.c.b16 %v488, %v486
      %v521 = vpack.c.b16 %v489, %v487
      %v563 = vunpack.c.l.b16 %v369
      %v564 = vunpack.c.l.b16 %v370
      %v565 = vunpack.c.l.b16 %v371
      %v566 = vunpack.c.l.b16 %v372
      %v567 = vunpack.c.l.b16 %v373
      %v568 = vunpack.c.l.b16 %v374
      %v569 = vunpack.c.l.b16 %v375
      %v570 = vunpack.c.l.b16 %v376
      %v571 = vunpack.c.l.b16 %v377
      %v572 = vunpack.c.l.b16 %v378
      %v573 = vunpack.c.l.b16 %v379
      %v574 = vunpack.c.l.b16 %v380
      %v575 = vunpack.c.l.b16 %v381
      %v576 = vunpack.c.l.b16 %v382
      %v577 = vunpack.c.l.b16 %v383
      %v578 = vunpack.c.l.b16 %v384
      %v579 = vunpack.c.l.b16 %v385
      %v580 = vunpack.c.l.b16 %v386
      %v581 = vunpack.c.l.b16 %v387
      %v582 = vunpack.c.l.b16 %v388
      %v583 = vunpack.c.l.b16 %v389
      %v584 = vunpack.c.l.b16 %v390
      %v585 = vunpack.c.l.b16 %v391
      %v586 = vunpack.c.l.b16 %v392
      %v587 = vunpack.c.l.b16 %v393
      %v588 = vpack.c.b16 %v564, %v563
      %v589 = vpack.c.b16 %v566, %v565
      %v590 = vpack.c.b16 %v568, %v567
      %v591 = vpack.c.b16 %v570, %v569
      %v592 = vpack.c.b16 %v572, %v571
      %v593 = vpack.c.b16 %v574, %v573
      %v594 = vpack.c.b16 %v576, %v575
      %v595 = vpack.c.b16 %v578, %v577
      %v596 = vpack.c.b16 %v580, %v579
      %v597 = vpack.c.b16 %v582, %v581
      %v598 = vpack.c.b16 %v584, %v583
      %v599 = vpack.c.b16 %v586, %v585
      %v600 = vpack.c.b16 %v587, %v587
      %vm613 = vcmask 556032
      %v615 = vsel %vm613, %v491, 0
      %v618 = vsel %vm613, %v493, 0
      %v621 = vsel %vm613, %v495, 0
      %v624 = vsel %vm613, %v497, 0
      %v627 = vsel %vm613, %v499, 0
      %v630 = vsel %vm613, %v501, 0
      %v633 = vsel %vm613, %v503, 0
      %v636 = vsel %vm613, %v505, 0
      %v639 = vsel %vm613, %v507, 0
      %v642 = vsel %vm613, %v509, 0
      %v645 = vsel %vm613, %v511, 0
      %v648 = vsel %vm613, %v513, 0
      %v651 = vsel %vm613, %v515, 0
      %v654 = vsel %vm613, %v517, 0
      %v657 = vsel %vm613, %v519, 0
      %v660 = vsel %vm613, %v521, 0
      %vm662 = vcmask 1041408
      %v664 = vsel %vm662, %v600, 0
      %666 = vmatprep.subr.bf16.mxu0 0
      %667 = vmatpush1.bf16.msra.mxu0 %v588
      %668 = vmatprep.subr.bf16.mxu0 0
      %669 = vmatpush1.bf16.msra.mxu0 %v589
      %670 = vmatprep.subr.bf16.mxu0 0
      %671 = vmatpush1.bf16.msra.mxu0 %v590
      %672 = vmatprep.subr.bf16.mxu0 0
      %673 = vmatpush1.bf16.msra.mxu0 %v591
      %674 = vmatprep.subr.bf16.mxu0 0
      %675 = vmatpush1.bf16.msra.mxu0 %v592
      %676 = vmatprep.subr.bf16.mxu0 0
      %677 = vmatpush1.bf16.msra.mxu0 %v593
      %678 = vmatprep.subr.bf16.mxu0 0
      %679 = vmatpush1.bf16.msra.mxu0 %v594
      %680 = vmatprep.subr.bf16.mxu0 0
      %681 = vmatpush1.bf16.msra.mxu0 %v595
      %682 = vmatprep.subr.bf16.mxu0 0
      %683 = vmatpush1.bf16.msra.mxu0 %v596
      %684 = vmatprep.subr.bf16.mxu0 0
      %685 = vmatpush1.bf16.msra.mxu0 %v597
      %686 = vmatprep.subr.bf16.mxu0 0
      %687 = vmatpush1.bf16.msra.mxu0 %v598
      %688 = vmatprep.subr.bf16.mxu0 0
      %689 = vmatpush1.bf16.msra.mxu0 %v599
      %690 = vmatprep.subr.bf16.mxu0 0
      %691 = vmatpush1.bf16.msra.mxu0 %v664
      %692 = vmatprep.subr.bf16.mxu0 0
      %693 = vmatpush1.bf16.msra.mxu0 0
      %694 = vmatprep.subr.bf16.mxu0 0
      %695 = vmatpush1.bf16.msra.mxu0 0
      %696 = vmatprep.subr.bf16.mxu0 0
      %697 = vmatpush1.bf16.msra.mxu0 0
      %698 = vmatprep.mubr.bf16.mxu0 %v615
      %699 = vmatmul.mubr.bf16.gmra.mrb[0].mxu0 %v490
      %v700 = vpop.f32.mrb[0].mxu0
      %v701 = vadd.f32 0.0, %v700
      %v702 = vpop.f32.mrb[0].mxu0
      %v703 = vpop.f32.mrb[0].mxu0
      %v704 = vadd.f32 0.0, %v703
      %v705 = vpop.f32.mrb[0].mxu0
      %706 = vmatprep.mubr.bf16.mxu0 %v618
      %707 = vmatmul.mubr.bf16.gmra.mrb[0].mxu0 %v492
      %v708 = vpop.f32.mrb[0].mxu0
      %v709 = vadd.f32 0.0, %v708
      %v710 = vpop.f32.mrb[0].mxu0
      %v711 = vpop.f32.mrb[0].mxu0
      %v712 = vadd.f32 0.0, %v711
      %v713 = vpop.f32.mrb[0].mxu0
      %714 = vmatprep.mubr.bf16.mxu0 %v621
      %715 = vmatmul.mubr.bf16.gmra.mrb[0].mxu0 %v494
      %v716 = vpop.f32.mrb[0].mxu0
      %v717 = vadd.f32 0.0, %v716
      %v718 = vpop.f32.mrb[0].mxu0
      %v719 = vpop.f32.mrb[0].mxu0
      %v720 = vadd.f32 0.0, %v719
      %v721 = vpop.f32.mrb[0].mxu0
      %722 = vmatprep.mubr.bf16.mxu0 %v624
      %723 = vmatmul.mubr.bf16.gmra.mrb[0].mxu0 %v496
      %v724 = vpop.f32.mrb[0].mxu0
      %v725 = vadd.f32 0.0, %v724
      %v726 = vpop.f32.mrb[0].mxu0
      %v727 = vpop.f32.mrb[0].mxu0
      %v728 = vadd.f32 0.0, %v727
      %v729 = vpop.f32.mrb[0].mxu0
      %730 = vmatprep.mubr.bf16.mxu0 %v627
      %731 = vmatmul.mubr.bf16.gmra.mrb[0].mxu0 %v498
      %v732 = vpop.f32.mrb[0].mxu0
      %v733 = vadd.f32 0.0, %v732
      %v734 = vpop.f32.mrb[0].mxu0
      %v735 = vpop.f32.mrb[0].mxu0
      %v736 = vadd.f32 0.0, %v735
      %v737 = vpop.f32.mrb[0].mxu0
      %738 = vmatprep.mubr.bf16.mxu0 %v630
      %739 = vmatmul.mubr.bf16.gmra.mrb[0].mxu0 %v500
      %v740 = vpop.f32.mrb[0].mxu0
      %v741 = vadd.f32 0.0, %v740
      %v742 = vpop.f32.mrb[0].mxu0
      %v743 = vpop.f32.mrb[0].mxu0
      %v744 = vadd.f32 0.0, %v743
      %v745 = vpop.f32.mrb[0].mxu0
      %746 = vmatprep.mubr.bf16.mxu0 %v633
      %747 = vmatmul.mubr.bf16.gmra.mrb[0].mxu0 %v502
      %v748 = vpop.f32.mrb[0].mxu0
      %v749 = vadd.f32 0.0, %v748
      %v750 = vpop.f32.mrb[0].mxu0
      %v751 = vpop.f32.mrb[0].mxu0
      %v752 = vadd.f32 0.0, %v751
      %v753 = vpop.f32.mrb[0].mxu0
      %754 = vmatprep.mubr.bf16.mxu0 %v636
      %755 = vmatmul.mubr.bf16.gmra.mrb[0].mxu0 %v504
      %v756 = vpop.f32.mrb[0].mxu0
      %v757 = vadd.f32 0.0, %v756
      %v758 = vpop.f32.mrb[0].mxu0
      %v759 = vpop.f32.mrb[0].mxu0
      %v760 = vadd.f32 0.0, %v759
      %v761 = vpop.f32.mrb[0].mxu0
      %762 = vmatprep.mubr.bf16.mxu0 %v639
      %763 = vmatmul.mubr.bf16.gmra.mrb[0].mxu0 %v506
      %v764 = vpop.f32.mrb[0].mxu0
      %v765 = vadd.f32 0.0, %v764
      %v766 = vpop.f32.mrb[0].mxu0
      %v767 = vpop.f32.mrb[0].mxu0
      %v768 = vadd.f32 0.0, %v767
      %v769 = vpop.f32.mrb[0].mxu0
      %770 = vmatprep.mubr.bf16.mxu0 %v642
      %771 = vmatmul.mubr.bf16.gmra.mrb[0].mxu0 %v508
      %v772 = vpop.f32.mrb[0].mxu0
      %v773 = vadd.f32 0.0, %v772
      %v774 = vpop.f32.mrb[0].mxu0
      %v775 = vpop.f32.mrb[0].mxu0
      %v776 = vadd.f32 0.0, %v775
      %v777 = vpop.f32.mrb[0].mxu0
      %778 = vmatprep.mubr.bf16.mxu0 %v645
      %779 = vmatmul.mubr.bf16.gmra.mrb[0].mxu0 %v510
      %v780 = vpop.f32.mrb[0].mxu0
      %v781 = vadd.f32 0.0, %v780
      %v782 = vpop.f32.mrb[0].mxu0
      %v783 = vpop.f32.mrb[0].mxu0
      %v784 = vadd.f32 0.0, %v783
      %v785 = vpop.f32.mrb[0].mxu0
      %786 = vmatprep.mubr.bf16.mxu0 %v648
      %787 = vmatmul.mubr.bf16.gmra.mrb[0].mxu0 %v512
      %v788 = vpop.f32.mrb[0].mxu0
      %v789 = vadd.f32 0.0, %v788
      %v790 = vpop.f32.mrb[0].mxu0
      %v791 = vpop.f32.mrb[0].mxu0
      %v792 = vadd.f32 0.0, %v791
      %v793 = vpop.f32.mrb[0].mxu0
      %794 = vmatprep.mubr.bf16.mxu0 %v651
      %795 = vmatmul.mubr.bf16.gmra.mrb[0].mxu0 %v514
      %v796 = vpop.f32.mrb[0].mxu0
      %v797 = vadd.f32 0.0, %v796
      %v798 = vpop.f32.mrb[0].mxu0
      %v799 = vpop.f32.mrb[0].mxu0
      %v800 = vadd.f32 0.0, %v799
      %v801 = vpop.f32.mrb[0].mxu0
      %802 = vmatprep.mubr.bf16.mxu0 %v654
      %803 = vmatmul.mubr.bf16.gmra.mrb[0].mxu0 %v516
      %v804 = vpop.f32.mrb[0].mxu0
      %v805 = vadd.f32 0.0, %v804
      %v806 = vpop.f32.mrb[0].mxu0
      %v807 = vpop.f32.mrb[0].mxu0
      %v808 = vadd.f32 0.0, %v807
      %v809 = vpop.f32.mrb[0].mxu0
      %810 = vmatprep.mubr.bf16.mxu0 %v657
      %811 = vmatmul.mubr.bf16.gmra.mrb[0].mxu0 %v518
      %v812 = vpop.f32.mrb[0].mxu0
      %v813 = vadd.f32 0.0, %v812
      %v814 = vpop.f32.mrb[0].mxu0
      %v815 = vpop.f32.mrb[0].mxu0
      %v816 = vadd.f32 0.0, %v815
      %v817 = vpop.f32.mrb[0].mxu0
      %818 = vmatprep.mubr.bf16.mxu0 %v660
      %819 = vmatmul.mubr.bf16.gmra.mrb[0].mxu0 %v520
      %v820 = vpop.f32.mrb[0].mxu0
      %v821 = vadd.f32 0.0, %v820
      %v822 = vpop.f32.mrb[0].mxu0
      %v823 = vpop.f32.mrb[0].mxu0
      %v824 = vadd.f32 0.0, %v823
      %v825 = vpop.f32.mrb[0].mxu0
      %826 = vdwg.mxu0
      %v827 = vadd.f32 %v305, %v701
      %v828 = vadd.f32 %v306, %v704
      %v829 = vadd.f32 %v307, %v709
      %v830 = vadd.f32 %v308, %v712
      %v831 = vadd.f32 %v309, %v717
      %v832 = vadd.f32 %v310, %v720
      %v833 = vadd.f32 %v311, %v725
      %v834 = vadd.f32 %v312, %v728
      %v835 = vadd.f32 %v313, %v733
      %v836 = vadd.f32 %v314, %v736
      %v837 = vadd.f32 %v315, %v741
      %v838 = vadd.f32 %v316, %v744
      %v839 = vadd.f32 %v317, %v749
      %v840 = vadd.f32 %v318, %v752
      %v841 = vadd.f32 %v319, %v757
      %v842 = vadd.f32 %v320, %v760
      %v843 = vadd.f32 %v321, %v765
      %v844 = vadd.f32 %v322, %v768
      %v845 = vadd.f32 %v323, %v773
      %v846 = vadd.f32 %v324, %v776
      %v847 = vadd.f32 %v325, %v781
      %v848 = vadd.f32 %v326, %v784
      %v849 = vadd.f32 %v327, %v789
      %v850 = vadd.f32 %v328, %v792
      %v851 = vadd.f32 %v329, %v797
      %v852 = vadd.f32 %v330, %v800
      %v853 = vadd.f32 %v331, %v805
      %v854 = vadd.f32 %v332, %v808
      %v855 = vadd.f32 %v333, %v813
      %v856 = vadd.f32 %v334, %v816
      %v857 = vadd.f32 %v335, %v821
      %v858 = vadd.f32 %v336, %v824
      %vm859 = vcmask 31744
      %860 = vst.msk [vmem:[#allocation2] sm:$0xff] %vm859, %v827
      %861 = vst.msk [vmem:[#allocation2 + $0x8] sm:$0xff] %vm859, %v828
      %862 = vst.msk [vmem:[#allocation2 + $0x10] sm:$0xff] %vm859, %v829
      %863 = vst.msk [vmem:[#allocation2 + $0x18] sm:$0xff] %vm859, %v830
      %864 = vst.msk [vmem:[#allocation2 + $0x20] sm:$0xff] %vm859, %v831
      %865 = vst.msk [vmem:[#allocation2 + $0x28] sm:$0xff] %vm859, %v832
      %866 = vst.msk [vmem:[#allocation2 + $0x30] sm:$0xff] %vm859, %v833
      %867 = vst.msk [vmem:[#allocation2 + $0x38] sm:$0xff] %vm859, %v834
      %868 = vst.msk [vmem:[#allocation2 + $0x40] sm:$0xff] %vm859, %v835
      %869 = vst.msk [vmem:[#allocation2 + $0x48] sm:$0xff] %vm859, %v836
      %870 = vst.msk [vmem:[#allocation2 + $0x50] sm:$0xff] %vm859, %v837
      %871 = vst.msk [vmem:[#allocation2 + $0x58] sm:$0xff] %vm859, %v838
      %872 = vst.msk [vmem:[#allocation2 + $0x60] sm:$0xff] %vm859, %v839
      %873 = vst.msk [vmem:[#allocation2 + $0x68] sm:$0xff] %vm859, %v840
      %874 = vst.msk [vmem:[#allocation2 + $0x70] sm:$0xff] %vm859, %v841
      %875 = vst.msk [vmem:[#allocation2 + $0x78] sm:$0xff] %vm859, %v842
      %876 = vst.msk [vmem:[#allocation2 + $0x80] sm:$0xff] %vm859, %v843
      %877 = vst.msk [vmem:[#allocation2 + $0x88] sm:$0xff] %vm859, %v844
      %878 = vst.msk [vmem:[#allocation2 + $0x90] sm:$0xff] %vm859, %v845
      %879 = vst.msk [vmem:[#allocation2 + $0x98] sm:$0xff] %vm859, %v846
      %880 = vst.msk [vmem:[#allocation2 + $0xa0] sm:$0xff] %vm859, %v847
      %881 = vst.msk [vmem:[#allocation2 + $0xa8] sm:$0xff] %vm859, %v848
      %882 = vst.msk [vmem:[#allocation2 + $0xb0] sm:$0xff] %vm859, %v849
      %883 = vst.msk [vmem:[#allocation2 + $0xb8] sm:$0xff] %vm859, %v850
      %884 = vst.msk [vmem:[#allocation2 + $0xc0] sm:$0xff] %vm859, %v851
      %885 = vst.msk [vmem:[#allocation2 + $0xc8] sm:$0xff] %vm859, %v852
      %886 = vst.msk [vmem:[#allocation2 + $0xd0] sm:$0xff] %vm859, %v853
      %887 = vst.msk [vmem:[#allocation2 + $0xd8] sm:$0xff] %vm859, %v854
      %888 = vst.msk [vmem:[#allocation2 + $0xe0] sm:$0xff] %vm859, %v855
      %889 = vst.msk [vmem:[#allocation2 + $0xe8] sm:$0xff] %vm859, %v856
      %890 = vst.msk [vmem:[#allocation2 + $0xf0] sm:$0xff] %vm859, %v857
      %891 = vst.msk [vmem:[#allocation2 + $0xf8] sm:$0xff] %vm859, %v858
      // Predicated region
      $region37: #{residual_block_forward.19} parent=31 // pred_check
        %p892 = pneg %p268
      $region38: #{residual_block_forward.19} parent=31 // pred_check_branch
        %894 = sbr.rel (%p892) target = $region40
      $region39: #{residual_block_forward.19} parent=31 // pred_region
        %v895 = vld [vmem:[#allocation2] sm:$0xff]
        %v896 = vld [vmem:[#allocation2 + $0x8] sm:$0xff]
        %v897 = vld [vmem:[#allocation2 + $0x10] sm:$0xff]
        %v898 = vld [vmem:[#allocation2 + $0x18] sm:$0xff]
        %v899 = vld [vmem:[#allocation2 + $0x20] sm:$0xff]
        %v900 = vld [vmem:[#allocation2 + $0x28] sm:$0xff]
        %v901 = vld [vmem:[#allocation2 + $0x30] sm:$0xff]
        %v902 = vld [vmem:[#allocation2 + $0x38] sm:$0xff]
        %v903 = vld [vmem:[#allocation2 + $0x40] sm:$0xff]
        %v904 = vld [vmem:[#allocation2 + $0x48] sm:$0xff]
        %v905 = vld [vmem:[#allocation2 + $0x50] sm:$0xff]
        %v906 = vld [vmem:[#allocation2 + $0x58] sm:$0xff]
        %v907 = vld [vmem:[#allocation2 + $0x60] sm:$0xff]
        %v908 = vld [vmem:[#allocation2 + $0x68] sm:$0xff]
        %v909 = vld [vmem:[#allocation2 + $0x70] sm:$0xff]
        %v910 = vld [vmem:[#allocation2 + $0x78] sm:$0xff]
        %v911 = vld [vmem:[#allocation2 + $0x80] sm:$0xff]
        %v912 = vld [vmem:[#allocation2 + $0x88] sm:$0xff]
        %v913 = vld [vmem:[#allocation2 + $0x90] sm:$0xff]
        %v914 = vld [vmem:[#allocation2 + $0x98] sm:$0xff]
        %v915 = vld [vmem:[#allocation2 + $0xa0] sm:$0xff]
        %v916 = vld [vmem:[#allocation2 + $0xa8] sm:$0xff]
        %v917 = vld [vmem:[#allocation2 + $0xb0] sm:$0xff]
        %v918 = vld [vmem:[#allocation2 + $0xb8] sm:$0xff]
        %v919 = vld [vmem:[#allocation2 + $0xc0] sm:$0xff]
        %v920 = vld [vmem:[#allocation2 + $0xc8] sm:$0xff]
        %v921 = vld [vmem:[#allocation2 + $0xd0] sm:$0xff]
        %v922 = vld [vmem:[#allocation2 + $0xd8] sm:$0xff]
        %v923 = vld [vmem:[#allocation2 + $0xe0] sm:$0xff]
        %v924 = vld [vmem:[#allocation2 + $0xe8] sm:$0xff]
        %v925 = vld [vmem:[#allocation2 + $0xf0] sm:$0xff]
        %v926 = vld [vmem:[#allocation2 + $0xf8] sm:$0xff]
        %v927 = vld [vmem:[%s257] sm:$0x1]
        %v929 = vlaneseq
        %v930 = vshrl.u32 %v929, 7
        %v931 = vsub.s32 0, %v930
        %v932 = vrot.slane %v927, %v931
        %v934 = vadd.f32 %v895, %v932
        %v935 = vadd.f32 %v896, %v932
        %v936 = vadd.f32 %v897, %v932
        %v937 = vadd.f32 %v898, %v932
        %v938 = vadd.f32 %v899, %v932
        %v939 = vadd.f32 %v900, %v932
        %v940 = vadd.f32 %v901, %v932
        %v941 = vadd.f32 %v902, %v932
        %v942 = vadd.f32 %v903, %v932
        %v943 = vadd.f32 %v904, %v932
        %v944 = vadd.f32 %v905, %v932
        %v945 = vadd.f32 %v906, %v932
        %v946 = vadd.f32 %v907, %v932
        %v947 = vadd.f32 %v908, %v932
        %v948 = vadd.f32 %v909, %v932
        %v949 = vadd.f32 %v910, %v932
        %v950 = vadd.f32 %v911, %v932
        %v951 = vadd.f32 %v912, %v932
        %v952 = vadd.f32 %v913, %v932
        %v953 = vadd.f32 %v914, %v932
        %v954 = vadd.f32 %v915, %v932
        %v955 = vadd.f32 %v916, %v932
        %v956 = vadd.f32 %v917, %v932
        %v957 = vadd.f32 %v918, %v932
        %v958 = vadd.f32 %v919, %v932
        %v959 = vadd.f32 %v920, %v932
        %v960 = vadd.f32 %v921, %v932
        %v961 = vadd.f32 %v922, %v932
        %v962 = vadd.f32 %v923, %v932
        %v963 = vadd.f32 %v924, %v932
        %v964 = vadd.f32 %v925, %v932
        %v965 = vadd.f32 %v926, %v932
        %966 = vst.msk [vmem:[%s265] sm:$0xff] %vm859, %v934
        %967 = vst.msk [vmem:[%s265 + $0x8] sm:$0xff] %vm859, %v935
        %968 = vst.msk [vmem:[%s265 + $0x10] sm:$0xff] %vm859, %v936
        %969 = vst.msk [vmem:[%s265 + $0x18] sm:$0xff] %vm859, %v937
        %970 = vst.msk [vmem:[%s265 + $0x20] sm:$0xff] %vm859, %v938
        %971 = vst.msk [vmem:[%s265 + $0x28] sm:$0xff] %vm859, %v939
        %972 = vst.msk [vmem:[%s265 + $0x30] sm:$0xff] %vm859, %v940
        %973 = vst.msk [vmem:[%s265 + $0x38] sm:$0xff] %vm859, %v941
        %974 = vst.msk [vmem:[%s265 + $0x40] sm:$0xff] %vm859, %v942
        %975 = vst.msk [vmem:[%s265 + $0x48] sm:$0xff] %vm859, %v943
        %976 = vst.msk [vmem:[%s265 + $0x50] sm:$0xff] %vm859, %v944
        %977 = vst.msk [vmem:[%s265 + $0x58] sm:$0xff] %vm859, %v945
        %978 = vst.msk [vmem:[%s265 + $0x60] sm:$0xff] %vm859, %v946
        %979 = vst.msk [vmem:[%s265 + $0x68] sm:$0xff] %vm859, %v947
        %980 = vst.msk [vmem:[%s265 + $0x70] sm:$0xff] %vm859, %v948
        %981 = vst.msk [vmem:[%s265 + $0x78] sm:$0xff] %vm859, %v949
        %982 = vst.msk [vmem:[%s265 + $0x80] sm:$0xff] %vm859, %v950
        %983 = vst.msk [vmem:[%s265 + $0x88] sm:$0xff] %vm859, %v951
        %984 = vst.msk [vmem:[%s265 + $0x90] sm:$0xff] %vm859, %v952
        %985 = vst.msk [vmem:[%s265 + $0x98] sm:$0xff] %vm859, %v953
        %986 = vst.msk [vmem:[%s265 + $0xa0] sm:$0xff] %vm859, %v954
        %987 = vst.msk [vmem:[%s265 + $0xa8] sm:$0xff] %vm859, %v955
        %988 = vst.msk [vmem:[%s265 + $0xb0] sm:$0xff] %vm859, %v956
        %989 = vst.msk [vmem:[%s265 + $0xb8] sm:$0xff] %vm859, %v957
        %990 = vst.msk [vmem:[%s265 + $0xc0] sm:$0xff] %vm859, %v958
        %991 = vst.msk [vmem:[%s265 + $0xc8] sm:$0xff] %vm859, %v959
        %992 = vst.msk [vmem:[%s265 + $0xd0] sm:$0xff] %vm859, %v960
        %993 = vst.msk [vmem:[%s265 + $0xd8] sm:$0xff] %vm859, %v961
        %994 = vst.msk [vmem:[%s265 + $0xe0] sm:$0xff] %vm859, %v962
        %995 = vst.msk [vmem:[%s265 + $0xe8] sm:$0xff] %vm859, %v963
        %996 = vst.msk [vmem:[%s265 + $0xf0] sm:$0xff] %vm859, %v964
        %997 = vst.msk [vmem:[%s265 + $0xf8] sm:$0xff] %vm859, %v965
      $region40: #{residual_block_forward.19} parent=31 // pred_fallthru
        _
      %s998 = smul.u32 32, %s19
      %p999 = scmp.lt.s32.totalorder %s998, 63
      %s1000 = scalar_select %p999, %s998, 63
      %p1001 = scmp.lt.s32.totalorder %s20, 0
      %s1002 = scalar_select %p1001, %s20, 0
      %s1003 = sadd.s32 %s1002, %s1000
      %s1004 = smul.addr %s1003, 8
      %s1005 = scalar_lea.vmem %s3, %s1004
      // Predicated region
      $region41: #{residual_block_forward.19} parent=31 // pred_check
        %p1006 = pneg %p135
      $region42: #{residual_block_forward.19} parent=31 // pred_check_branch
        %1008 = sbr.rel (%p1006) target = $region44
      $region43: #{residual_block_forward.19} parent=31 // pred_region
        %s1009 = smul.u32 32, %s19
      $region44: #{residual_block_forward.19} parent=31 // pred_fallthru
        _
    $region32: #{residual_block_forward.19} parent=5 // pred_fallthru
      _
    %p1010 = scmp.le.s32.totalorder 2, %s9
    // Predicated region
    $region45: #{residual_block_forward.19} parent=5 // pred_check
      %p1011 = pneg %p1010
    $region46: #{residual_block_forward.19} parent=5 // pred_check_branch
      %1013 = sbr.rel (%p1011) target = $region48
    $region47: #{residual_block_forward.19} parent=5 // pred_region
      %s1014 = ssub.s32 %s9, 2
      // Predicated region
      $region49: #{residual_block_forward.19} parent=47 // pred_check
        %p1015 = pneg %p141
      $region50: #{residual_block_forward.19} parent=47 // pred_check_branch
        %1017 = sbr.rel (%p1015) target = $region52
      $region51: #{residual_block_forward.19} parent=47 // pred_region
        %s1018 = smul.u32 32, %s22
        %p1019 = scmp.lt.s32.totalorder %s1018, 63
        %s1020 = scalar_select %p1019, %s1018, 63
        %p1021 = scmp.lt.s32.totalorder %s23, 0
        %s1022 = scalar_select %p1021, %s23, 0
        %s1023 = sadd.s32 %s1022, %s1020
        %s1024 = smul.addr %s1023, 8
        %s1025 = scalar_lea.vmem %s3, %s1024
      $region52: #{residual_block_forward.19} parent=47 // pred_fallthru
        _
    $region48: #{residual_block_forward.19} parent=5 // pred_fallthru
      _
  $region6: #{residual_block_forward.19} parent=0 // loop_footer
    %s13 = sadd.s32 1, %s9
  $region7: #{residual_block_forward.19} parent=0 // loop_footer_branch
    %8 = sbr.rel target = $region3
  $region8: #{residual_block_forward.19} parent=0 // loop_exit
    _

// kernel: residual_block_forward.21
$region0: #{residual_block_forward.21}
  #allocation0 [shape = 'u32[]', space=smem, size = 0x4, offset = 0x4, fixed_abs, tag = 'smem constant byte address 0x4 - core index']
  #allocation1 [shape = 'u32[144,128]{1,0:T(1,128)}', space=vmem, size = 0x12000, scoped, tag = 'internal scratch']
  #allocation2 [shape = 'f32[1,1]{1,0:T(1,128)S(1)}', space=vmem, size = 0x200, scoped, tag = 'scoped memory for residual_block_forward.21']
  %s0 = inlined_call_operand.vmem [shape: f32[512,4], index: 0, kind: input, shape index: {}]
  %s1 = inlined_call_operand.vmem [shape: f32[512,4], index: 1, kind: input, shape index: {}]
  %s2 = inlined_call_operand.vmem [shape: bf16[512,36], index: 2, kind: input, shape index: {}]
  %s3 = inlined_call_operand.vmem [shape: f32[1,36], index: 3, kind: input, shape index: {}]
  %s4 = inlined_call_operand.<no memory space> [shape: f32[1,1], index: 4, kind: input, shape index: {}]
  %s5 = inlined_call_operand.vmem [shape: f32[512,4], index: 5, kind: output, shape index: {}]
  %s6 = sld [smem:[#allocation0]]
  $region53: #{residual_block_forward.21} parent=0
    _
  %s8 = ssub.s32 1, %s6
  %s9 = scalar_select 0, %s8, %s6
  %v10 = vstv %s4
  %11 = vst [vmem:[#allocation2] sm:$0x1] %v10
  loop: start=0, step=1, limit=4
  $region2: #{residual_block_forward.21} parent=0 // loop_pre_header
    _
  $region3: #{residual_block_forward.21} parent=0 // loop_header
    %s13 = sphi 0, %s17
    %p14 = scmp.ge.s32.totalorder %s13, 4
    %s23 = sphi 0, %s25
    %s26 = sphi 0, %s23
    %s27 = sphi 0, %s26
    %s43 = sphi 0, %s27
    %s49 = sphi 0, %s51
    %s52 = sphi 0, %s49
    %s53 = sphi 0, %s52
    %s69 = sphi 0, %s53
    %s75 = sphi 0, %s77
    %s78 = sphi 0, %s75
    %s79 = sphi 0, %s78
    %s95 = sphi 0, %s79
    %s99 = sphi 0, %s99
    %s101 = sphi 0, %s99
    %s102 = sphi 0, %s101
    %s116 = sphi 0, %s102
    %s120 = sphi 0, %s120
    %s122 = sphi 0, %s120
    %s123 = sphi 0, %s122
    %s137 = sphi 0, %s123
    %s143 = sphi 0, %s145
    %s146 = sphi 0, %s143
    %s147 = sphi 0, %s146
    %s163 = sphi 0, %s147
  $region4: #{residual_block_forward.21} parent=0 // loop_header_branch
    %16 = sbr.rel (%p14) target = $region8
  $region5: #{residual_block_forward.21} parent=0 // loop_body
    %s18 = ssub.s32 %s13, 1
    %s19 = ssub.s32 %s13, 2
    %s20 = sadd.s32 %s13, 1
    %s21 = ssub.s32 %s13, %s20
    %p22 = scmp.eq.s32.totalorder %s21, 0
    %s24 = sadd.s32 %s23, 1
    %s25 = scalar_select %p22, %s23, %s24
    %p28 = pneg %p22
    %p29 = scmp.eq.s32.totalorder %s13, 1
    %p30 = por %p28, %p29
    %p31 = scmp.ne.s32.totalorder %s23, %s26
    %p32 = scmp.eq.s32.totalorder %s13, 0
    %p33 = por %p31, %p32
    %p34 = scmp.ne.s32.totalorder %s23, %s26
    %p35 = scmp.eq.s32.totalorder %s18, 1
    %p36 = por %p34, %p35
    %p37 = scmp.ne.s32.totalorder %s26, %s27
    %p38 = scmp.eq.s32.totalorder %s18, 0
    %p39 = por %p37, %p38
    %p40 = scmp.ne.s32.totalorder %s26, %s27
    %p41 = scmp.eq.s32.totalorder %s19, 1
    %p42 = por %p40, %p41
    %p44 = scmp.ne.s32.totalorder %s27, %s43
    %p45 = scmp.eq.s32.totalorder %s19, 0
    %p46 = por %p44, %p45
    %s47 = ssub.s32 %s13, %s20
    %p48 = scmp.eq.s32.totalorder %s47, 0
    %s50 = sadd.s32 %s49, 1
    %s51 = scalar_select %p48, %s49, %s50
    %p54 = pneg %p48
    %p55 = scmp.eq.s32.totalorder %s13, 1
    %p56 = por %p54, %p55
    %p57 = scmp.ne.s32.totalorder %s49, %s52
    %p58 = scmp.eq.s32.totalorder %s13, 0
    %p59 = por %p57, %p58
    %p60 = scmp.ne.s32.totalorder %s49, %s52
    %p61 = scmp.eq.s32.totalorder %s18, 1
    %p62 = por %p60, %p61
    %p63 = scmp.ne.s32.totalorder %s52, %s53
    %p64 = scmp.eq.s32.totalorder %s18, 0
    %p65 = por %p63, %p64
    %p66 = scmp.ne.s32.totalorder %s52, %s53
    %p67 = scmp.eq.s32.totalorder %s19, 1
    %p68 = por %p66, %p67
    %p70 = scmp.ne.s32.totalorder %s53, %s69
    %p71 = scmp.eq.s32.totalorder %s19, 0
    %p72 = por %p70, %p71
    %s73 = ssub.s32 %s13, %s20
    %p74 = scmp.eq.s32.totalorder %s73, 0
    %s76 = sadd.s32 %s75, 1
    %s77 = scalar_select %p74, %s75, %s76
    %p80 = pneg %p74
    %p81 = scmp.eq.s32.totalorder %s13, 1
    %p82 = por %p80, %p81
    %p83 = scmp.ne.s32.totalorder %s75, %s78
    %p84 = scmp.eq.s32.totalorder %s13, 0
    %p85 = por %p83, %p84
    %p86 = scmp.ne.s32.totalorder %s75, %s78
    %p87 = scmp.eq.s32.totalorder %s18, 1
    %p88 = por %p86, %p87
    %p89 = scmp.ne.s32.totalorder %s78, %s79
    %p90 = scmp.eq.s32.totalorder %s18, 0
    %p91 = por %p89, %p90
    %p92 = scmp.ne.s32.totalorder %s78, %s79
    %p93 = scmp.eq.s32.totalorder %s19, 1
    %p94 = por %p92, %p93
    %p96 = scmp.ne.s32.totalorder %s79, %s95
    %p97 = scmp.eq.s32.totalorder %s19, 0
    %p98 = por %p96, %p97
    %s100 = sadd.s32 %s99, 1
    %p103 = scmp.eq.s32.totalorder %s13, 1
    %p104 = scmp.ne.s32.totalorder %s99, %s101
    %p105 = scmp.eq.s32.totalorder %s13, 0
    %p106 = por %p104, %p105
    %p107 = scmp.ne.s32.totalorder %s99, %s101
    %p108 = scmp.eq.s32.totalorder %s18, 1
    %p109 = por %p107, %p108
    %p110 = scmp.ne.s32.totalorder %s101, %s102
    %p111 = scmp.eq.s32.totalorder %s18, 0
    %p112 = por %p110, %p111
    %p113 = scmp.ne.s32.totalorder %s101, %s102
    %p114 = scmp.eq.s32.totalorder %s19, 1
    %p115 = por %p113, %p114
    %p117 = scmp.ne.s32.totalorder %s102, %s116
    %p118 = scmp.eq.s32.totalorder %s19, 0
    %p119 = por %p117, %p118
    %s121 = sadd.s32 %s120, 1
    %p124 = scmp.eq.s32.totalorder %s13, 1
    %p125 = scmp.ne.s32.totalorder %s120, %s122
    %p126 = scmp.eq.s32.totalorder %s13, 0
    %p127 = por %p125, %p126
    %p128 = scmp.ne.s32.totalorder %s120, %s122
    %p129 = scmp.eq.s32.totalorder %s18, 1
    %p130 = por %p128, %p129
    %p131 = scmp.ne.s32.totalorder %s122, %s123
    %p132 = scmp.eq.s32.totalorder %s18, 0
    %p133 = por %p131, %p132
    %p134 = scmp.ne.s32.totalorder %s122, %s123
    %p135 = scmp.eq.s32.totalorder %s19, 1
    %p136 = por %p134, %p135
    %p138 = scmp.ne.s32.totalorder %s123, %s137
    %p139 = scmp.eq.s32.totalorder %s19, 0
    %p140 = por %p138, %p139
    %s141 = ssub.s32 %s13, %s20
    %p142 = scmp.eq.s32.totalorder %s141, 0
    %s144 = sadd.s32 %s143, 1
    %s145 = scalar_select %p142, %s143, %s144
    %p148 = pneg %p142
    %p149 = scmp.eq.s32.totalorder %s13, 1
    %p150 = por %p148, %p149
    %p151 = scmp.ne.s32.totalorder %s143, %s146
    %p152 = scmp.eq.s32.totalorder %s13, 0
    %p153 = por %p151, %p152
    %p154 = scmp.ne.s32.totalorder %s143, %s146
    %p155 = scmp.eq.s32.totalorder %s18, 1
    %p156 = por %p154, %p155
    %p157 = scmp.ne.s32.totalorder %s146, %s147
    %p158 = scmp.eq.s32.totalorder %s18, 0
    %p159 = por %p157, %p158
    %p160 = scmp.ne.s32.totalorder %s146, %s147
    %p161 = scmp.eq.s32.totalorder %s19, 1
    %p162 = por %p160, %p161
    %p164 = scmp.ne.s32.totalorder %s147, %s163
    %p165 = scmp.eq.s32.totalorder %s19, 0
    %p166 = por %p164, %p165
    %p167 = scmp.le.s32.totalorder 1, %s13
    %p168 = scmp.lt.s32.totalorder %s13, 3
    %p169 = pnand %p167, %p168
    %p170 = pneg %p169
    // Predicated region
    $region9: #{residual_block_forward.21} parent=5 // pred_check
      _
    $region10: #{residual_block_forward.21} parent=5 // pred_check_branch
      %172 = sbr.rel (%p169) target = $region12
    $region11: #{residual_block_forward.21} parent=5 // pred_region
      %s173 = ssub.s32 %s13, 1
      // Predicated region
      $region13: #{residual_block_forward.21} parent=11 // pred_check
        %p174 = pneg %p112
      $region14: #{residual_block_forward.21} parent=11 // pred_check_branch
        %176 = sbr.rel (%p174) target = $region16
      $region15: #{residual_block_forward.21} parent=11 // pred_region
        _
      $region16: #{residual_block_forward.21} parent=11 // pred_fallthru
        _
      // Predicated region
      $region17: #{residual_block_forward.21} parent=11 // pred_check
        %p177 = pneg %p133
      $region18: #{residual_block_forward.21} parent=11 // pred_check_branch
        %179 = sbr.rel (%p177) target = $region20
      $region19: #{residual_block_forward.21} parent=11 // pred_region
        _
      $region20: #{residual_block_forward.21} parent=11 // pred_fallthru
        _
    $region12: #{residual_block_forward.21} parent=5 // pred_fallthru
      _
    %p180 = scmp.lt.s32.totalorder %s13, 2
    // Predicated region
    $region21: #{residual_block_forward.21} parent=5 // pred_check
      %p181 = pneg %p180
    $region22: #{residual_block_forward.21} parent=5 // pred_check_branch
      %183 = sbr.rel (%p181) target = $region24
    $region23: #{residual_block_forward.21} parent=5 // pred_region
      // Predicated region
      $region25: #{residual_block_forward.21} parent=23 // pred_check
        %p184 = pneg %p33
      $region26: #{residual_block_forward.21} parent=23 // pred_check_branch
        %186 = sbr.rel (%p184) target = $region28
      $region27: #{residual_block_forward.21} parent=23 // pred_region
        %s187 = smul.u32 32, %s13
        %p188 = scmp.lt.s32.totalorder %s187, 63
        %s189 = scalar_select %p188, %s187, 63
        %s190 = smul.addr %s189, 8
        %s191 = scalar_lea.vmem %s0, %s190
        %s192 = smul.u32 32, %s13
      $region28: #{residual_block_forward.21} parent=23 // pred_fallthru
        _
      // Predicated region
      $region29: #{residual_block_forward.21} parent=23 // pred_check
        %p193 = pneg %p59
      $region30: #{residual_block_forward.21} parent=23 // pred_check_branch
        %195 = sbr.rel (%p193) target = $region32
      $region31: #{residual_block_forward.21} parent=23 // pred_region
        %s196 = smul.u32 32, %s13
        %p197 = scmp.lt.s32.totalorder %s196, 63
        %s198 = scalar_select %p197, %s196, 63
        %s199 = smul.addr %s198, 8
        %s200 = scalar_lea.vmem %s1, %s199
        %s201 = smul.u32 32, %s13
      $region32: #{residual_block_forward.21} parent=23 // pred_fallthru
        _
      // Predicated region
      $region33: #{residual_block_forward.21} parent=23 // pred_check
        %p202 = pneg %p85
      $region34: #{residual_block_forward.21} parent=23 // pred_check_branch
        %204 = sbr.rel (%p202) target = $region36
      $region35: #{residual_block_forward.21} parent=23 // pred_region
        %s205 = smul.u32 32, %s13
        %p206 = scmp.lt.s32.totalorder %s205, 63
        %s207 = scalar_select %p206, %s205, 63
        %s208 = smul.addr %s207, 4
        %s209 = scalar_lea.vmem %s2, %s208
        %s210 = smul.u32 32, %s13
      $region36: #{residual_block_forward.21} parent=23 // pred_fallthru
        _
    $region24: #{residual_block_forward.21} parent=5 // pred_fallthru
      _
    %p211 = scmp.le.s32.totalorder 1, %s13
    %p212 = scmp.lt.s32.totalorder %s13, 3
    %p213 = pnand %p211, %p212
    %p214 = pneg %p213
    // Predicated region
    $region37: #{residual_block_forward.21} parent=5 // pred_check
      _
    $region38: #{residual_block_forward.21} parent=5 // pred_check_branch
      %216 = sbr.rel (%p213) target = $region40
    $region39: #{residual_block_forward.21} parent=5 // pred_region
      %s217 = ssub.s32 %s13, 1
      %s218 = smul.u32 32, %s18
      %p219 = scmp.lt.s32.totalorder %s218, 63
      %s220 = scalar_select %p219, %s218, 63
      %s221 = smul.addr %s220, 8
      %s222 = scalar_lea.vmem %s0, %s221
      %p223 = pneg %p39
      %p224 = pneg %p36
      %s225 = smul.u32 32, %s18
      %p226 = scmp.lt.s32.totalorder %s225, 63
      %s227 = scalar_select %p226, %s225, 63
      %s228 = smul.addr %s227, 8
      %s229 = scalar_lea.vmem %s1, %s228
      %p230 = pneg %p65
      %p231 = pneg %p62
      %s232 = smul.u32 32, %s18
      %p233 = scmp.lt.s32.totalorder %s232, 63
      %s234 = scalar_select %p233, %s232, 63
      %s235 = smul.addr %s234, 4
      %s236 = scalar_lea.vmem %s2, %s235
      %p237 = pneg %p91
      %p238 = pneg %p88
      %p239 = pneg %p112
      %p240 = pneg %p109
      %p241 = pneg %p133
      %p242 = pneg %p130
      %p243 = pneg %p159
      %p244 = pneg %p156
      %s245 = smul.u32 32, %s18
      %p246 = scmp.lt.s32.totalorder %s245, 63
      %s247 = scalar_select %p246, %s245, 63
      %s248 = smul.addr %s247, 8
      %s249 = scalar_lea.vmem %s5, %s248
      %s250 = smul.u32 32, %s18
      %p251 = scmp.lt.s32.totalorder %s250, 63
      %s252 = scalar_select %p251, %s250, 63
      %s253 = smul.addr %s252, 8
      %s254 = scalar_lea.vmem %s0, %s253
      %s255 = smul.u32 32, %s18
      %s256 = smul.u32 32, %s18
      %p257 = scmp.lt.s32.totalorder %s256, 63
      %s258 = scalar_select %p257, %s256, 63
      %s259 = smul.addr %s258, 8
      %s260 = scalar_lea.vmem %s1, %s259
      %s261 = smul.u32 32, %s18
      %s262 = smul.u32 32, %s18
      %p263 = scmp.lt.s32.totalorder %s262, 63
      %s264 = scalar_select %p263, %s262, 63
      %s265 = smul.addr %s264, 4
      %s266 = scalar_lea.vmem %s2, %s265
      %s267 = smul.u32 32, %s18
      %s268 = smul.u32 32, %s18
      %p269 = scmp.lt.s32.totalorder %s268, 63
      %s270 = scalar_select %p269, %s268, 63
      %s271 = smul.addr %s270, 8
      %s272 = scalar_lea.vmem %s5, %s271
      %s273 = smul.u32 32, %s18
      %v274 = vld [vmem:[%s266] sm:$0xf]
      %v275 = vld [vmem:[%s266 + $0x4] sm:$0xf]
      %v276 = vld [vmem:[%s266 + $0x8] sm:$0xf]
      %v277 = vld [vmem:[%s266 + $0xc] sm:$0xf]
      %v278 = vld [vmem:[%s266 + $0x10] sm:$0xf]
      %v279 = vld [vmem:[%s266 + $0x14] sm:$0xf]
      %v280 = vld [vmem:[%s266 + $0x18] sm:$0xf]
      %v281 = vld [vmem:[%s266 + $0x1c] sm:$0xf]
      %v282 = vld [vmem:[%s266 + $0x20] sm:$0xf]
      %v283 = vld [vmem:[%s266 + $0x24] sm:$0xf]
      %v284 = vld [vmem:[%s266 + $0x28] sm:$0xf]
      %v285 = vld [vmem:[%s266 + $0x2c] sm:$0xf]
      %v286 = vld [vmem:[%s266 + $0x30] sm:$0xf]
      %v287 = vld [vmem:[%s266 + $0x34] sm:$0xf]
      %v288 = vld [vmem:[%s266 + $0x38] sm:$0xf]
      %v289 = vld [vmem:[%s266 + $0x3c] sm:$0xf]
      %v290 = vld [vmem:[%s266 + $0x40] sm:$0xf]
      %v291 = vld [vmem:[%s266 + $0x44] sm:$0xf]
      %v292 = vld [vmem:[%s266 + $0x48] sm:$0xf]
      %v293 = vld [vmem:[%s266 + $0x4c] sm:$0xf]
      %v294 = vld [vmem:[%s266 + $0x50] sm:$0xf]
      %v295 = vld [vmem:[%s266 + $0x54] sm:$0xf]
      %v296 = vld [vmem:[%s266 + $0x58] sm:$0xf]
      %v297 = vld [vmem:[%s266 + $0x5c] sm:$0xf]
      %v298 = vld [vmem:[%s266 + $0x60] sm:$0xf]
      %v299 = vld [vmem:[%s266 + $0x64] sm:$0xf]
      %v300 = vld [vmem:[%s266 + $0x68] sm:$0xf]
      %v301 = vld [vmem:[%s266 + $0x6c] sm:$0xf]
      %v302 = vld [vmem:[%s266 + $0x70] sm:$0xf]
      %v303 = vld [vmem:[%s266 + $0x74] sm:$0xf]
      %v304 = vld [vmem:[%s266 + $0x78] sm:$0xf]
      %v305 = vld [vmem:[%s266 + $0x7c] sm:$0xf]
      %v306 = vunpack.c.l.bf16 %v274
      %v307 = vunpack.c.l.bf16 %v275
      %v308 = vunpack.c.l.bf16 %v276
      %v309 = vunpack.c.l.bf16 %v277
      %v310 = vunpack.c.l.bf16 %v278
      %v311 = vunpack.c.l.bf16 %v279
      %v312 = vunpack.c.l.bf16 %v280
      %v313 = vunpack.c.l.bf16 %v281
      %v314 = vunpack.c.l.bf16 %v282
      %v315 = vunpack.c.l.bf16 %v283
      %v316 = vunpack.c.l.bf16 %v284
      %v317 = vunpack.c.l.bf16 %v285
      %v318 = vunpack.c.l.bf16 %v286
      %v319 = vunpack.c.l.bf16 %v287
      %v320 = vunpack.c.l.bf16 %v288
      %v321 = vunpack.c.l.bf16 %v289
      %v322 = vunpack.c.l.bf16 %v290
      %v323 = vunpack.c.l.bf16 %v291
      %v324 = vunpack.c.l.bf16 %v292
      %v325 = vunpack.c.l.bf16 %v293
      %v326 = vunpack.c.l.bf16 %v294
      %v327 = vunpack.c.l.bf16 %v295
      %v328 = vunpack.c.l.bf16 %v296
      %v329 = vunpack.c.l.bf16 %v297
      %v330 = vunpack.c.l.bf16 %v298
      %v331 = vunpack.c.l.bf16 %v299
      %v332 = vunpack.c.l.bf16 %v300
      %v333 = vunpack.c.l.bf16 %v301
      %v334 = vunpack.c.l.bf16 %v302
      %v335 = vunpack.c.l.bf16 %v303
      %v336 = vunpack.c.l.bf16 %v304
      %v337 = vunpack.c.l.bf16 %v305
      %v338 = vld [vmem:[%s3] sm:$0x1]
      %v340 = vlaneseq
      %v341 = vshrl.u32 %v340, 7
      %v342 = vsub.s32 0, %v341
      %v343 = vrot.slane %v338, %v342
      %v345 = vmul.f32 %v306, %v343
      %v346 = vmul.f32 %v307, %v343
      %v347 = vmul.f32 %v308, %v343
      %v348 = vmul.f32 %v309, %v343
      %v349 = vmul.f32 %v310, %v343
      %v350 = vmul.f32 %v311, %v343
      %v351 = vmul.f32 %v312, %v343
      %v352 = vmul.f32 %v313, %v343
      %v353 = vmul.f32 %v314, %v343
      %v354 = vmul.f32 %v315, %v343
      %v355 = vmul.f32 %v316, %v343
      %v356 = vmul.f32 %v317, %v343
      %v357 = vmul.f32 %v318, %v343
      %v358 = vmul.f32 %v319, %v343
      %v359 = vmul.f32 %v320, %v343
      %v360 = vmul.f32 %v321, %v343
      %v361 = vmul.f32 %v322, %v343
      %v362 = vmul.f32 %v323, %v343
      %v363 = vmul.f32 %v324, %v343
      %v364 = vmul.f32 %v325, %v343
      %v365 = vmul.f32 %v326, %v343
      %v366 = vmul.f32 %v327, %v343
      %v367 = vmul.f32 %v328, %v343
      %v368 = vmul.f32 %v329, %v343
      %v369 = vmul.f32 %v330, %v343
      %v370 = vmul.f32 %v331, %v343
      %v371 = vmul.f32 %v332, %v343
      %v372 = vmul.f32 %v333, %v343
      %v373 = vmul.f32 %v334, %v343
      %v374 = vmul.f32 %v335, %v343
      %v375 = vmul.f32 %v336, %v343
      %v376 = vmul.f32 %v337, %v343
      %vm377 = vcmask 293888
      %v378 = vsel %vm377, %v345, 0.0
      %379 = vadd.xlane.f32.xlu0 %v378
      %v380 = vpop.xlane.xlu0 %379
      %v381 = vsel %vm377, %v346, 0.0
      %382 = vadd.xlane.f32.xlu0 %v381
      %v383 = vpop.xlane.xlu0 %382
      %v384 = vsel %vm377, %v347, 0.0
      %385 = vadd.xlane.f32.xlu0 %v384
      %v386 = vpop.xlane.xlu0 %385
      %v387 = vsel %vm377, %v348, 0.0
      %388 = vadd.xlane.f32.xlu0 %v387
      %v389 = vpop.xlane.xlu0 %388
      %v390 = vsel %vm377, %v349, 0.0
      %391 = vadd.xlane.f32.xlu0 %v390
      %v392 = vpop.xlane.xlu0 %391
      %v393 = vsel %vm377, %v350, 0.0
      %394 = vadd.xlane.f32.xlu0 %v393
      %v395 = vpop.xlane.xlu0 %394
      %v396 = vsel %vm377, %v351, 0.0
      %397 = vadd.xlane.f32.xlu0 %v396
      %v398 = vpop.xlane.xlu0 %397
      %v399 = vsel %vm377, %v352, 0.0
      %400 = vadd.xlane.f32.xlu0 %v399
      %v401 = vpop.xlane.xlu0 %400
      %v402 = vsel %vm377, %v353, 0.0
      %403 = vadd.xlane.f32.xlu0 %v402
      %v404 = vpop.xlane.xlu0 %403
      %v405 = vsel %vm377, %v354, 0.0
      %406 = vadd.xlane.f32.xlu0 %v405
      %v407 = vpop.xlane.xlu0 %406
      %v408 = vsel %vm377, %v355, 0.0
      %409 = vadd.xlane.f32.xlu0 %v408
      %v410 = vpop.xlane.xlu0 %409
      %v411 = vsel %vm377, %v356, 0.0
      %412 = vadd.xlane.f32.xlu0 %v411
      %v413 = vpop.xlane.xlu0 %412
      %v414 = vsel %vm377, %v357, 0.0
      %415 = vadd.xlane.f32.xlu0 %v414
      %v416 = vpop.xlane.xlu0 %415
      %v417 = vsel %vm377, %v358, 0.0
      %418 = vadd.xlane.f32.xlu0 %v417
      %v419 = vpop.xlane.xlu0 %418
      %v420 = vsel %vm377, %v359, 0.0
      %421 = vadd.xlane.f32.xlu0 %v420
      %v422 = vpop.xlane.xlu0 %421
      %v423 = vsel %vm377, %v360, 0.0
      %424 = vadd.xlane.f32.xlu0 %v423
      %v425 = vpop.xlane.xlu0 %424
      %v426 = vsel %vm377, %v361, 0.0
      %427 = vadd.xlane.f32.xlu0 %v426
      %v428 = vpop.xlane.xlu0 %427
      %v429 = vsel %vm377, %v362, 0.0
      %430 = vadd.xlane.f32.xlu0 %v429
      %v431 = vpop.xlane.xlu0 %430
      %v432 = vsel %vm377, %v363, 0.0
      %433 = vadd.xlane.f32.xlu0 %v432
      %v434 = vpop.xlane.xlu0 %433
      %v435 = vsel %vm377, %v364, 0.0
      %436 = vadd.xlane.f32.xlu0 %v435
      %v437 = vpop.xlane.xlu0 %436
      %v438 = vsel %vm377, %v365, 0.0
      %439 = vadd.xlane.f32.xlu0 %v438
      %v440 = vpop.xlane.xlu0 %439
      %v441 = vsel %vm377, %v366, 0.0
      %442 = vadd.xlane.f32.xlu0 %v441
      %v443 = vpop.xlane.xlu0 %442
      %v444 = vsel %vm377, %v367, 0.0
      %445 = vadd.xlane.f32.xlu0 %v444
      %v446 = vpop.xlane.xlu0 %445
      %v447 = vsel %vm377, %v368, 0.0
      %448 = vadd.xlane.f32.xlu0 %v447
      %v449 = vpop.xlane.xlu0 %448
      %v450 = vsel %vm377, %v369, 0.0
      %451 = vadd.xlane.f32.xlu0 %v450
      %v452 = vpop.xlane.xlu0 %451
      %v453 = vsel %vm377, %v370, 0.0
      %454 = vadd.xlane.f32.xlu0 %v453
      %v455 = vpop.xlane.xlu0 %454
      %v456 = vsel %vm377, %v371, 0.0
      %457 = vadd.xlane.f32.xlu0 %v456
      %v458 = vpop.xlane.xlu0 %457
      %v459 = vsel %vm377, %v372, 0.0
      %460 = vadd.xlane.f32.xlu0 %v459
      %v461 = vpop.xlane.xlu0 %460
      %v462 = vsel %vm377, %v373, 0.0
      %463 = vadd.xlane.f32.xlu0 %v462
      %v464 = vpop.xlane.xlu0 %463
      %v465 = vsel %vm377, %v374, 0.0
      %466 = vadd.xlane.f32.xlu0 %v465
      %v467 = vpop.xlane.xlu0 %466
      %v468 = vsel %vm377, %v375, 0.0
      %469 = vadd.xlane.f32.xlu0 %v468
      %v470 = vpop.xlane.xlu0 %469
      %v471 = vsel %vm377, %v376, 0.0
      %472 = vadd.xlane.f32.xlu0 %v471
      %v473 = vpop.xlane.xlu0 %472
      %v474 = vld [vmem:[#allocation2] sm:$0x1]
      %v476 = vlaneseq
      %v477 = vshrl.u32 %v476, 7
      %v478 = vsub.s32 0, %v477
      %v479 = vrot.slane %v474, %v478
      %v481 = vadd.f32 %v380, %v479
      %v482 = vadd.f32 %v383, %v479
      %v483 = vadd.f32 %v386, %v479
      %v484 = vadd.f32 %v389, %v479
      %v485 = vadd.f32 %v392, %v479
      %v486 = vadd.f32 %v395, %v479
      %v487 = vadd.f32 %v398, %v479
      %v488 = vadd.f32 %v401, %v479
      %v489 = vadd.f32 %v404, %v479
      %v490 = vadd.f32 %v407, %v479
      %v491 = vadd.f32 %v410, %v479
      %v492 = vadd.f32 %v413, %v479
      %v493 = vadd.f32 %v416, %v479
      %v494 = vadd.f32 %v419, %v479
      %v495 = vadd.f32 %v422, %v479
      %v496 = vadd.f32 %v425, %v479
      %v497 = vadd.f32 %v428, %v479
      %v498 = vadd.f32 %v431, %v479
      %v499 = vadd.f32 %v434, %v479
      %v500 = vadd.f32 %v437, %v479
      %v501 = vadd.f32 %v440, %v479
      %v502 = vadd.f32 %v443, %v479
      %v503 = vadd.f32 %v446, %v479
      %v504 = vadd.f32 %v449, %v479
      %v505 = vadd.f32 %v452, %v479
      %v506 = vadd.f32 %v455, %v479
      %v507 = vadd.f32 %v458, %v479
      %v508 = vadd.f32 %v461, %v479
      %v509 = vadd.f32 %v464, %v479
      %v510 = vadd.f32 %v467, %v479
      %v511 = vadd.f32 %v470, %v479
      %v512 = vadd.f32 %v473, %v479
      %v513 = vxor.u32 %v481, 2147483648
      %v514 = vxor.u32 %v482, 2147483648
      %v515 = vxor.u32 %v483, 2147483648
      %v516 = vxor.u32 %v484, 2147483648
      %v517 = vxor.u32 %v485, 2147483648
      %v518 = vxor.u32 %v486, 2147483648
      %v519 = vxor.u32 %v487, 2147483648
      %v520 = vxor.u32 %v488, 2147483648
      %v521 = vxor.u32 %v489, 2147483648
      %v522 = vxor.u32 %v490, 2147483648
      %v523 = vxor.u32 %v491, 2147483648
      %v524 = vxor.u32 %v492, 2147483648
      %v525 = vxor.u32 %v493, 2147483648
      %v526 = vxor.u32 %v494, 2147483648
      %v527 = vxor.u32 %v495, 2147483648
      %v528 = vxor.u32 %v496, 2147483648
      %v529 = vxor.u32 %v497, 2147483648
      %v530 = vxor.u32 %v498, 2147483648
      %v531 = vxor.u32 %v499, 2147483648
      %v532 = vxor.u32 %v500, 2147483648
      %v533 = vxor.u32 %v501, 2147483648
      %v534 = vxor.u32 %v502, 2147483648
      %v535 = vxor.u32 %v503, 2147483648
      %v536 = vxor.u32 %v504, 2147483648
      %v537 = vxor.u32 %v505, 2147483648
      %v538 = vxor.u32 %v506, 2147483648
      %v539 = vxor.u32 %v507, 2147483648
      %v540 = vxor.u32 %v508, 2147483648
      %v541 = vxor.u32 %v509, 2147483648
      %v542 = vxor.u32 %v510, 2147483648
      %v543 = vxor.u32 %v511, 2147483648
      %v544 = vxor.u32 %v512, 2147483648
      %v545 = vmul.f32 %v513, 1.442695
      %v546 = vpow.pop %v545
      %v547 = vmul.f32 %v514, 1.442695
      %v548 = vpow.pop %v547
      %v549 = vmul.f32 %v515, 1.442695
      %v550 = vpow.pop %v549
      %v551 = vmul.f32 %v516, 1.442695
      %v552 = vpow.pop %v551
      %v553 = vmul.f32 %v517, 1.442695
      %v554 = vpow.pop %v553
      %v555 = vmul.f32 %v518, 1.442695
      %v556 = vpow.pop %v555
      %v557 = vmul.f32 %v519, 1.442695
      %v558 = vpow.pop %v557
      %v559 = vmul.f32 %v520, 1.442695
      %v560 = vpow.pop %v559
      %v561 = vmul.f32 %v521, 1.442695
      %v562 = vpow.pop %v561
      %v563 = vmul.f32 %v522, 1.442695
      %v564 = vpow.pop %v563
      %v565 = vmul.f32 %v523, 1.442695
      %v566 = vpow.pop %v565
      %v567 = vmul.f32 %v524, 1.442695
      %v568 = vpow.pop %v567
      %v569 = vmul.f32 %v525, 1.442695
      %v570 = vpow.pop %v569
      %v571 = vmul.f32 %v526, 1.442695
      %v572 = vpow.pop %v571
      %v573 = vmul.f32 %v527, 1.442695
      %v574 = vpow.pop %v573
      %v575 = vmul.f32 %v528, 1.442695
      %v576 = vpow.pop %v575
      %v577 = vmul.f32 %v529, 1.442695
      %v578 = vpow.pop %v577
      %v579 = vmul.f32 %v530, 1.442695
      %v580 = vpow.pop %v579
      %v581 = vmul.f32 %v531, 1.442695
      %v582 = vpow.pop %v581
      %v583 = vmul.f32 %v532, 1.442695
      %v584 = vpow.pop %v583
      %v585 = vmul.f32 %v533, 1.442695
      %v586 = vpow.pop %v585
      %v587 = vmul.f32 %v534, 1.442695
      %v588 = vpow.pop %v587
      %v589 = vmul.f32 %v535, 1.442695
      %v590 = vpow.pop %v589
      %v591 = vmul.f32 %v536, 1.442695
      %v592 = vpow.pop %v591
      %v593 = vmul.f32 %v537, 1.442695
      %v594 = vpow.pop %v593
      %v595 = vmul.f32 %v538, 1.442695
      %v596 = vpow.pop %v595
      %v597 = vmul.f32 %v539, 1.442695
      %v598 = vpow.pop %v597
      %v599 = vmul.f32 %v540, 1.442695
      %v600 = vpow.pop %v599
      %v601 = vmul.f32 %v541, 1.442695
      %v602 = vpow.pop %v601
      %v603 = vmul.f32 %v542, 1.442695
      %v604 = vpow.pop %v603
      %v605 = vmul.f32 %v543, 1.442695
      %v606 = vpow.pop %v605
      %v607 = vmul.f32 %v544, 1.442695
      %v608 = vpow.pop %v607
      %v609 = vadd.f32 %v546, 1.0
      %v610 = vadd.f32 %v548, 1.0
      %v611 = vadd.f32 %v550, 1.0
      %v612 = vadd.f32 %v552, 1.0
      %v613 = vadd.f32 %v554, 1.0
      %v614 = vadd.f32 %v556, 1.0
      %v615 = vadd.f32 %v558, 1.0
      %v616 = vadd.f32 %v560, 1.0
      %v617 = vadd.f32 %v562, 1.0
      %v618 = vadd.f32 %v564, 1.0
      %v619 = vadd.f32 %v566, 1.0
      %v620 = vadd.f32 %v568, 1.0
      %v621 = vadd.f32 %v570, 1.0
      %v622 = vadd.f32 %v572, 1.0
      %v623 = vadd.f32 %v574, 1.0
      %v624 = vadd.f32 %v576, 1.0
      %v625 = vadd.f32 %v578, 1.0
      %v626 = vadd.f32 %v580, 1.0
      %v627 = vadd.f32 %v582, 1.0
      %v628 = vadd.f32 %v584, 1.0
      %v629 = vadd.f32 %v586, 1.0
      %v630 = vadd.f32 %v588, 1.0
      %v631 = vadd.f32 %v590, 1.0
      %v632 = vadd.f32 %v592, 1.0
      %v633 = vadd.f32 %v594, 1.0
      %v634 = vadd.f32 %v596, 1.0
      %v635 = vadd.f32 %v598, 1.0
      %v636 = vadd.f32 %v600, 1.0
      %v637 = vadd.f32 %v602, 1.0
      %v638 = vadd.f32 %v604, 1.0
      %v639 = vadd.f32 %v606, 1.0
      %v640 = vadd.f32 %v608, 1.0
      %v641 = vrcp.pop %v609
      %v642 = vmul.f32 1.0, %v641
      %v643 = vrcp.pop %v610
      %v644 = vmul.f32 1.0, %v643
      %v645 = vrcp.pop %v611
      %v646 = vmul.f32 1.0, %v645
      %v647 = vrcp.pop %v612
      %v648 = vmul.f32 1.0, %v647
      %v649 = vrcp.pop %v613
      %v650 = vmul.f32 1.0, %v649
      %v651 = vrcp.pop %v614
      %v652 = vmul.f32 1.0, %v651
      %v653 = vrcp.pop %v615
      %v654 = vmul.f32 1.0, %v653
      %v655 = vrcp.pop %v616
      %v656 = vmul.f32 1.0, %v655
      %v657 = vrcp.pop %v617
      %v658 = vmul.f32 1.0, %v657
      %v659 = vrcp.pop %v618
      %v660 = vmul.f32 1.0, %v659
      %v661 = vrcp.pop %v619
      %v662 = vmul.f32 1.0, %v661
      %v663 = vrcp.pop %v620
      %v664 = vmul.f32 1.0, %v663
      %v665 = vrcp.pop %v621
      %v666 = vmul.f32 1.0, %v665
      %v667 = vrcp.pop %v622
      %v668 = vmul.f32 1.0, %v667
      %v669 = vrcp.pop %v623
      %v670 = vmul.f32 1.0, %v669
      %v671 = vrcp.pop %v624
      %v672 = vmul.f32 1.0, %v671
      %v673 = vrcp.pop %v625
      %v674 = vmul.f32 1.0, %v673
      %v675 = vrcp.pop %v626
      %v676 = vmul.f32 1.0, %v675
      %v677 = vrcp.pop %v627
      %v678 = vmul.f32 1.0, %v677
      %v679 = vrcp.pop %v628
      %v680 = vmul.f32 1.0, %v679
      %v681 = vrcp.pop %v629
      %v682 = vmul.f32 1.0, %v681
      %v683 = vrcp.pop %v630
      %v684 = vmul.f32 1.0, %v683
      %v685 = vrcp.pop %v631
      %v686 = vmul.f32 1.0, %v685
      %v687 = vrcp.pop %v632
      %v688 = vmul.f32 1.0, %v687
      %v689 = vrcp.pop %v633
      %v690 = vmul.f32 1.0, %v689
      %v691 = vrcp.pop %v634
      %v692 = vmul.f32 1.0, %v691
      %v693 = vrcp.pop %v635
      %v694 = vmul.f32 1.0, %v693
      %v695 = vrcp.pop %v636
      %v696 = vmul.f32 1.0, %v695
      %v697 = vrcp.pop %v637
      %v698 = vmul.f32 1.0, %v697
      %v699 = vrcp.pop %v638
      %v700 = vmul.f32 1.0, %v699
      %v701 = vrcp.pop %v639
      %v702 = vmul.f32 1.0, %v701
      %v703 = vrcp.pop %v640
      %v704 = vmul.f32 1.0, %v703
      %v705 = vld [vmem:[%s254] sm:$0xff]
      %v706 = vld [vmem:[%s254 + $0x8] sm:$0xff]
      %v707 = vld [vmem:[%s254 + $0x10] sm:$0xff]
      %v708 = vld [vmem:[%s254 + $0x18] sm:$0xff]
      %v709 = vld [vmem:[%s254 + $0x20] sm:$0xff]
      %v710 = vld [vmem:[%s254 + $0x28] sm:$0xff]
      %v711 = vld [vmem:[%s254 + $0x30] sm:$0xff]
      %v712 = vld [vmem:[%s254 + $0x38] sm:$0xff]
      %v713 = vld [vmem:[%s254 + $0x40] sm:$0xff]
      %v714 = vld [vmem:[%s254 + $0x48] sm:$0xff]
      %v715 = vld [vmem:[%s254 + $0x50] sm:$0xff]
      %v716 = vld [vmem:[%s254 + $0x58] sm:$0xff]
      %v717 = vld [vmem:[%s254 + $0x60] sm:$0xff]
      %v718 = vld [vmem:[%s254 + $0x68] sm:$0xff]
      %v719 = vld [vmem:[%s254 + $0x70] sm:$0xff]
      %v720 = vld [vmem:[%s254 + $0x78] sm:$0xff]
      %v721 = vld [vmem:[%s254 + $0x80] sm:$0xff]
      %v722 = vld [vmem:[%s254 + $0x88] sm:$0xff]
      %v723 = vld [vmem:[%s254 + $0x90] sm:$0xff]
      %v724 = vld [vmem:[%s254 + $0x98] sm:$0xff]
      %v725 = vld [vmem:[%s254 + $0xa0] sm:$0xff]
      %v726 = vld [vmem:[%s254 + $0xa8] sm:$0xff]
      %v727 = vld [vmem:[%s254 + $0xb0] sm:$0xff]
      %v728 = vld [vmem:[%s254 + $0xb8] sm:$0xff]
      %v729 = vld [vmem:[%s254 + $0xc0] sm:$0xff]
      %v730 = vld [vmem:[%s254 + $0xc8] sm:$0xff]
      %v731 = vld [vmem:[%s254 + $0xd0] sm:$0xff]
      %v732 = vld [vmem:[%s254 + $0xd8] sm:$0xff]
      %v733 = vld [vmem:[%s254 + $0xe0] sm:$0xff]
      %v734 = vld [vmem:[%s254 + $0xe8] sm:$0xff]
      %v735 = vld [vmem:[%s254 + $0xf0] sm:$0xff]
      %v736 = vld [vmem:[%s254 + $0xf8] sm:$0xff]
      %v737 = vld [vmem:[%s260] sm:$0xff]
      %v738 = vld [vmem:[%s260 + $0x8] sm:$0xff]
      %v739 = vld [vmem:[%s260 + $0x10] sm:$0xff]
      %v740 = vld [vmem:[%s260 + $0x18] sm:$0xff]
      %v741 = vld [vmem:[%s260 + $0x20] sm:$0xff]
      %v742 = vld [vmem:[%s260 + $0x28] sm:$0xff]
      %v743 = vld [vmem:[%s260 + $0x30] sm:$0xff]
      %v744 = vld [vmem:[%s260 + $0x38] sm:$0xff]
      %v745 = vld [vmem:[%s260 + $0x40] sm:$0xff]
      %v746 = vld [vmem:[%s260 + $0x48] sm:$0xff]
      %v747 = vld [vmem:[%s260 + $0x50] sm:$0xff]
      %v748 = vld [vmem:[%s260 + $0x58] sm:$0xff]
      %v749 = vld [vmem:[%s260 + $0x60] sm:$0xff]
      %v750 = vld [vmem:[%s260 + $0x68] sm:$0xff]
      %v751 = vld [vmem:[%s260 + $0x70] sm:$0xff]
      %v752 = vld [vmem:[%s260 + $0x78] sm:$0xff]
      %v753 = vld [vmem:[%s260 + $0x80] sm:$0xff]
      %v754 = vld [vmem:[%s260 + $0x88] sm:$0xff]
      %v755 = vld [vmem:[%s260 + $0x90] sm:$0xff]
      %v756 = vld [vmem:[%s260 + $0x98] sm:$0xff]
      %v757 = vld [vmem:[%s260 + $0xa0] sm:$0xff]
      %v758 = vld [vmem:[%s260 + $0xa8] sm:$0xff]
      %v759 = vld [vmem:[%s260 + $0xb0] sm:$0xff]
      %v760 = vld [vmem:[%s260 + $0xb8] sm:$0xff]
      %v761 = vld [vmem:[%s260 + $0xc0] sm:$0xff]
      %v762 = vld [vmem:[%s260 + $0xc8] sm:$0xff]
      %v763 = vld [vmem:[%s260 + $0xd0] sm:$0xff]
      %v764 = vld [vmem:[%s260 + $0xd8] sm:$0xff]
      %v765 = vld [vmem:[%s260 + $0xe0] sm:$0xff]
      %v766 = vld [vmem:[%s260 + $0xe8] sm:$0xff]
      %v767 = vld [vmem:[%s260 + $0xf0] sm:$0xff]
      %v768 = vld [vmem:[%s260 + $0xf8] sm:$0xff]
      %770 = vset.pattern.permute.xlu0 0
      %771 = vperm.xlu0 %770, %v642
      %v772 = vpop.permute.xlu0 %771
      %775 = vset.pattern.permute.xlu0 0
      %776 = vperm.xlu0 %775, %v644
      %v777 = vpop.permute.xlu0 %776
      %780 = vset.pattern.permute.xlu0 0
      %781 = vperm.xlu0 %780, %v646
      %v782 = vpop.permute.xlu0 %781
      %785 = vset.pattern.permute.xlu0 0
      %786 = vperm.xlu0 %785, %v648
      %v787 = vpop.permute.xlu0 %786
      %790 = vset.pattern.permute.xlu0 0
      %791 = vperm.xlu0 %790, %v650
      %v792 = vpop.permute.xlu0 %791
      %795 = vset.pattern.permute.xlu0 0
      %796 = vperm.xlu0 %795, %v652
      %v797 = vpop.permute.xlu0 %796
      %800 = vset.pattern.permute.xlu0 0
      %801 = vperm.xlu0 %800, %v654
      %v802 = vpop.permute.xlu0 %801
      %805 = vset.pattern.permute.xlu0 0
      %806 = vperm.xlu0 %805, %v656
      %v807 = vpop.permute.xlu0 %806
      %810 = vset.pattern.permute.xlu0 0
      %811 = vperm.xlu0 %810, %v658
      %v812 = vpop.permute.xlu0 %811
      %815 = vset.pattern.permute.xlu0 0
      %816 = vperm.xlu0 %815, %v660
      %v817 = vpop.permute.xlu0 %816
      %820 = vset.pattern.permute.xlu0 0
      %821 = vperm.xlu0 %820, %v662
      %v822 = vpop.permute.xlu0 %821
      %825 = vset.pattern.permute.xlu0 0
      %826 = vperm.xlu0 %825, %v664
      %v827 = vpop.permute.xlu0 %826
      %830 = vset.pattern.permute.xlu0 0
      %831 = vperm.xlu0 %830, %v666
      %v832 = vpop.permute.xlu0 %831
      %835 = vset.pattern.permute.xlu0 0
      %836 = vperm.xlu0 %835, %v668
      %v837 = vpop.permute.xlu0 %836
      %840 = vset.pattern.permute.xlu0 0
      %841 = vperm.xlu0 %840, %v670
      %v842 = vpop.permute.xlu0 %841
      %845 = vset.pattern.permute.xlu0 0
      %846 = vperm.xlu0 %845, %v672
      %v847 = vpop.permute.xlu0 %846
      %850 = vset.pattern.permute.xlu0 0
      %851 = vperm.xlu0 %850, %v674
      %v852 = vpop.permute.xlu0 %851
      %855 = vset.pattern.permute.xlu0 0
      %856 = vperm.xlu0 %855, %v676
      %v857 = vpop.permute.xlu0 %856
      %860 = vset.pattern.permute.xlu0 0
      %861 = vperm.xlu0 %860, %v678
      %v862 = vpop.permute.xlu0 %861
      %865 = vset.pattern.permute.xlu0 0
      %866 = vperm.xlu0 %865, %v680
      %v867 = vpop.permute.xlu0 %866
      %870 = vset.pattern.permute.xlu0 0
      %871 = vperm.xlu0 %870, %v682
      %v872 = vpop.permute.xlu0 %871
      %875 = vset.pattern.permute.xlu0 0
      %876 = vperm.xlu0 %875, %v684
      %v877 = vpop.permute.xlu0 %876
      %880 = vset.pattern.permute.xlu0 0
      %881 = vperm.xlu0 %880, %v686
      %v882 = vpop.permute.xlu0 %881
      %885 = vset.pattern.permute.xlu0 0
      %886 = vperm.xlu0 %885, %v688
      %v887 = vpop.permute.xlu0 %886
      %890 = vset.pattern.permute.xlu0 0
      %891 = vperm.xlu0 %890, %v690
      %v892 = vpop.permute.xlu0 %891
      %895 = vset.pattern.permute.xlu0 0
      %896 = vperm.xlu0 %895, %v692
      %v897 = vpop.permute.xlu0 %896
      %900 = vset.pattern.permute.xlu0 0
      %901 = vperm.xlu0 %900, %v694
      %v902 = vpop.permute.xlu0 %901
      %905 = vset.pattern.permute.xlu0 0
      %906 = vperm.xlu0 %905, %v696
      %v907 = vpop.permute.xlu0 %906
      %910 = vset.pattern.permute.xlu0 0
      %911 = vperm.xlu0 %910, %v698
      %v912 = vpop.permute.xlu0 %911
      %915 = vset.pattern.permute.xlu0 0
      %916 = vperm.xlu0 %915, %v700
      %v917 = vpop.permute.xlu0 %916
      %920 = vset.pattern.permute.xlu0 0
      %921 = vperm.xlu0 %920, %v702
      %v922 = vpop.permute.xlu0 %921
      %925 = vset.pattern.permute.xlu0 0
      %926 = vperm.xlu0 %925, %v704
      %v927 = vpop.permute.xlu0 %926
      %v929 = vmul.f32 %v737, %v772
      %v930 = vmul.f32 %v738, %v777
      %v931 = vmul.f32 %v739, %v782
      %v932 = vmul.f32 %v740, %v787
      %v933 = vmul.f32 %v741, %v792
      %v934 = vmul.f32 %v742, %v797
      %v935 = vmul.f32 %v743, %v802
      %v936 = vmul.f32 %v744, %v807
      %v937 = vmul.f32 %v745, %v812
      %v938 = vmul.f32 %v746, %v817
      %v939 = vmul.f32 %v747, %v822
      %v940 = vmul.f32 %v748, %v827
      %v941 = vmul.f32 %v749, %v832
      %v942 = vmul.f32 %v750, %v837
      %v943 = vmul.f32 %v751, %v842
      %v944 = vmul.f32 %v752, %v847
      %v945 = vmul.f32 %v753, %v852
      %v946 = vmul.f32 %v754, %v857
      %v947 = vmul.f32 %v755, %v862
      %v948 = vmul.f32 %v756, %v867
      %v949 = vmul.f32 %v757, %v872
      %v950 = vmul.f32 %v758, %v877
      %v951 = vmul.f32 %v759, %v882
      %v952 = vmul.f32 %v760, %v887
      %v953 = vmul.f32 %v761, %v892
      %v954 = vmul.f32 %v762, %v897
      %v955 = vmul.f32 %v763, %v902
      %v956 = vmul.f32 %v764, %v907
      %v957 = vmul.f32 %v765, %v912
      %v958 = vmul.f32 %v766, %v917
      %v959 = vmul.f32 %v767, %v922
      %v960 = vmul.f32 %v768, %v927
      %v961 = vadd.f32 %v705, %v929
      %v962 = vadd.f32 %v706, %v930
      %v963 = vadd.f32 %v707, %v931
      %v964 = vadd.f32 %v708, %v932
      %v965 = vadd.f32 %v709, %v933
      %v966 = vadd.f32 %v710, %v934
      %v967 = vadd.f32 %v711, %v935
      %v968 = vadd.f32 %v712, %v936
      %v969 = vadd.f32 %v713, %v937
      %v970 = vadd.f32 %v714, %v938
      %v971 = vadd.f32 %v715, %v939
      %v972 = vadd.f32 %v716, %v940
      %v973 = vadd.f32 %v717, %v941
      %v974 = vadd.f32 %v718, %v942
      %v975 = vadd.f32 %v719, %v943
      %v976 = vadd.f32 %v720, %v944
      %v977 = vadd.f32 %v721, %v945
      %v978 = vadd.f32 %v722, %v946
      %v979 = vadd.f32 %v723, %v947
      %v980 = vadd.f32 %v724, %v948
      %v981 = vadd.f32 %v725, %v949
      %v982 = vadd.f32 %v726, %v950
      %v983 = vadd.f32 %v727, %v951
      %v984 = vadd.f32 %v728, %v952
      %v985 = vadd.f32 %v729, %v953
      %v986 = vadd.f32 %v730, %v954
      %v987 = vadd.f32 %v731, %v955
      %v988 = vadd.f32 %v732, %v956
      %v989 = vadd.f32 %v733, %v957
      %v990 = vadd.f32 %v734, %v958
      %v991 = vadd.f32 %v735, %v959
      %v992 = vadd.f32 %v736, %v960
      %vm993 = vcmask 31744
      %994 = vst.msk [vmem:[%s272] sm:$0xff] %vm993, %v961
      %995 = vst.msk [vmem:[%s272 + $0x8] sm:$0xff] %vm993, %v962
      %996 = vst.msk [vmem:[%s272 + $0x10] sm:$0xff] %vm993, %v963
      %997 = vst.msk [vmem:[%s272 + $0x18] sm:$0xff] %vm993, %v964
      %998 = vst.msk [vmem:[%s272 + $0x20] sm:$0xff] %vm993, %v965
      %999 = vst.msk [vmem:[%s272 + $0x28] sm:$0xff] %vm993, %v966
      %1000 = vst.msk [vmem:[%s272 + $0x30] sm:$0xff] %vm993, %v967
      %1001 = vst.msk [vmem:[%s272 + $0x38] sm:$0xff] %vm993, %v968
      %1002 = vst.msk [vmem:[%s272 + $0x40] sm:$0xff] %vm993, %v969
      %1003 = vst.msk [vmem:[%s272 + $0x48] sm:$0xff] %vm993, %v970
      %1004 = vst.msk [vmem:[%s272 + $0x50] sm:$0xff] %vm993, %v971
      %1005 = vst.msk [vmem:[%s272 + $0x58] sm:$0xff] %vm993, %v972
      %1006 = vst.msk [vmem:[%s272 + $0x60] sm:$0xff] %vm993, %v973
      %1007 = vst.msk [vmem:[%s272 + $0x68] sm:$0xff] %vm993, %v974
      %1008 = vst.msk [vmem:[%s272 + $0x70] sm:$0xff] %vm993, %v975
      %1009 = vst.msk [vmem:[%s272 + $0x78] sm:$0xff] %vm993, %v976
      %1010 = vst.msk [vmem:[%s272 + $0x80] sm:$0xff] %vm993, %v977
      %1011 = vst.msk [vmem:[%s272 + $0x88] sm:$0xff] %vm993, %v978
      %1012 = vst.msk [vmem:[%s272 + $0x90] sm:$0xff] %vm993, %v979
      %1013 = vst.msk [vmem:[%s272 + $0x98] sm:$0xff] %vm993, %v980
      %1014 = vst.msk [vmem:[%s272 + $0xa0] sm:$0xff] %vm993, %v981
      %1015 = vst.msk [vmem:[%s272 + $0xa8] sm:$0xff] %vm993, %v982
      %1016 = vst.msk [vmem:[%s272 + $0xb0] sm:$0xff] %vm993, %v983
      %1017 = vst.msk [vmem:[%s272 + $0xb8] sm:$0xff] %vm993, %v984
      %1018 = vst.msk [vmem:[%s272 + $0xc0] sm:$0xff] %vm993, %v985
      %1019 = vst.msk [vmem:[%s272 + $0xc8] sm:$0xff] %vm993, %v986
      %1020 = vst.msk [vmem:[%s272 + $0xd0] sm:$0xff] %vm993, %v987
      %1021 = vst.msk [vmem:[%s272 + $0xd8] sm:$0xff] %vm993, %v988
      %1022 = vst.msk [vmem:[%s272 + $0xe0] sm:$0xff] %vm993, %v989
      %1023 = vst.msk [vmem:[%s272 + $0xe8] sm:$0xff] %vm993, %v990
      %1024 = vst.msk [vmem:[%s272 + $0xf0] sm:$0xff] %vm993, %v991
      %1025 = vst.msk [vmem:[%s272 + $0xf8] sm:$0xff] %vm993, %v992
      %s1026 = smul.u32 32, %s18
      %p1027 = scmp.lt.s32.totalorder %s1026, 63
      %s1028 = scalar_select %p1027, %s1026, 63
      %s1029 = smul.addr %s1028, 8
      %s1030 = scalar_lea.vmem %s5, %s1029
      // Predicated region
      $region41: #{residual_block_forward.21} parent=39 // pred_check
        %p1031 = pneg %p156
      $region42: #{residual_block_forward.21} parent=39 // pred_check_branch
        %1033 = sbr.rel (%p1031) target = $region44
      $region43: #{residual_block_forward.21} parent=39 // pred_region
        %s1034 = smul.u32 32, %s18
      $region44: #{residual_block_forward.21} parent=39 // pred_fallthru
        _
    $region40: #{residual_block_forward.21} parent=5 // pred_fallthru
      _
    %p1035 = scmp.le.s32.totalorder 2, %s13
    // Predicated region
    $region45: #{residual_block_forward.21} parent=5 // pred_check
      %p1036 = pneg %p1035
    $region46: #{residual_block_forward.21} parent=5 // pred_check_branch
      %1038 = sbr.rel (%p1036) target = $region48
    $region47: #{residual_block_forward.21} parent=5 // pred_region
      %s1039 = ssub.s32 %s13, 2
      // Predicated region
      $region49: #{residual_block_forward.21} parent=47 // pred_check
        %p1040 = pneg %p162
      $region50: #{residual_block_forward.21} parent=47 // pred_check_branch
        %1042 = sbr.rel (%p1040) target = $region52
      $region51: #{residual_block_forward.21} parent=47 // pred_region
        %s1043 = smul.u32 32, %s19
        %p1044 = scmp.lt.s32.totalorder %s1043, 63
        %s1045 = scalar_select %p1044, %s1043, 63
        %s1046 = smul.addr %s1045, 8
        %s1047 = scalar_lea.vmem %s5, %s1046
      $region52: #{residual_block_forward.21} parent=47 // pred_fallthru
        _
    $region48: #{residual_block_forward.21} parent=5 // pred_fallthru
      _
  $region6: #{residual_block_forward.21} parent=0 // loop_footer
    %s17 = sadd.s32 1, %s13
  $region7: #{residual_block_forward.21} parent=0 // loop_footer_branch
    %12 = sbr.rel target = $region3
  $region8: #{residual_block_forward.21} parent=0 // loop_exit
    _

</llo_original>
